<compile_context>
chip_gen: v6e
topology: v6e:2x2x1
jax: 0.10.0
libtpu: 0.0.40
codegen_flags: <defaults>
</compile_context>

<pallas_src>
import math

import jax
import jax.numpy as jnp
from jax.experimental import pallas as pl
from jax.experimental.pallas import tpu as pltpu

B = 2                      # batch used in the demo (wrapper handles any batch)
H = W = 7                  # input spatial -> conv output 5x5, feature_output = 1600
KH = KW = 3
OH = OW = 5
NP = OH * OW               # 25 spatial positions
C_OUT = 64
FEAT = NP * C_OUT          # 1600
HID = 512
NEG_SLOPE = 0.01           # nn.LeakyReLU() default
HIGHEST = jax.lax.Precision.HIGHEST

GROUP = 4                  # spatial positions packed per FC1 matmul (K = 256); use 2 on v5e
NG = -(-NP // GROUP)       # 7 reduction groups
P_PAD = NG * GROUP         # 28 (p = 25..27 are zero-padded phantoms)
BT = 8                     # batch rows per tile (one sublane tile)
PK = GROUP * KH * KW       # 36 patch lanes per group
CK = GROUP * C_OUT         # 256 conv lanes per branch per group


# ---------------------------------------------------------------------------
# Pallas kernel: both branches fused, grid = (batch_tiles, FC1 reduction groups)
# ---------------------------------------------------------------------------
def rnd_kernel(patches_ref, wc_ref, bc_ref, w1_ref, b1_ref, w2_ref, b2_ref,
               w3_ref, b3_ref, wt_ref, btb_ref, pred_ref, tgt_ref,
               h1p_ref, h1t_ref):
    g = pl.program_id(1)

    @pl.when(g == 0)
    def _():
        h1p_ref[...] = jnp.zeros_like(h1p_ref)
        h1t_ref[...] = jnp.zeros_like(h1t_ref)

    # Conv-as-matmul for this group's GROUP spatial positions, both branches
    # fused via the block-diagonal weight: (BT, 36) @ (36, 512) -> (BT, 512).
    conv = jnp.dot(patches_ref[0, 0], wc_ref[...],
                   preferred_element_type=jnp.float32)
    conv = conv + bc_ref[...]                       # f32 bias add
    conv = jnp.maximum(conv, NEG_SLOPE * conv)      # LeakyReLU (slope < 1)
    blk = conv.astype(jnp.bfloat16)                 # one full-width cast

    # K-packed FC1 partials: (BT, 256) @ (256, 512) per branch per group.
    # Lanes [0:256] = predictor conv channels, [256:512] = target conv channels.
    h1p_ref[...] += jnp.dot(blk[:, :CK], w1_ref[0],
                            preferred_element_type=jnp.float32)
    h1t_ref[...] += jnp.dot(blk[:, CK:], wt_ref[0],
                            preferred_element_type=jnp.float32)

    @pl.when(g == pl.num_programs(1) - 1)
    def _():
        # Predictor MLP tail (bf16 MXU inputs, f32 accumulate / elementwise).
        h = jnp.maximum(h1p_ref[...] + b1_ref[...], 0.0).astype(jnp.bfloat16)
        h2 = jnp.dot(h, w2_ref[...], preferred_element_type=jnp.float32) + b2_ref[...]
        h2 = jnp.maximum(h2, 0.0).astype(jnp.bfloat16)
        pred_ref[...] = jnp.dot(h2, w3_ref[...],
                                preferred_element_type=jnp.float32) + b3_ref[...]
        # Target branch is just FC1 + bias.
        tgt_ref[...] = h1t_ref[...] + btb_ref[...]


# ---------------------------------------------------------------------------
# Glue: im2col, parameter init / layout, wrapper
# ---------------------------------------------------------------------------
def _extract_patches(x):
    """x: (B, 1, H, W) NCHW -> (B, 25, 9); p = oh*OW+ow, k = kh*KW+kw."""
    cols = []
    for kh in range(KH):
        for kw in range(KW):
            cols.append(x[:, 0, kh:kh + OH, kw:kw + OW])       # (B, OH, OW)
    pat = jnp.stack(cols, axis=-1)                             # (B, OH, OW, 9)
    return pat.reshape(x.shape[0], NP, KH * KW)                # (B, 25, 9)


def _patches_grouped(x, n_bt):
    """(B,1,H,W) -> (n_bt, NG, BT, 36) bf16.

    Row = batch-within-tile, lane = slot*9 + k with p = g*GROUP + slot.
    Batch zero-padded to n_bt*BT, spatial positions zero-padded to P_PAD.
    """
    bsz = x.shape[0]
    pat = _extract_patches(x)                                  # (B, 25, 9) f32
    pat = jnp.pad(pat, ((0, n_bt * BT - bsz), (0, P_PAD - NP), (0, 0)))
    pat = pat.reshape(n_bt, BT, NG, GROUP, KH * KW)
    pat = jnp.transpose(pat, (0, 2, 1, 3, 4))                  # (n_bt, NG, BT, GROUP, 9)
    return pat.reshape(n_bt, NG, BT, PK).astype(jnp.bfloat16)


def orthogonal(key, out_d, in_d, gain):
    """Deterministic orthogonal init (gain * semi-orthogonal), torch layout (out, in)."""
    big, small = (out_d, in_d) if out_d >= in_d else (in_d, out_d)
    a = jax.random.normal(key, (big, small), dtype=jnp.float32)
    q, r = jnp.linalg.qr(a)
    d = jnp.diagonal(r)
    q = q * jnp.where(d >= 0, 1.0, -1.0)[None, :]
    w = q if out_d >= in_d else q.T
    return (gain * w).astype(jnp.float32)


def _conv_block_diag(wc_p, wc_t):
    """Block-diagonal fused conv weight (36, 512) bf16.

    Lanes [0:256] predictor, [256:512] target; slot s maps patch lanes
    s*9:(s+1)*9 to conv lanes s*64:(s+1)*64.
    """
    z = jnp.zeros((PK, 2 * CK), jnp.float32)
    for s in range(GROUP):
        z = z.at[s * 9:(s + 1) * 9, s * C_OUT:(s + 1) * C_OUT].set(wc_p.T)
        z = z.at[s * 9:(s + 1) * 9, CK + s * C_OUT:CK + (s + 1) * C_OUT].set(wc_t.T)
    return z.astype(jnp.bfloat16)


def _fc1_grouped(w_torch):
    """torch FC1 weight (512, 1600) indexed [o, c*25+p] -> (NG, 256, 512) bf16.

    Group g, row slot*64 + c corresponds to p = g*GROUP + slot, channel c;
    phantom positions p = 25..27 get zero rows.
    """
    w_r = w_torch.reshape(HID, C_OUT, NP)                      # [o, c, p]
    w_r = jnp.pad(w_r, ((0, 0), (0, 0), (0, P_PAD - NP)))      # [o, c, 28]
    w_r = jnp.transpose(w_r, (2, 1, 0))                        # [p, c, o]
    return w_r.reshape(NG, GROUP * C_OUT, HID).astype(jnp.bfloat16)


def make_params(key):
    gain = math.sqrt(2.0)
    ks = jax.random.split(key, 8)
    # torch-layout f32 parameters (for the pure-JAX reference)
    torch_p = dict(
        wc_p=orthogonal(ks[0], C_OUT, KH * KW, gain), bc_p=jnp.zeros((C_OUT,), jnp.float32),
        w1=orthogonal(ks[1], HID, FEAT, gain),        b1=jnp.zeros((HID,), jnp.float32),
        w2=orthogonal(ks[2], HID, HID, gain),         b2=jnp.zeros((HID,), jnp.float32),
        w3=orthogonal(ks[3], HID, HID, gain),         b3=jnp.zeros((HID,), jnp.float32),
        wc_t=orthogonal(ks[4], C_OUT, KH * KW, gain), bc_t=jnp.zeros((C_OUT,), jnp.float32),
        wt=orthogonal(ks[5], HID, FEAT, gain),        bt=jnp.zeros((HID,), jnp.float32),
    )
    bf16 = jnp.bfloat16
    # kernel-layout parameters: weights bf16 (halve HBM traffic), biases f32 (1, N)
    # TODO(synk): on v7x, w1/wt/w2/w3 could be stored fp8 with per-matrix scales
    # if the RND accuracy budget allows; kept bf16 here for portability.
    kern_p = dict(
        wc=_conv_block_diag(torch_p["wc_p"], torch_p["wc_t"]),                  # (36, 512)
        bc=jnp.concatenate([jnp.tile(torch_p["bc_p"], GROUP),
                            jnp.tile(torch_p["bc_t"], GROUP)]).reshape(1, 2 * CK),
        w1=_fc1_grouped(torch_p["w1"]), b1=torch_p["b1"].reshape(1, HID),
        w2=torch_p["w2"].T.astype(bf16), b2=torch_p["b2"].reshape(1, HID),
        w3=torch_p["w3"].T.astype(bf16), b3=torch_p["b3"].reshape(1, HID),
        wt=_fc1_grouped(torch_p["wt"]), bt=torch_p["bt"].reshape(1, HID),
    )
    return torch_p, kern_p


@jax.jit
def rnd_forward(x, kern_p):
    """x: (B, 1, 7, 7) NCHW f32 -> (predict_feature, target_feature), each (B, 512)."""
    batch = x.shape[0]
    n_bt = (batch + BT - 1) // BT
    patches = _patches_grouped(x, n_bt)                        # (n_bt, NG, BT, 36) bf16
    ins = (patches, kern_p["wc"], kern_p["bc"], kern_p["w1"], kern_p["b1"],
           kern_p["w2"], kern_p["b2"], kern_p["w3"], kern_p["b3"],
           kern_p["wt"], kern_p["bt"])

    const_vec = lambda: pl.BlockSpec((1, HID), lambda bt, g: (0, 0))
    in_specs = [
        pl.BlockSpec((1, 1, BT, PK), lambda bt, g: (bt, g, 0, 0)),     # patches (per group)
        pl.BlockSpec((PK, 2 * CK), lambda bt, g: (0, 0)),              # wc (resident)
        pl.BlockSpec((1, 2 * CK), lambda bt, g: (0, 0)),               # bc
        pl.BlockSpec((1, CK, HID), lambda bt, g: (g, 0, 0)),           # w1 (pipelined per group)
        const_vec(),                                                    # b1
        pl.BlockSpec((HID, HID), lambda bt, g: (0, 0)),                # w2 (resident)
        const_vec(),                                                    # b2
        pl.BlockSpec((HID, HID), lambda bt, g: (0, 0)),                # w3 (resident)
        const_vec(),                                                    # b3
        pl.BlockSpec((1, CK, HID), lambda bt, g: (g, 0, 0)),           # wt (pipelined per group)
        const_vec(),                                                    # bt
    ]
    out_specs = (pl.BlockSpec((BT, HID), lambda bt, g: (bt, 0)),
                 pl.BlockSpec((BT, HID), lambda bt, g: (bt, 0)))

    pred_p, tgt_p = pl.pallas_call(
        rnd_kernel,
        out_shape=(jax.ShapeDtypeStruct((n_bt * BT, HID), jnp.float32),
                   jax.ShapeDtypeStruct((n_bt * BT, HID), jnp.float32)),
        grid_spec=pltpu.PrefetchScalarGridSpec(
            num_scalar_prefetch=0,
            grid=(n_bt, NG),
            in_specs=in_specs,
            out_specs=out_specs,
            scratch_shapes=[pltpu.VMEM((BT, HID), jnp.float32),
                            pltpu.VMEM((BT, HID), jnp.float32)]),
        compiler_params=pltpu.CompilerParams(
            dimension_semantics=("parallel", "arbitrary"),
            vmem_limit_bytes=24 * 1024 * 1024),
    )(*ins)
    return pred_p[:batch], tgt_p[:batch]


# ---------------------------------------------------------------------------
# Pure-JAX references (PyTorch NCHW semantics, channel-major Flatten).
# quantize_bf16=True emulates the kernel's bf16 weight/activation storage.
# ---------------------------------------------------------------------------
def rnd_reference(x, torch_p, quantize_bf16):
    q = (lambda v: v.astype(jnp.bfloat16).astype(jnp.float32)) if quantize_bf16 else (lambda v: v)
    mm = lambda a, b: jnp.dot(a, b, precision=HIGHEST)
    batch = x.shape[0]
    patches = _extract_patches(x)                              # (B, 25, 9)

    def branch_conv(wc, bc):
        c = jnp.einsum("bpk,ok->bop", q(patches), q(wc), precision=HIGHEST)
        c = c + bc[None, :, None]
        c = jnp.where(c > 0, c, NEG_SLOPE * c)                 # LeakyReLU
        return q(c.reshape(batch, FEAT))                       # index c*25+p (torch Flatten)

    fp = branch_conv(torch_p["wc_p"], torch_p["bc_p"])
    h = q(jnp.maximum(mm(fp, q(torch_p["w1"]).T) + torch_p["b1"], 0.0))
    h = q(jnp.maximum(mm(h, q(torch_p["w2"]).T) + torch_p["b2"], 0.0))
    pred = mm(h, q(torch_p["w3"]).T) + torch_p["b3"]

    ft = branch_conv(torch_p["wc_t"], torch_p["bc_t"])
    tgt = mm(ft, q(torch_p["wt"]).T) + torch_p["bt"]
    return pred, tgt


if __name__ == "__main__":
    key = jax.random.PRNGKey(0)
    k_param, k_x = jax.random.split(key)
    torch_p, kern_p = make_params(k_param)

    x = jax.random.normal(k_x, (B, 1, H, W), dtype=jnp.float32)   # NCHW, like PyTorch

    pred, tgt = jax.block_until_ready(rnd_forward(x, kern_p))
    assert pred.shape == (B, HID) and tgt.shape == (B, HID)

    # Strict check against a reference with the same bf16 weight/activation storage.
    pred_q, tgt_q = rnd_reference(x, torch_p, quantize_bf16=True)
    assert jnp.allclose(pred, pred_q, atol=5e-3, rtol=5e-3), "predictor mismatch (bf16 ref)"
    assert jnp.allclose(tgt, tgt_q, atol=5e-3, rtol=5e-3), "target mismatch (bf16 ref)"

    # Loose check against the full-f32 PyTorch-semantics reference (difference is
    # only the intended bf16 weight/activation quantization noise).
    pred_f, tgt_f = rnd_reference(x, torch_p, quantize_bf16=False)
    assert jnp.allclose(pred, pred_f, atol=1e-1, rtol=1e-1), "predictor mismatch (f32 ref)"
    assert jnp.allclose(tgt, tgt_f, atol=1e-1, rtol=1e-1), "target mismatch (f32 ref)"

    print("KERNEL_OK")
</pallas_src>

<mosaic_0001>
module attributes {stable_mosaic.version = 11 : i64} {
  func.func @rnd_kernel(%arg0: i32, %arg1: i32, %arg2: memref<1x1x8x36xbf16, #tpu.memory_space<vmem>>, %arg3: memref<36x512xbf16, #tpu.memory_space<vmem>>, %arg4: memref<1x512xf32, #tpu.memory_space<vmem>>, %arg5: memref<1x256x512xbf16, #tpu.memory_space<vmem>>, %arg6: memref<1x512xf32, #tpu.memory_space<vmem>>, %arg7: memref<512x512xbf16, #tpu.memory_space<vmem>>, %arg8: memref<1x512xf32, #tpu.memory_space<vmem>>, %arg9: memref<512x512xbf16, #tpu.memory_space<vmem>>, %arg10: memref<1x512xf32, #tpu.memory_space<vmem>>, %arg11: memref<1x256x512xbf16, #tpu.memory_space<vmem>>, %arg12: memref<1x512xf32, #tpu.memory_space<vmem>>, %arg13: memref<8x512xf32, #tpu.memory_space<vmem>>, %arg14: memref<8x512xf32, #tpu.memory_space<vmem>>, %arg15: memref<8x512xf32, #tpu.memory_space<vmem>>, %arg16: memref<8x512xf32, #tpu.memory_space<vmem>>) attributes {dimension_semantics = [#tpu.dimension_semantics<parallel>, #tpu.dimension_semantics<arbitrary>], iteration_bounds = array<i64: 1, 7>, scalar_prefetch = 0 : i64, scratch_operands = 2 : i64, tpu.core_type = #tpu.core_type<tc>, window_params = [{transform_indices = @transform_0, window_bounds = array<i64: 1, 1, 8, 36>}, {pipeline_mode = #tpu.pipeline_mode<synchronous>, transform_indices = @transform_1, window_bounds = array<i64: 36, 512>}, {pipeline_mode = #tpu.pipeline_mode<synchronous>, transform_indices = @transform_2, window_bounds = array<i64: 1, 512>}, {transform_indices = @transform_3, window_bounds = array<i64: 1, 256, 512>}, {pipeline_mode = #tpu.pipeline_mode<synchronous>, transform_indices = @transform_4, window_bounds = array<i64: 1, 512>}, {pipeline_mode = #tpu.pipeline_mode<synchronous>, transform_indices = @transform_5, window_bounds = array<i64: 512, 512>}, {pipeline_mode = #tpu.pipeline_mode<synchronous>, transform_indices = @transform_6, window_bounds = array<i64: 1, 512>}, {pipeline_mode = #tpu.pipeline_mode<synchronous>, transform_indices = @transform_7, window_bounds = array<i64: 512, 512>}, {pipeline_mode = #tpu.pipeline_mode<synchronous>, transform_indices = @transform_8, window_bounds = array<i64: 1, 512>}, {transform_indices = @transform_9, window_bounds = array<i64: 1, 256, 512>}, {pipeline_mode = #tpu.pipeline_mode<synchronous>, transform_indices = @transform_10, window_bounds = array<i64: 1, 512>}, {transform_indices = @transform_11, window_bounds = array<i64: 8, 512>}, {transform_indices = @transform_12, window_bounds = array<i64: 8, 512>}]} {
    %c0_i32 = arith.constant 0 : i32
    %0 = arith.cmpi eq, %arg1, %c0_i32 : i32
    %1 = arith.extui %0 : i1 to i32
    %c0_i32_0 = arith.constant 0 : i32
    %2 = arith.cmpi ne, %1, %c0_i32_0 : i32
    scf.if %2 {
      %cst_26 = arith.constant 0.000000e+00 : f32
      %31 = vector.broadcast %cst_26 : f32 to vector<8x512xf32>
      %c0_27 = arith.constant 0 : index
      %c0_28 = arith.constant 0 : index
      %32 = vector.load %arg15[%c0_27, %c0_28] : memref<8x512xf32, #tpu.memory_space<vmem>>, vector<8x512xf32>
      tpu.vector_store %arg15[%c0_27, %c0_28], %31 {strides = array<i32>} : memref<8x512xf32, #tpu.memory_space<vmem>>, vector<8x512xf32>,
      %cst_29 = arith.constant 0.000000e+00 : f32
      %33 = vector.broadcast %cst_29 : f32 to vector<8x512xf32>
      %c0_30 = arith.constant 0 : index
      %c0_31 = arith.constant 0 : index
      %34 = vector.load %arg16[%c0_30, %c0_31] : memref<8x512xf32, #tpu.memory_space<vmem>>, vector<8x512xf32>
      tpu.vector_store %arg16[%c0_30, %c0_31], %33 {strides = array<i32>} : memref<8x512xf32, #tpu.memory_space<vmem>>, vector<8x512xf32>,
    } else {
    }
    %c0 = arith.constant 0 : index
    %c0_1 = arith.constant 0 : index
    %c0_2 = arith.constant 0 : index
    %c0_3 = arith.constant 0 : index
    %3 = vector.load %arg2[%c0, %c0_1, %c0_2, %c0_3] : memref<1x1x8x36xbf16, #tpu.memory_space<vmem>>, vector<1x1x8x36xbf16>
    %4 = vector.shape_cast %3 : vector<1x1x8x36xbf16> to vector<8x36xbf16>
    %c0_4 = arith.constant 0 : index
    %c0_5 = arith.constant 0 : index
    %5 = vector.load %arg3[%c0_4, %c0_5] : memref<36x512xbf16, #tpu.memory_space<vmem>>, vector<36x512xbf16>
    %cst = arith.constant dense<0.000000e+00> : vector<8x512xf32>
    %6 = tpu.matmul %4, %5, %cst {dimension_numbers = #tpu.dot_dimension_numbers<[1], [0], [0], [1], [0, 0, 1, 1], [], []>} : vector<8x36xbf16>, vector<36x512xbf16>, vector<8x512xf32> -> vector<8x512xf32>
    %c0_6 = arith.constant 0 : index
    %c0_7 = arith.constant 0 : index
    %7 = vector.load %arg4[%c0_6, %c0_7] : memref<1x512xf32, #tpu.memory_space<vmem>>, vector<1x512xf32>
    %8 = vector.broadcast %7 : vector<1x512xf32> to vector<8x512xf32>
    %9 = arith.addf %6, %8 : vector<8x512xf32>
    %cst_8 = arith.constant 0.00999999977 : f32
    %10 = vector.broadcast %cst_8 : f32 to vector<8x512xf32>
    %11 = arith.mulf %10, %9 : vector<8x512xf32>
    %12 = arith.maximumf %9, %11 : vector<8x512xf32>
    %13 = arith.truncf %12 : vector<8x512xf32> to vector<8x512xbf16>
    %c0_9 = arith.constant 0 : index
    %c0_10 = arith.constant 0 : index
    %14 = vector.load %arg15[%c0_9, %c0_10] : memref<8x512xf32, #tpu.memory_space<vmem>>, vector<8x512xf32>
    %15 = vector.extract_strided_slice %13 {offsets = [0, 0], sizes = [8, 256], strides = [1, 1]} : vector<8x512xbf16> to vector<8x256xbf16>
    %c0_11 = arith.constant 0 : index
    %c0_12 = arith.constant 0 : index
    %c0_13 = arith.constant 0 : index
    %16 = vector.load %arg5[%c0_11, %c0_12, %c0_13] : memref<1x256x512xbf16, #tpu.memory_space<vmem>>, vector<1x256x512xbf16>
    %17 = vector.shape_cast %16 : vector<1x256x512xbf16> to vector<256x512xbf16>
    %cst_14 = arith.constant dense<0.000000e+00> : vector<8x512xf32>
    %18 = tpu.matmul %15, %17, %cst_14 {dimension_numbers = #tpu.dot_dimension_numbers<[1], [0], [0], [1], [0, 0, 1, 1], [], []>} : vector<8x256xbf16>, vector<256x512xbf16>, vector<8x512xf32> -> vector<8x512xf32>
    %19 = arith.addf %14, %18 : vector<8x512xf32>
    %c0_15 = arith.constant 0 : index
    %c0_16 = arith.constant 0 : index
    %20 = vector.load %arg15[%c0_15, %c0_16] : memref<8x512xf32, #tpu.memory_space<vmem>>, vector<8x512xf32>
    tpu.vector_store %arg15[%c0_15, %c0_16], %19 {strides = array<i32>} : memref<8x512xf32, #tpu.memory_space<vmem>>, vector<8x512xf32>,
    %c0_17 = arith.constant 0 : index
    %c0_18 = arith.constant 0 : index
    %21 = vector.load %arg16[%c0_17, %c0_18] : memref<8x512xf32, #tpu.memory_space<vmem>>, vector<8x512xf32>
    %22 = vector.extract_strided_slice %13 {offsets = [0, 256], sizes = [8, 256], strides = [1, 1]} : vector<8x512xbf16> to vector<8x256xbf16>
    %c0_19 = arith.constant 0 : index
    %c0_20 = arith.constant 0 : index
    %c0_21 = arith.constant 0 : index
    %23 = vector.load %arg11[%c0_19, %c0_20, %c0_21] : memref<1x256x512xbf16, #tpu.memory_space<vmem>>, vector<1x256x512xbf16>
    %24 = vector.shape_cast %23 : vector<1x256x512xbf16> to vector<256x512xbf16>
    %cst_22 = arith.constant dense<0.000000e+00> : vector<8x512xf32>
    %25 = tpu.matmul %22, %24, %cst_22 {dimension_numbers = #tpu.dot_dimension_numbers<[1], [0], [0], [1], [0, 0, 1, 1], [], []>} : vector<8x256xbf16>, vector<256x512xbf16>, vector<8x512xf32> -> vector<8x512xf32>
    %26 = arith.addf %21, %25 : vector<8x512xf32>
    %c0_23 = arith.constant 0 : index
    %c0_24 = arith.constant 0 : index
    %27 = vector.load %arg16[%c0_23, %c0_24] : memref<8x512xf32, #tpu.memory_space<vmem>>, vector<8x512xf32>
    tpu.vector_store %arg16[%c0_23, %c0_24], %26 {strides = array<i32>} : memref<8x512xf32, #tpu.memory_space<vmem>>, vector<8x512xf32>,
    %c6_i32 = arith.constant 6 : i32
    %28 = arith.cmpi eq, %arg1, %c6_i32 : i32
    %29 = arith.extui %28 : i1 to i32
    %c0_i32_25 = arith.constant 0 : i32
    %30 = arith.cmpi ne, %29, %c0_i32_25 : i32
    scf.if %30 {
      %c0_26 = arith.constant 0 : index
      %c0_27 = arith.constant 0 : index
      %31 = vector.load %arg15[%c0_26, %c0_27] : memref<8x512xf32, #tpu.memory_space<vmem>>, vector<8x512xf32>
      %c0_28 = arith.constant 0 : index
      %c0_29 = arith.constant 0 : index
      %32 = vector.load %arg6[%c0_28, %c0_29] : memref<1x512xf32, #tpu.memory_space<vmem>>, vector<1x512xf32>
      %33 = vector.broadcast %32 : vector<1x512xf32> to vector<8x512xf32>
      %34 = arith.addf %31, %33 : vector<8x512xf32>
      %cst_30 = arith.constant 0.000000e+00 : f32
      %35 = vector.broadcast %cst_30 : f32 to vector<8x512xf32>
      %36 = arith.maximumf %34, %35 : vector<8x512xf32>
      %37 = arith.truncf %36 : vector<8x512xf32> to vector<8x512xbf16>
      %c0_31 = arith.constant 0 : index
      %c0_32 = arith.constant 0 : index
      %38 = vector.load %arg7[%c0_31, %c0_32] : memref<512x512xbf16, #tpu.memory_space<vmem>>, vector<512x512xbf16>
      %cst_33 = arith.constant dense<0.000000e+00> : vector<8x512xf32>
      %39 = tpu.matmul %37, %38, %cst_33 {dimension_numbers = #tpu.dot_dimension_numbers<[1], [0], [0], [1], [0, 0, 1, 1], [], []>} : vector<8x512xbf16>, vector<512x512xbf16>, vector<8x512xf32> -> vector<8x512xf32>
      %c0_34 = arith.constant 0 : index
      %c0_35 = arith.constant 0 : index
      %40 = vector.load %arg8[%c0_34, %c0_35] : memref<1x512xf32, #tpu.memory_space<vmem>>, vector<1x512xf32>
      %41 = vector.broadcast %40 : vector<1x512xf32> to vector<8x512xf32>
      %42 = arith.addf %39, %41 : vector<8x512xf32>
      %cst_36 = arith.constant 0.000000e+00 : f32
      %43 = vector.broadcast %cst_36 : f32 to vector<8x512xf32>
      %44 = arith.maximumf %42, %43 : vector<8x512xf32>
      %45 = arith.truncf %44 : vector<8x512xf32> to vector<8x512xbf16>
      %c0_37 = arith.constant 0 : index
      %c0_38 = arith.constant 0 : index
      %46 = vector.load %arg9[%c0_37, %c0_38] : memref<512x512xbf16, #tpu.memory_space<vmem>>, vector<512x512xbf16>
      %cst_39 = arith.constant dense<0.000000e+00> : vector<8x512xf32>
      %47 = tpu.matmul %45, %46, %cst_39 {dimension_numbers = #tpu.dot_dimension_numbers<[1], [0], [0], [1], [0, 0, 1, 1], [], []>} : vector<8x512xbf16>, vector<512x512xbf16>, vector<8x512xf32> -> vector<8x512xf32>
      %c0_40 = arith.constant 0 : index
      %c0_41 = arith.constant 0 : index
      %48 = vector.load %arg10[%c0_40, %c0_41] : memref<1x512xf32, #tpu.memory_space<vmem>>, vector<1x512xf32>
      %49 = vector.broadcast %48 : vector<1x512xf32> to vector<8x512xf32>
      %50 = arith.addf %47, %49 : vector<8x512xf32>
      %c0_42 = arith.constant 0 : index
      %c0_43 = arith.constant 0 : index
      %51 = vector.load %arg13[%c0_42, %c0_43] : memref<8x512xf32, #tpu.memory_space<vmem>>, vector<8x512xf32>
      tpu.vector_store %arg13[%c0_42, %c0_43], %50 {strides = array<i32>} : memref<8x512xf32, #tpu.memory_space<vmem>>, vector<8x512xf32>,
      %c0_44 = arith.constant 0 : index
      %c0_45 = arith.constant 0 : index
      %52 = vector.load %arg16[%c0_44, %c0_45] : memref<8x512xf32, #tpu.memory_space<vmem>>, vector<8x512xf32>
      %c0_46 = arith.constant 0 : index
      %c0_47 = arith.constant 0 : index
      %53 = vector.load %arg12[%c0_46, %c0_47] : memref<1x512xf32, #tpu.memory_space<vmem>>, vector<1x512xf32>
      %54 = vector.broadcast %53 : vector<1x512xf32> to vector<8x512xf32>
      %55 = arith.addf %52, %54 : vector<8x512xf32>
      %c0_48 = arith.constant 0 : index
      %c0_49 = arith.constant 0 : index
      %56 = vector.load %arg14[%c0_48, %c0_49] : memref<8x512xf32, #tpu.memory_space<vmem>>, vector<8x512xf32>
      tpu.vector_store %arg14[%c0_48, %c0_49], %55 {strides = array<i32>} : memref<8x512xf32, #tpu.memory_space<vmem>>, vector<8x512xf32>,
    } else {
    }
    return
  }
  func.func @transform_0(%arg0: i32, %arg1: i32) -> (i32, i32, i32, i32) {
    %c0_i32 = arith.constant 0 : i32
    %c0_i32_0 = arith.constant 0 : i32
    %c0_i32_1 = arith.constant 0 : i32
    return %arg0, %arg1, %c0_i32, %c0_i32_0 : i32, i32, i32, i32
  }
  func.func @transform_1(%arg0: i32, %arg1: i32) -> (i32, i32) {
    %c0_i32 = arith.constant 0 : i32
    %c0_i32_0 = arith.constant 0 : i32
    %c0_i32_1 = arith.constant 0 : i32
    return %c0_i32, %c0_i32_0 : i32, i32
  }
  func.func @transform_2(%arg0: i32, %arg1: i32) -> (i32, i32) {
    %c0_i32 = arith.constant 0 : i32
    %c0_i32_0 = arith.constant 0 : i32
    %c0_i32_1 = arith.constant 0 : i32
    return %c0_i32, %c0_i32_0 : i32, i32
  }
  func.func @transform_3(%arg0: i32, %arg1: i32) -> (i32, i32, i32) {
    %c0_i32 = arith.constant 0 : i32
    %c0_i32_0 = arith.constant 0 : i32
    %c0_i32_1 = arith.constant 0 : i32
    return %arg1, %c0_i32, %c0_i32_0 : i32, i32, i32
  }
  func.func @transform_4(%arg0: i32, %arg1: i32) -> (i32, i32) {
    %c0_i32 = arith.constant 0 : i32
    %c0_i32_0 = arith.constant 0 : i32
    %c0_i32_1 = arith.constant 0 : i32
    return %c0_i32, %c0_i32_0 : i32, i32
  }
  func.func @transform_5(%arg0: i32, %arg1: i32) -> (i32, i32) {
    %c0_i32 = arith.constant 0 : i32
    %c0_i32_0 = arith.constant 0 : i32
    %c0_i32_1 = arith.constant 0 : i32
    return %c0_i32, %c0_i32_0 : i32, i32
  }
  func.func @transform_6(%arg0: i32, %arg1: i32) -> (i32, i32) {
    %c0_i32 = arith.constant 0 : i32
    %c0_i32_0 = arith.constant 0 : i32
    %c0_i32_1 = arith.constant 0 : i32
    return %c0_i32, %c0_i32_0 : i32, i32
  }
  func.func @transform_7(%arg0: i32, %arg1: i32) -> (i32, i32) {
    %c0_i32 = arith.constant 0 : i32
    %c0_i32_0 = arith.constant 0 : i32
    %c0_i32_1 = arith.constant 0 : i32
    return %c0_i32, %c0_i32_0 : i32, i32
  }
  func.func @transform_8(%arg0: i32, %arg1: i32) -> (i32, i32) {
    %c0_i32 = arith.constant 0 : i32
    %c0_i32_0 = arith.constant 0 : i32
    %c0_i32_1 = arith.constant 0 : i32
    return %c0_i32, %c0_i32_0 : i32, i32
  }
  func.func @transform_9(%arg0: i32, %arg1: i32) -> (i32, i32, i32) {
    %c0_i32 = arith.constant 0 : i32
    %c0_i32_0 = arith.constant 0 : i32
    %c0_i32_1 = arith.constant 0 : i32
    return %arg1, %c0_i32, %c0_i32_0 : i32, i32, i32
  }
  func.func @transform_10(%arg0: i32, %arg1: i32) -> (i32, i32) {
    %c0_i32 = arith.constant 0 : i32
    %c0_i32_0 = arith.constant 0 : i32
    %c0_i32_1 = arith.constant 0 : i32
    return %c0_i32, %c0_i32_0 : i32, i32
  }
  func.func @transform_11(%arg0: i32, %arg1: i32) -> (i32, i32) {
    %c0_i32 = arith.constant 0 : i32
    %c0_i32_0 = arith.constant 0 : i32
    return %arg0, %c0_i32 : i32, i32
  }
  func.func @transform_12(%arg0: i32, %arg1: i32) -> (i32, i32) {
    %c0_i32 = arith.constant 0 : i32
    %c0_i32_0 = arith.constant 0 : i32
    return %arg0, %c0_i32 : i32, i32
  }
}

</mosaic_0001>

<llo_original>
// kernel: rnd_forward.1
$region0: #{rnd_forward.1}
  #allocation0 [shape = 'u32[]', space=smem, size = 0x4, offset = 0x4, fixed_abs, tag = 'smem constant byte address 0x4 - core index']
  #allocation1 [shape = 'u32[144,128]{1,0:T(1,128)}', space=vmem, size = 0x12000, scoped, tag = 'internal scratch']
  #allocation2 [shape = 'f32[8,512]{1,0:T(8,128)}', space=vmem, size = 0x4000, scoped, tag = 'scratch operand']
  #allocation3 [shape = 'f32[8,512]{1,0:T(8,128)}', space=vmem, size = 0x4000, scoped, tag = 'scratch operand']
  %s0 = inlined_call_operand.vmem [shape: bf16[1,7,8,36], index: 0, kind: input, shape index: {}]
  %s1 = inlined_call_operand.hbm [shape: bf16[36,512], index: 1, kind: input, shape index: {}]
  %s2 = inlined_call_operand.hbm [shape: f32[1,512], index: 2, kind: input, shape index: {}]
  %s3 = inlined_call_operand.hbm [shape: bf16[7,256,512], index: 3, kind: input, shape index: {}]
  %s4 = inlined_call_operand.hbm [shape: f32[1,512], index: 4, kind: input, shape index: {}]
  %s5 = inlined_call_operand.hbm [shape: bf16[512,512], index: 5, kind: input, shape index: {}]
  %s6 = inlined_call_operand.hbm [shape: f32[1,512], index: 6, kind: input, shape index: {}]
  %s7 = inlined_call_operand.hbm [shape: bf16[512,512], index: 7, kind: input, shape index: {}]
  %s8 = inlined_call_operand.hbm [shape: f32[1,512], index: 8, kind: input, shape index: {}]
  %s9 = inlined_call_operand.hbm [shape: bf16[7,256,512], index: 9, kind: input, shape index: {}]
  %s10 = inlined_call_operand.hbm [shape: f32[1,512], index: 10, kind: input, shape index: {}]
  %s11 = inlined_call_operand.vmem [shape: f32[8,512], index: 11, kind: output, shape index: {0}]
  %s12 = inlined_call_operand.vmem [shape: f32[8,512], index: 12, kind: output, shape index: {1}]
  %13 = xla_tuple %s11, %s12
  %s14 = sld [smem:[#allocation0]]
  $region133: #{rnd_forward.1} parent=0
    _
  %s16 = ssub.s32 1, %s14
  %s17 = scalar_select 0, %s16, %s14
  $region1: #{rnd_forward.1} parent=0
    #allocation4 [shape = 'u8[40960]{0}', space=vmem, size = 0xa000, scoped, tag = 'input window, operand 1, single buffered']
    #allocation5 [shape = 's32[2]{0}', space=sflag, size = 0x8, scoped, tag = 'scoped memory for rnd_forward.1']
    #allocation6 [shape = 'u8[2048]{0}', space=vmem, size = 0x800, scoped, tag = 'input window, operand 2, single buffered']
    #allocation7 [shape = 's32[1]{0}', space=sflag, size = 0x4, scoped, tag = 'scoped memory for rnd_forward.1']
    #allocation8 [shape = 'u8[524288]{0}', space=vmem, size = 0x80000, scoped, tag = 'input window, operand 3']
    #allocation9 [shape = 'u8[2048]{0}', space=vmem, size = 0x800, scoped, tag = 'input window, operand 4, single buffered']
    #allocation10 [shape = 'u8[524288]{0}', space=vmem, size = 0x80000, scoped, tag = 'input window, operand 5, single buffered']
    #allocation11 [shape = 's32[1]{0}', space=sflag, size = 0x4, scoped, tag = 'scoped memory for rnd_forward.1']
    #allocation12 [shape = 'u8[2048]{0}', space=vmem, size = 0x800, scoped, tag = 'input window, operand 6, single buffered']
    #allocation13 [shape = 'u8[524288]{0}', space=vmem, size = 0x80000, scoped, tag = 'input window, operand 7, single buffered']
    #allocation14 [shape = 's32[1]{0}', space=sflag, size = 0x4, scoped, tag = 'scoped memory for rnd_forward.1']
    #allocation15 [shape = 'u8[2048]{0}', space=vmem, size = 0x800, scoped, tag = 'input window, operand 8, single buffered']
    #allocation16 [shape = 'u8[524288]{0}', space=vmem, size = 0x80000, scoped, tag = 'input window, operand 9']
    #allocation17 [shape = 's32[2]{0}', space=sflag, size = 0x8, scoped, tag = 'scoped memory for rnd_forward.1']
    #allocation18 [shape = 'u8[2048]{0}', space=vmem, size = 0x800, scoped, tag = 'input window, operand 10, single buffered']
    %18 = vsyncpa [#allocation5], 0
    %19 = vsyncpa [#allocation7], 0
    %20 = vsyncpa [#allocation11], 0
    %21 = vsyncpa [#allocation14], 0
    %22 = vsyncpa [#allocation17], 0
    %s23 = scalar_lea.sflag [#allocation17], 1
    %24 = vsyncpa %s23, 0
    loop: start=0, step=1, limit=9
    $region2: #{rnd_forward.1} parent=1 // loop_pre_header
      _
    $region3: #{rnd_forward.1} parent=1 // loop_header
      %s26 = sphi 0, %s30
      %p27 = scmp.ge.s32.totalorder %s26, 9
      %s33 = sphi 0, %s45
      %s34 = sphi 0, %s41
      %s35 = sphi 0, %s33
      %s36 = sphi 0, %s34
      %s37 = sphi 0, %s35
      %s38 = sphi 0, %s36
      %s50 = sphi 0, %s52
      %s53 = sphi 0, %s50
      %s54 = sphi 0, %s53
      %s70 = sphi 0, %s54
      %s74 = sphi 0, %s74
      %s76 = sphi 0, %s74
      %s77 = sphi 0, %s76
      %s91 = sphi 0, %s77
      %s95 = sphi 0, %s95
      %s97 = sphi 0, %s95
      %s98 = sphi 0, %s97
      %s112 = sphi 0, %s98
      %s118 = sphi 0, %s120
      %s121 = sphi 0, %s118
      %s122 = sphi 0, %s121
      %s138 = sphi 0, %s122
      %s142 = sphi 0, %s142
      %s144 = sphi 0, %s142
      %s145 = sphi 0, %s144
      %s159 = sphi 0, %s145
      %s163 = sphi 0, %s163
      %s165 = sphi 0, %s163
      %s166 = sphi 0, %s165
      %s180 = sphi 0, %s166
      %s184 = sphi 0, %s184
      %s186 = sphi 0, %s184
      %s187 = sphi 0, %s186
      %s201 = sphi 0, %s187
      %s205 = sphi 0, %s205
      %s207 = sphi 0, %s205
      %s208 = sphi 0, %s207
      %s222 = sphi 0, %s208
      %s226 = sphi 0, %s226
      %s228 = sphi 0, %s226
      %s229 = sphi 0, %s228
      %s243 = sphi 0, %s229
      %s249 = sphi 0, %s251
      %s252 = sphi 0, %s249
      %s253 = sphi 0, %s252
      %s269 = sphi 0, %s253
      %s273 = sphi 0, %s273
      %s275 = sphi 0, %s273
      %s276 = sphi 0, %s275
      %s290 = sphi 0, %s276
      %s296 = sphi 0, %s298
      %s299 = sphi 0, %s296
      %s300 = sphi 0, %s299
      %s316 = sphi 0, %s300
      %s322 = sphi 0, %s324
      %s325 = sphi 0, %s322
      %s326 = sphi 0, %s325
      %s342 = sphi 0, %s326
    $region4: #{rnd_forward.1} parent=1 // loop_header_branch
      %29 = sbr.rel (%p27) target = $region8
    $region5: #{rnd_forward.1} parent=1 // loop_body
      %s31 = ssub.s32 %s26, 1
      %s32 = ssub.s32 %s26, 2
      %s39 = sadd.s32 1, %s34
      %p40 = scmp.ge.s32.totalorder %s39, 7
      %s41 = scalar_select %p40, 0, %s39
      %s42 = sadd.s32 1, %s33
      %s43 = scalar_select %p40, %s42, %s33
      %p44 = scmp.ge.s32.totalorder %s43, 1
      %s45 = scalar_select %p44, 0, %s43
      %s46 = ssub.s32 %s33, %s45
      %s47 = ssub.s32 %s34, %s41
      %s48 = sor.u32 %s46, %s47
      %p49 = scmp.eq.s32.totalorder %s48, 0
      %s51 = sadd.s32 %s50, 1
      %s52 = scalar_select %p49, %s50, %s51
      %p55 = pneg %p49
      %p56 = scmp.eq.s32.totalorder %s26, 6
      %p57 = por %p55, %p56
      %p58 = scmp.ne.s32.totalorder %s50, %s53
      %p59 = scmp.eq.s32.totalorder %s26, 0
      %p60 = por %p58, %p59
      %p61 = scmp.ne.s32.totalorder %s50, %s53
      %p62 = scmp.eq.s32.totalorder %s31, 6
      %p63 = por %p61, %p62
      %p64 = scmp.ne.s32.totalorder %s53, %s54
      %p65 = scmp.eq.s32.totalorder %s31, 0
      %p66 = por %p64, %p65
      %p67 = scmp.ne.s32.totalorder %s53, %s54
      %p68 = scmp.eq.s32.totalorder %s32, 6
      %p69 = por %p67, %p68
      %p71 = scmp.ne.s32.totalorder %s54, %s70
      %p72 = scmp.eq.s32.totalorder %s32, 0
      %p73 = por %p71, %p72
      %s75 = sadd.s32 %s74, 1
      %p78 = scmp.eq.s32.totalorder %s26, 6
      %p79 = scmp.ne.s32.totalorder %s74, %s76
      %p80 = scmp.eq.s32.totalorder %s26, 0
      %p81 = por %p79, %p80
      %p82 = scmp.ne.s32.totalorder %s74, %s76
      %p83 = scmp.eq.s32.totalorder %s31, 6
      %p84 = por %p82, %p83
      %p85 = scmp.ne.s32.totalorder %s76, %s77
      %p86 = scmp.eq.s32.totalorder %s31, 0
      %p87 = por %p85, %p86
      %p88 = scmp.ne.s32.totalorder %s76, %s77
      %p89 = scmp.eq.s32.totalorder %s32, 6
      %p90 = por %p88, %p89
      %p92 = scmp.ne.s32.totalorder %s77, %s91
      %p93 = scmp.eq.s32.totalorder %s32, 0
      %p94 = por %p92, %p93
      %s96 = sadd.s32 %s95, 1
      %p99 = scmp.eq.s32.totalorder %s26, 6
      %p100 = scmp.ne.s32.totalorder %s95, %s97
      %p101 = scmp.eq.s32.totalorder %s26, 0
      %p102 = por %p100, %p101
      %p103 = scmp.ne.s32.totalorder %s95, %s97
      %p104 = scmp.eq.s32.totalorder %s31, 6
      %p105 = por %p103, %p104
      %p106 = scmp.ne.s32.totalorder %s97, %s98
      %p107 = scmp.eq.s32.totalorder %s31, 0
      %p108 = por %p106, %p107
      %p109 = scmp.ne.s32.totalorder %s97, %s98
      %p110 = scmp.eq.s32.totalorder %s32, 6
      %p111 = por %p109, %p110
      %p113 = scmp.ne.s32.totalorder %s98, %s112
      %p114 = scmp.eq.s32.totalorder %s32, 0
      %p115 = por %p113, %p114
      %s116 = ssub.s32 %s34, %s41
      %p117 = scmp.eq.s32.totalorder %s116, 0
      %s119 = sadd.s32 %s118, 1
      %s120 = scalar_select %p117, %s118, %s119
      %p123 = pneg %p117
      %p124 = scmp.eq.s32.totalorder %s26, 6
      %p125 = por %p123, %p124
      %p126 = scmp.ne.s32.totalorder %s118, %s121
      %p127 = scmp.eq.s32.totalorder %s26, 0
      %p128 = por %p126, %p127
      %p129 = scmp.ne.s32.totalorder %s118, %s121
      %p130 = scmp.eq.s32.totalorder %s31, 6
      %p131 = por %p129, %p130
      %p132 = scmp.ne.s32.totalorder %s121, %s122
      %p133 = scmp.eq.s32.totalorder %s31, 0
      %p134 = por %p132, %p133
      %p135 = scmp.ne.s32.totalorder %s121, %s122
      %p136 = scmp.eq.s32.totalorder %s32, 6
      %p137 = por %p135, %p136
      %p139 = scmp.ne.s32.totalorder %s122, %s138
      %p140 = scmp.eq.s32.totalorder %s32, 0
      %p141 = por %p139, %p140
      %s143 = sadd.s32 %s142, 1
      %p146 = scmp.eq.s32.totalorder %s26, 6
      %p147 = scmp.ne.s32.totalorder %s142, %s144
      %p148 = scmp.eq.s32.totalorder %s26, 0
      %p149 = por %p147, %p148
      %p150 = scmp.ne.s32.totalorder %s142, %s144
      %p151 = scmp.eq.s32.totalorder %s31, 6
      %p152 = por %p150, %p151
      %p153 = scmp.ne.s32.totalorder %s144, %s145
      %p154 = scmp.eq.s32.totalorder %s31, 0
      %p155 = por %p153, %p154
      %p156 = scmp.ne.s32.totalorder %s144, %s145
      %p157 = scmp.eq.s32.totalorder %s32, 6
      %p158 = por %p156, %p157
      %p160 = scmp.ne.s32.totalorder %s145, %s159
      %p161 = scmp.eq.s32.totalorder %s32, 0
      %p162 = por %p160, %p161
      %s164 = sadd.s32 %s163, 1
      %p167 = scmp.eq.s32.totalorder %s26, 6
      %p168 = scmp.ne.s32.totalorder %s163, %s165
      %p169 = scmp.eq.s32.totalorder %s26, 0
      %p170 = por %p168, %p169
      %p171 = scmp.ne.s32.totalorder %s163, %s165
      %p172 = scmp.eq.s32.totalorder %s31, 6
      %p173 = por %p171, %p172
      %p174 = scmp.ne.s32.totalorder %s165, %s166
      %p175 = scmp.eq.s32.totalorder %s31, 0
      %p176 = por %p174, %p175
      %p177 = scmp.ne.s32.totalorder %s165, %s166
      %p178 = scmp.eq.s32.totalorder %s32, 6
      %p179 = por %p177, %p178
      %p181 = scmp.ne.s32.totalorder %s166, %s180
      %p182 = scmp.eq.s32.totalorder %s32, 0
      %p183 = por %p181, %p182
      %s185 = sadd.s32 %s184, 1
      %p188 = scmp.eq.s32.totalorder %s26, 6
      %p189 = scmp.ne.s32.totalorder %s184, %s186
      %p190 = scmp.eq.s32.totalorder %s26, 0
      %p191 = por %p189, %p190
      %p192 = scmp.ne.s32.totalorder %s184, %s186
      %p193 = scmp.eq.s32.totalorder %s31, 6
      %p194 = por %p192, %p193
      %p195 = scmp.ne.s32.totalorder %s186, %s187
      %p196 = scmp.eq.s32.totalorder %s31, 0
      %p197 = por %p195, %p196
      %p198 = scmp.ne.s32.totalorder %s186, %s187
      %p199 = scmp.eq.s32.totalorder %s32, 6
      %p200 = por %p198, %p199
      %p202 = scmp.ne.s32.totalorder %s187, %s201
      %p203 = scmp.eq.s32.totalorder %s32, 0
      %p204 = por %p202, %p203
      %s206 = sadd.s32 %s205, 1
      %p209 = scmp.eq.s32.totalorder %s26, 6
      %p210 = scmp.ne.s32.totalorder %s205, %s207
      %p211 = scmp.eq.s32.totalorder %s26, 0
      %p212 = por %p210, %p211
      %p213 = scmp.ne.s32.totalorder %s205, %s207
      %p214 = scmp.eq.s32.totalorder %s31, 6
      %p215 = por %p213, %p214
      %p216 = scmp.ne.s32.totalorder %s207, %s208
      %p217 = scmp.eq.s32.totalorder %s31, 0
      %p218 = por %p216, %p217
      %p219 = scmp.ne.s32.totalorder %s207, %s208
      %p220 = scmp.eq.s32.totalorder %s32, 6
      %p221 = por %p219, %p220
      %p223 = scmp.ne.s32.totalorder %s208, %s222
      %p224 = scmp.eq.s32.totalorder %s32, 0
      %p225 = por %p223, %p224
      %s227 = sadd.s32 %s226, 1
      %p230 = scmp.eq.s32.totalorder %s26, 6
      %p231 = scmp.ne.s32.totalorder %s226, %s228
      %p232 = scmp.eq.s32.totalorder %s26, 0
      %p233 = por %p231, %p232
      %p234 = scmp.ne.s32.totalorder %s226, %s228
      %p235 = scmp.eq.s32.totalorder %s31, 6
      %p236 = por %p234, %p235
      %p237 = scmp.ne.s32.totalorder %s228, %s229
      %p238 = scmp.eq.s32.totalorder %s31, 0
      %p239 = por %p237, %p238
      %p240 = scmp.ne.s32.totalorder %s228, %s229
      %p241 = scmp.eq.s32.totalorder %s32, 6
      %p242 = por %p240, %p241
      %p244 = scmp.ne.s32.totalorder %s229, %s243
      %p245 = scmp.eq.s32.totalorder %s32, 0
      %p246 = por %p244, %p245
      %s247 = ssub.s32 %s34, %s41
      %p248 = scmp.eq.s32.totalorder %s247, 0
      %s250 = sadd.s32 %s249, 1
      %s251 = scalar_select %p248, %s249, %s250
      %p254 = pneg %p248
      %p255 = scmp.eq.s32.totalorder %s26, 6
      %p256 = por %p254, %p255
      %p257 = scmp.ne.s32.totalorder %s249, %s252
      %p258 = scmp.eq.s32.totalorder %s26, 0
      %p259 = por %p257, %p258
      %p260 = scmp.ne.s32.totalorder %s249, %s252
      %p261 = scmp.eq.s32.totalorder %s31, 6
      %p262 = por %p260, %p261
      %p263 = scmp.ne.s32.totalorder %s252, %s253
      %p264 = scmp.eq.s32.totalorder %s31, 0
      %p265 = por %p263, %p264
      %p266 = scmp.ne.s32.totalorder %s252, %s253
      %p267 = scmp.eq.s32.totalorder %s32, 6
      %p268 = por %p266, %p267
      %p270 = scmp.ne.s32.totalorder %s253, %s269
      %p271 = scmp.eq.s32.totalorder %s32, 0
      %p272 = por %p270, %p271
      %s274 = sadd.s32 %s273, 1
      %p277 = scmp.eq.s32.totalorder %s26, 6
      %p278 = scmp.ne.s32.totalorder %s273, %s275
      %p279 = scmp.eq.s32.totalorder %s26, 0
      %p280 = por %p278, %p279
      %p281 = scmp.ne.s32.totalorder %s273, %s275
      %p282 = scmp.eq.s32.totalorder %s31, 6
      %p283 = por %p281, %p282
      %p284 = scmp.ne.s32.totalorder %s275, %s276
      %p285 = scmp.eq.s32.totalorder %s31, 0
      %p286 = por %p284, %p285
      %p287 = scmp.ne.s32.totalorder %s275, %s276
      %p288 = scmp.eq.s32.totalorder %s32, 6
      %p289 = por %p287, %p288
      %p291 = scmp.ne.s32.totalorder %s276, %s290
      %p292 = scmp.eq.s32.totalorder %s32, 0
      %p293 = por %p291, %p292
      %s294 = ssub.s32 %s33, %s45
      %p295 = scmp.eq.s32.totalorder %s294, 0
      %s297 = sadd.s32 %s296, 1
      %s298 = scalar_select %p295, %s296, %s297
      %p301 = pneg %p295
      %p302 = scmp.eq.s32.totalorder %s26, 6
      %p303 = por %p301, %p302
      %p304 = scmp.ne.s32.totalorder %s296, %s299
      %p305 = scmp.eq.s32.totalorder %s26, 0
      %p306 = por %p304, %p305
      %p307 = scmp.ne.s32.totalorder %s296, %s299
      %p308 = scmp.eq.s32.totalorder %s31, 6
      %p309 = por %p307, %p308
      %p310 = scmp.ne.s32.totalorder %s299, %s300
      %p311 = scmp.eq.s32.totalorder %s31, 0
      %p312 = por %p310, %p311
      %p313 = scmp.ne.s32.totalorder %s299, %s300
      %p314 = scmp.eq.s32.totalorder %s32, 6
      %p315 = por %p313, %p314
      %p317 = scmp.ne.s32.totalorder %s300, %s316
      %p318 = scmp.eq.s32.totalorder %s32, 0
      %p319 = por %p317, %p318
      %s320 = ssub.s32 %s33, %s45
      %p321 = scmp.eq.s32.totalorder %s320, 0
      %s323 = sadd.s32 %s322, 1
      %s324 = scalar_select %p321, %s322, %s323
      %p327 = pneg %p321
      %p328 = scmp.eq.s32.totalorder %s26, 6
      %p329 = por %p327, %p328
      %p330 = scmp.ne.s32.totalorder %s322, %s325
      %p331 = scmp.eq.s32.totalorder %s26, 0
      %p332 = por %p330, %p331
      %p333 = scmp.ne.s32.totalorder %s322, %s325
      %p334 = scmp.eq.s32.totalorder %s31, 6
      %p335 = por %p333, %p334
      %p336 = scmp.ne.s32.totalorder %s325, %s326
      %p337 = scmp.eq.s32.totalorder %s31, 0
      %p338 = por %p336, %p337
      %p339 = scmp.ne.s32.totalorder %s325, %s326
      %p340 = scmp.eq.s32.totalorder %s32, 6
      %p341 = por %p339, %p340
      %p343 = scmp.ne.s32.totalorder %s326, %s342
      %p344 = scmp.eq.s32.totalorder %s32, 0
      %p345 = por %p343, %p344
      %p346 = scmp.le.s32.totalorder 1, %s26
      %p347 = scmp.lt.s32.totalorder %s26, 8
      %p348 = pnand %p346, %p347
      %p349 = pneg %p348
      // Predicated region
      $region9: #{rnd_forward.1} parent=5 // pred_check
        _
      $region10: #{rnd_forward.1} parent=5 // pred_check_branch
        %351 = sbr.rel (%p348) target = $region12
      $region11: #{rnd_forward.1} parent=5 // pred_region
        %s352 = ssub.s32 %s26, 1
        // Predicated region
        $region13: #{rnd_forward.1} parent=11 // pred_check
          %p353 = pneg %p87
        $region14: #{rnd_forward.1} parent=11 // pred_check_branch
          %355 = sbr.rel (%p353) target = $region16
        $region15: #{rnd_forward.1} parent=11 // pred_region
          %s357 = ssub.s32 1280, 1280
          %358 = vsyncadd [#allocation5], %s357
          %s359 = sshll.u32 [#allocation4], 4
          %s360 = int_to_ptr.vmem [resolvable:$true] %s359
          %365 = dma.hbm_to_vmem [thread:$0]  %s1, 1280, %s360, [#allocation5], 256, 256, 16
        $region16: #{rnd_forward.1} parent=11 // pred_fallthru
          _
        // Predicated region
        $region17: #{rnd_forward.1} parent=11 // pred_check
          %p366 = pneg %p108
        $region18: #{rnd_forward.1} parent=11 // pred_check_branch
          %368 = sbr.rel (%p366) target = $region20
        $region19: #{rnd_forward.1} parent=11 // pred_region
          %s370 = ssub.s32 64, 64
          %371 = vsyncadd [#allocation7], %s370
          %s373 = sshll.u32 [#allocation6], 4
          %s374 = int_to_ptr.vmem [resolvable:$true] %s373
          %376 = dma.hbm_to_vmem [thread:$0]  %s2, 64, %s374, [#allocation7]
        $region20: #{rnd_forward.1} parent=11 // pred_fallthru
          _
        // Predicated region
        $region21: #{rnd_forward.1} parent=11 // pred_check
          %p377 = pneg %p155
        $region22: #{rnd_forward.1} parent=11 // pred_check_branch
          %379 = sbr.rel (%p377) target = $region24
        $region23: #{rnd_forward.1} parent=11 // pred_region
          %s381 = ssub.s32 64, 64
          %382 = vsyncadd [#allocation7], %s381
          %s384 = sshll.u32 [#allocation9], 4
          %s385 = int_to_ptr.vmem [resolvable:$true] %s384
          %387 = dma.hbm_to_vmem [thread:$0]  %s4, 64, %s385, [#allocation7]
        $region24: #{rnd_forward.1} parent=11 // pred_fallthru
          _
        // Predicated region
        $region25: #{rnd_forward.1} parent=11 // pred_check
          %p388 = pneg %p176
        $region26: #{rnd_forward.1} parent=11 // pred_check_branch
          %390 = sbr.rel (%p388) target = $region28
        $region27: #{rnd_forward.1} parent=11 // pred_region
          %s392 = ssub.s32 16384, 16384
          %393 = vsyncadd [#allocation11], %s392
          %s394 = sshll.u32 [#allocation10], 4
          %s395 = int_to_ptr.vmem [resolvable:$true] %s394
          %400 = dma.hbm_to_vmem [thread:$0]  %s5, 16384, %s395, [#allocation11], 256, 256, 16
        $region28: #{rnd_forward.1} parent=11 // pred_fallthru
          _
        // Predicated region
        $region29: #{rnd_forward.1} parent=11 // pred_check
          %p401 = pneg %p197
        $region30: #{rnd_forward.1} parent=11 // pred_check_branch
          %403 = sbr.rel (%p401) target = $region32
        $region31: #{rnd_forward.1} parent=11 // pred_region
          %s405 = ssub.s32 64, 64
          %406 = vsyncadd [#allocation11], %s405
          %s408 = sshll.u32 [#allocation12], 4
          %s409 = int_to_ptr.vmem [resolvable:$true] %s408
          %411 = dma.hbm_to_vmem [thread:$0]  %s6, 64, %s409, [#allocation11]
        $region32: #{rnd_forward.1} parent=11 // pred_fallthru
          _
        // Predicated region
        $region33: #{rnd_forward.1} parent=11 // pred_check
          %p412 = pneg %p218
        $region34: #{rnd_forward.1} parent=11 // pred_check_branch
          %414 = sbr.rel (%p412) target = $region36
        $region35: #{rnd_forward.1} parent=11 // pred_region
          %s416 = ssub.s32 16384, 16384
          %417 = vsyncadd [#allocation14], %s416
          %s418 = sshll.u32 [#allocation13], 4
          %s419 = int_to_ptr.vmem [resolvable:$true] %s418
          %424 = dma.hbm_to_vmem [thread:$0]  %s7, 16384, %s419, [#allocation14], 256, 256, 16
        $region36: #{rnd_forward.1} parent=11 // pred_fallthru
          _
        // Predicated region
        $region37: #{rnd_forward.1} parent=11 // pred_check
          %p425 = pneg %p239
        $region38: #{rnd_forward.1} parent=11 // pred_check_branch
          %427 = sbr.rel (%p425) target = $region40
        $region39: #{rnd_forward.1} parent=11 // pred_region
          %s429 = ssub.s32 64, 64
          %430 = vsyncadd [#allocation14], %s429
          %s432 = sshll.u32 [#allocation15], 4
          %s433 = int_to_ptr.vmem [resolvable:$true] %s432
          %435 = dma.hbm_to_vmem [thread:$0]  %s8, 64, %s433, [#allocation14]
        $region40: #{rnd_forward.1} parent=11 // pred_fallthru
          _
        // Predicated region
        $region41: #{rnd_forward.1} parent=11 // pred_check
          %p436 = pneg %p286
        $region42: #{rnd_forward.1} parent=11 // pred_check_branch
          %438 = sbr.rel (%p436) target = $region44
        $region43: #{rnd_forward.1} parent=11 // pred_region
          %s440 = ssub.s32 64, 64
          %441 = vsyncadd [#allocation17], %s440
          %s443 = sshll.u32 [#allocation18], 4
          %s444 = int_to_ptr.vmem [resolvable:$true] %s443
          %446 = dma.hbm_to_vmem [thread:$0]  %s10, 64, %s444, [#allocation17]
        $region44: #{rnd_forward.1} parent=11 // pred_fallthru
          _
      $region12: #{rnd_forward.1} parent=5 // pred_fallthru
        _
      %p447 = scmp.lt.s32.totalorder %s26, 7
      // Predicated region
      $region45: #{rnd_forward.1} parent=5 // pred_check
        %p448 = pneg %p447
      $region46: #{rnd_forward.1} parent=5 // pred_check_branch
        %450 = sbr.rel (%p448) target = $region48
      $region47: #{rnd_forward.1} parent=5 // pred_region
        // Predicated region
        $region49: #{rnd_forward.1} parent=47 // pred_check
          %p451 = pneg %p60
        $region50: #{rnd_forward.1} parent=47 // pred_check_branch
          %453 = sbr.rel (%p451) target = $region52
        $region51: #{rnd_forward.1} parent=47 // pred_region
          %p454 = scmp.lt.s32.totalorder %s33, 0
          %s455 = scalar_select %p454, %s33, 0
          %p456 = scmp.lt.s32.totalorder %s34, 6
          %s457 = scalar_select %p456, %s34, 6
          %s458 = smul.addr %s455, 7
          %s459 = sadd.s32 %s457, %s458
          %s460 = smul.addr %s459, 4
          %s461 = scalar_lea.vmem %s0, %s460
        $region52: #{rnd_forward.1} parent=47 // pred_fallthru
          _
        // Predicated region
        $region53: #{rnd_forward.1} parent=47 // pred_check
          %p462 = pneg %p128
        $region54: #{rnd_forward.1} parent=47 // pred_check_branch
          %464 = sbr.rel (%p462) target = $region56
        $region55: #{rnd_forward.1} parent=47 // pred_region
          %s465 = sand.u32 %s26, 1
          %s466 = scalar_lea.sflag [#allocation5], %s465
          %s467 = sand.u32 %s118, 1
          %s468 = smul.addr %s467, 512
          %s469 = scalar_lea.vmem [#allocation8], %s468
          %s471 = ssub.s32 8192, 8192
          %472 = vsyncadd %s466, %s471
          %s473 = smul.addr %s34, 128
          %s474 = smul.addr %s473, 64
          %s475 = scalar_lea.hbm %s3, %s474
          %s476 = sshll.u32 %s469, 4
          %s477 = int_to_ptr.vmem [resolvable:$true] %s476
          %482 = dma.hbm_to_vmem [thread:$0]  %s475, 8192, %s477, %s466, 256, 256, 16
        $region56: #{rnd_forward.1} parent=47 // pred_fallthru
          _
        // Predicated region
        $region57: #{rnd_forward.1} parent=47 // pred_check
          %p483 = pneg %p259
        $region58: #{rnd_forward.1} parent=47 // pred_check_branch
          %485 = sbr.rel (%p483) target = $region60
        $region59: #{rnd_forward.1} parent=47 // pred_region
          %s486 = sand.u32 %s26, 1
          %s487 = scalar_lea.sflag [#allocation17], %s486
          %s488 = sand.u32 %s249, 1
          %s489 = smul.addr %s488, 512
          %s490 = scalar_lea.vmem [#allocation16], %s489
          %s492 = ssub.s32 8192, 8192
          %493 = vsyncadd %s487, %s492
          %s494 = smul.addr %s34, 128
          %s495 = smul.addr %s494, 64
          %s496 = scalar_lea.hbm %s9, %s495
          %s497 = sshll.u32 %s490, 4
          %s498 = int_to_ptr.vmem [resolvable:$true] %s497
          %503 = dma.hbm_to_vmem [thread:$0]  %s496, 8192, %s498, %s487, 256, 256, 16
        $region60: #{rnd_forward.1} parent=47 // pred_fallthru
          _
      $region48: #{rnd_forward.1} parent=5 // pred_fallthru
        _
      %p504 = scmp.le.s32.totalorder 1, %s26
      %p505 = scmp.lt.s32.totalorder %s26, 8
      %p506 = pnand %p504, %p505
      %p507 = pneg %p506
      // Predicated region
      $region61: #{rnd_forward.1} parent=5 // pred_check
        _
      $region62: #{rnd_forward.1} parent=5 // pred_check_branch
        %509 = sbr.rel (%p506) target = $region64
      $region63: #{rnd_forward.1} parent=5 // pred_region
        %s510 = ssub.s32 %s26, 1
        // Predicated region
        $region65: #{rnd_forward.1} parent=63 // pred_check
          %p511 = pneg %p87
        $region66: #{rnd_forward.1} parent=63 // pred_check_branch
          %513 = sbr.rel (%p511) target = $region68
        $region67: #{rnd_forward.1} parent=63 // pred_region
          %514 = dma.done [#allocation5], 1280
        $region68: #{rnd_forward.1} parent=63 // pred_fallthru
          _
        // Predicated region
        $region69: #{rnd_forward.1} parent=63 // pred_check
          %p515 = pneg %p108
        $region70: #{rnd_forward.1} parent=63 // pred_check_branch
          %517 = sbr.rel (%p515) target = $region72
        $region71: #{rnd_forward.1} parent=63 // pred_region
          %518 = dma.done [#allocation7], 64
        $region72: #{rnd_forward.1} parent=63 // pred_fallthru
          _
        %s519 = sand.u32 %s31, 1
        %s520 = scalar_lea.sflag [#allocation5], %s519
        %s521 = sand.u32 %s121, 1
        %s522 = smul.addr %s521, 512
        %s523 = scalar_lea.vmem [#allocation8], %s522
        // Predicated region
        $region73: #{rnd_forward.1} parent=63 // pred_check
          %p524 = pneg %p134
        $region74: #{rnd_forward.1} parent=63 // pred_check_branch
          %526 = sbr.rel (%p524) target = $region76
        $region75: #{rnd_forward.1} parent=63 // pred_region
          %527 = dma.done %s520, 8192
        $region76: #{rnd_forward.1} parent=63 // pred_fallthru
          _
        // Predicated region
        $region77: #{rnd_forward.1} parent=63 // pred_check
          %p528 = pneg %p155
        $region78: #{rnd_forward.1} parent=63 // pred_check_branch
          %530 = sbr.rel (%p528) target = $region80
        $region79: #{rnd_forward.1} parent=63 // pred_region
          %531 = dma.done [#allocation7], 64
        $region80: #{rnd_forward.1} parent=63 // pred_fallthru
          _
        // Predicated region
        $region81: #{rnd_forward.1} parent=63 // pred_check
          %p532 = pneg %p176
        $region82: #{rnd_forward.1} parent=63 // pred_check_branch
          %534 = sbr.rel (%p532) target = $region84
        $region83: #{rnd_forward.1} parent=63 // pred_region
          %535 = dma.done [#allocation11], 16384
        $region84: #{rnd_forward.1} parent=63 // pred_fallthru
          _
        // Predicated region
        $region85: #{rnd_forward.1} parent=63 // pred_check
          %p536 = pneg %p197
        $region86: #{rnd_forward.1} parent=63 // pred_check_branch
          %538 = sbr.rel (%p536) target = $region88
        $region87: #{rnd_forward.1} parent=63 // pred_region
          %539 = dma.done [#allocation11], 64
        $region88: #{rnd_forward.1} parent=63 // pred_fallthru
          _
        // Predicated region
        $region89: #{rnd_forward.1} parent=63 // pred_check
          %p540 = pneg %p218
        $region90: #{rnd_forward.1} parent=63 // pred_check_branch
          %542 = sbr.rel (%p540) target = $region92
        $region91: #{rnd_forward.1} parent=63 // pred_region
          %543 = dma.done [#allocation14], 16384
        $region92: #{rnd_forward.1} parent=63 // pred_fallthru
          _
        // Predicated region
        $region93: #{rnd_forward.1} parent=63 // pred_check
          %p544 = pneg %p239
        $region94: #{rnd_forward.1} parent=63 // pred_check_branch
          %546 = sbr.rel (%p544) target = $region96
        $region95: #{rnd_forward.1} parent=63 // pred_region
          %547 = dma.done [#allocation14], 64
        $region96: #{rnd_forward.1} parent=63 // pred_fallthru
          _
        %s548 = sand.u32 %s31, 1
        %s549 = scalar_lea.sflag [#allocation17], %s548
        %s550 = sand.u32 %s252, 1
        %s551 = smul.addr %s550, 512
        %s552 = scalar_lea.vmem [#allocation16], %s551
        // Predicated region
        $region97: #{rnd_forward.1} parent=63 // pred_check
          %p553 = pneg %p265
        $region98: #{rnd_forward.1} parent=63 // pred_check_branch
          %555 = sbr.rel (%p553) target = $region100
        $region99: #{rnd_forward.1} parent=63 // pred_region
          %556 = dma.done %s549, 8192
        $region100: #{rnd_forward.1} parent=63 // pred_fallthru
          _
        // Predicated region
        $region101: #{rnd_forward.1} parent=63 // pred_check
          %p557 = pneg %p286
        $region102: #{rnd_forward.1} parent=63 // pred_check_branch
          %559 = sbr.rel (%p557) target = $region104
        $region103: #{rnd_forward.1} parent=63 // pred_region
          %560 = dma.done [#allocation17], 64
        $region104: #{rnd_forward.1} parent=63 // pred_fallthru
          _
        %p561 = scmp.lt.s32.totalorder %s35, 0
        %s562 = scalar_select %p561, %s35, 0
        %p563 = scmp.lt.s32.totalorder %s36, 6
        %s564 = scalar_select %p563, %s36, 6
        %s565 = smul.addr %s562, 7
        %s566 = sadd.s32 %s564, %s565
        %s567 = smul.addr %s566, 4
        %s568 = scalar_lea.vmem %s0, %s567
        %p569 = pneg %p66
        %p570 = pneg %p63
        %p571 = pneg %p87
        %p572 = pneg %p84
        %p573 = pneg %p108
        %p574 = pneg %p105
        %s575 = sand.u32 %s31, 1
        %s576 = scalar_lea.sflag [#allocation5], %s575
        %s577 = sand.u32 %s121, 1
        %s578 = smul.addr %s577, 512
        %s579 = scalar_lea.vmem [#allocation8], %s578
        %p580 = pneg %p134
        %p581 = pneg %p131
        %p582 = pneg %p155
        %p583 = pneg %p152
        %p584 = pneg %p176
        %p585 = pneg %p173
        %p586 = pneg %p197
        %p587 = pneg %p194
        %p588 = pneg %p218
        %p589 = pneg %p215
        %p590 = pneg %p239
        %p591 = pneg %p236
        %s592 = sand.u32 %s31, 1
        %s593 = scalar_lea.sflag [#allocation17], %s592
        %s594 = sand.u32 %s252, 1
        %s595 = smul.addr %s594, 512
        %s596 = scalar_lea.vmem [#allocation16], %s595
        %p597 = pneg %p265
        %p598 = pneg %p262
        %p599 = pneg %p286
        %p600 = pneg %p283
        %p601 = pneg %p312
        %p602 = pneg %p309
        %p603 = scmp.lt.s32.totalorder %s35, 0
        %s604 = scalar_select %p603, %s35, 0
        %s605 = smul.addr %s604, 4
        %s606 = smul.addr %s605, 8
        %s607 = scalar_lea.vmem %s11, %s606
        %p608 = pneg %p338
        %p609 = pneg %p335
        %p610 = scmp.lt.s32.totalorder %s35, 0
        %s611 = scalar_select %p610, %s35, 0
        %s612 = smul.addr %s611, 4
        %s613 = smul.addr %s612, 8
        %s614 = scalar_lea.vmem %s12, %s613
        %p615 = scmp.lt.s32.totalorder %s35, 0
        %s616 = scalar_select %p615, %s35, 0
        %p617 = scmp.lt.s32.totalorder %s36, 6
        %s618 = scalar_select %p617, %s36, 6
        %s619 = smul.addr %s616, 7
        %s620 = sadd.s32 %s618, %s619
        %s621 = smul.addr %s620, 4
        %s622 = scalar_lea.vmem %s0, %s621
        %p623 = scmp.lt.s32.totalorder %s35, 0
        %s624 = scalar_select %p623, %s35, 0
        %s625 = smul.addr %s624, 4
        %s626 = smul.addr %s625, 8
        %s627 = scalar_lea.vmem %s11, %s626
        %p628 = scmp.lt.s32.totalorder %s35, 0
        %s629 = scalar_select %p628, %s35, 0
        %s630 = smul.addr %s629, 4
        %s631 = smul.addr %s630, 8
        %s632 = scalar_lea.vmem %s12, %s631
        %p634 = scmp.eq.s32.totalorder %s36, 0
        // Predicated region
        $region105: #{rnd_forward.1} parent=63 // pred_check
          %p635 = pneg %p634
        $region106: #{rnd_forward.1} parent=63 // pred_check_branch
          %637 = sbr.rel (%p635) target = $region108
        $region107: #{rnd_forward.1} parent=63 // pred_region
          %638 = vst [vmem:[#allocation2] sm:$0xff] 0.0
          %639 = vst [vmem:[#allocation2 + $0x8] sm:$0xff] 0.0
          %640 = vst [vmem:[#allocation2 + $0x10] sm:$0xff] 0.0
          %641 = vst [vmem:[#allocation2 + $0x18] sm:$0xff] 0.0
          %642 = vst [vmem:[#allocation3] sm:$0xff] 0.0
          %643 = vst [vmem:[#allocation3 + $0x8] sm:$0xff] 0.0
          %644 = vst [vmem:[#allocation3 + $0x10] sm:$0xff] 0.0
          %645 = vst [vmem:[#allocation3 + $0x18] sm:$0xff] 0.0
        $region108: #{rnd_forward.1} parent=63 // pred_fallthru
          _
        %v646 = vld [vmem:[%s622] sm:$0xf]
        %v647 = vld [vmem:[#allocation4] sm:$0xff]
        %v648 = vld [vmem:[#allocation4 + $0x8] sm:$0xff]
        %v649 = vld [vmem:[#allocation4 + $0x10] sm:$0xff]
        %v650 = vld [vmem:[#allocation4 + $0x18] sm:$0xff]
        %v651 = vld [vmem:[#allocation4 + $0x20] sm:$0xff]
        %v652 = vld [vmem:[#allocation4 + $0x28] sm:$0xff]
        %v653 = vld [vmem:[#allocation4 + $0x30] sm:$0xff]
        %v654 = vld [vmem:[#allocation4 + $0x38] sm:$0xff]
        %v655 = vld [vmem:[#allocation4 + $0x40] sm:$0x33]
        %v656 = vld [vmem:[#allocation4 + $0x48] sm:$0x33]
        %v657 = vld [vmem:[#allocation6] sm:$0xf]
        %v659 = vlaneseq
        %v660 = vshrl.u32 %v659, 7
        %v661 = vsub.s32 0, %v660
        %v662 = vrot.slane %v657, %v661
        %v663 = vlaneseq
        %v664 = vshrl.u32 %v663, 7
        %v665 = vsub.s32 1, %v664
        %v666 = vrot.slane %v657, %v665
        %v667 = vlaneseq
        %v668 = vshrl.u32 %v667, 7
        %v669 = vsub.s32 2, %v668
        %v670 = vrot.slane %v657, %v669
        %v671 = vlaneseq
        %v672 = vshrl.u32 %v671, 7
        %v673 = vsub.s32 3, %v672
        %v674 = vrot.slane %v657, %v673
        %v689 = vunpack.c.l.b16 %v647
        %v690 = vunpack.c.h.b16 %v647
        %v691 = vunpack.c.l.b16 %v648
        %v692 = vunpack.c.h.b16 %v648
        %v693 = vunpack.c.l.b16 %v649
        %v694 = vunpack.c.h.b16 %v649
        %v695 = vunpack.c.l.b16 %v650
        %v696 = vunpack.c.h.b16 %v650
        %v697 = vunpack.c.l.b16 %v651
        %v698 = vunpack.c.h.b16 %v651
        %v699 = vunpack.c.l.b16 %v652
        %v700 = vunpack.c.h.b16 %v652
        %v701 = vunpack.c.l.b16 %v653
        %v702 = vunpack.c.h.b16 %v653
        %v703 = vunpack.c.l.b16 %v654
        %v704 = vunpack.c.h.b16 %v654
        %v705 = vunpack.c.l.b16 %v655
        %v706 = vunpack.c.h.b16 %v655
        %v707 = vunpack.c.l.b16 %v656
        %v708 = vunpack.c.h.b16 %v656
        %v709 = vpack.c.b16 %v693, %v689
        %v710 = vpack.c.b16 %v694, %v690
        %v711 = vpack.c.b16 %v695, %v691
        %v712 = vpack.c.b16 %v696, %v692
        %v713 = vpack.c.b16 %v701, %v697
        %v714 = vpack.c.b16 %v702, %v698
        %v715 = vpack.c.b16 %v703, %v699
        %v716 = vpack.c.b16 %v704, %v700
        %v717 = vpack.c.b16 %v705, %v705
        %v718 = vpack.c.b16 %v706, %v706
        %v719 = vpack.c.b16 %v707, %v707
        %v720 = vpack.c.b16 %v708, %v708
        %vm729 = vcmask 293888
        %v731 = vsel %vm729, %v646, 0
        %vm733 = vcmask 1041408
        %v735 = vsel %vm733, %v717, 0
        %v738 = vsel %vm733, %v718, 0
        %v741 = vsel %vm733, %v719, 0
        %v744 = vsel %vm733, %v720, 0
        %746 = vmatprep.subr.bf16.mxu0 0
        %747 = vmatpush1.bf16.msra.mxu0 0
        %748 = vmatprep.subr.bf16.mxu0 0
        %749 = vmatpush1.bf16.msra.mxu0 0
        %750 = vmatprep.subr.bf16.mxu0 0
        %751 = vmatpush1.bf16.msra.mxu0 0
        %752 = vmatprep.subr.bf16.mxu0 0
        %753 = vmatpush1.bf16.msra.mxu0 0
        %754 = vmatprep.subr.bf16.mxu0 0
        %755 = vmatpush1.bf16.msra.mxu0 0
        %756 = vmatprep.subr.bf16.mxu0 %v738
        %757 = vmatpush1.bf16.msra.mxu0 %v735
        %758 = vmatprep.subr.bf16.mxu0 %v714
        %759 = vmatpush1.bf16.msra.mxu0 %v713
        %760 = vmatprep.subr.bf16.mxu0 %v710
        %761 = vmatpush1.bf16.msra.mxu0 %v709
        %762 = vmatprep.subr.bf16.mxu0 0
        %763 = vmatpush2.bf16.msra.mxu0 0
        %764 = vmatprep.subr.bf16.mxu0 0
        %765 = vmatpush2.bf16.msra.mxu0 0
        %766 = vmatprep.subr.bf16.mxu0 0
        %767 = vmatpush2.bf16.msra.mxu0 0
        %768 = vmatprep.subr.bf16.mxu0 0
        %769 = vmatpush2.bf16.msra.mxu0 0
        %770 = vmatprep.subr.bf16.mxu0 0
        %771 = vmatpush2.bf16.msra.mxu0 0
        %772 = vmatprep.subr.bf16.mxu0 0
        %773 = vmatpush2.bf16.msra.mxu0 0
        %774 = vmatprep.subr.bf16.mxu0 0
        %775 = vmatpush2.bf16.msra.mxu0 0
        %776 = vmatprep.subr.bf16.mxu0 0
        %777 = vmatpush2.bf16.msra.mxu0 0
        %778 = vmatprep.mubr.bf16.mxu0 0
        %779 = vmatmul.mubr.bf16.gmra.mxu0 %v731
        %v780 = vpop.f32.mrf.mxu0
        %v781 = vadd.f32 %v662, %v780
        %v782 = vpop.f32.mrf.mxu0
        %v783 = vadd.f32 %v666, %v782
        %v784 = vpop.f32.mrf.mxu0
        %v785 = vpop.f32.mrf.mxu0
        %786 = vdwg.mxu0
        %787 = vmatprep.subr.bf16.mxu0 0
        %788 = vmatpush1.bf16.msra.mxu0 0
        %789 = vmatprep.subr.bf16.mxu0 0
        %790 = vmatpush1.bf16.msra.mxu0 0
        %791 = vmatprep.subr.bf16.mxu0 0
        %792 = vmatpush1.bf16.msra.mxu0 0
        %793 = vmatprep.subr.bf16.mxu0 0
        %794 = vmatpush1.bf16.msra.mxu0 0
        %795 = vmatprep.subr.bf16.mxu0 0
        %796 = vmatpush1.bf16.msra.mxu0 0
        %797 = vmatprep.subr.bf16.mxu0 %v744
        %798 = vmatpush1.bf16.msra.mxu0 %v741
        %799 = vmatprep.subr.bf16.mxu0 %v716
        %800 = vmatpush1.bf16.msra.mxu0 %v715
        %801 = vmatprep.subr.bf16.mxu0 %v712
        %802 = vmatpush1.bf16.msra.mxu0 %v711
        %803 = vmatprep.subr.bf16.mxu0 0
        %804 = vmatpush2.bf16.msra.mxu0 0
        %805 = vmatprep.subr.bf16.mxu0 0
        %806 = vmatpush2.bf16.msra.mxu0 0
        %807 = vmatprep.subr.bf16.mxu0 0
        %808 = vmatpush2.bf16.msra.mxu0 0
        %809 = vmatprep.subr.bf16.mxu0 0
        %810 = vmatpush2.bf16.msra.mxu0 0
        %811 = vmatprep.subr.bf16.mxu0 0
        %812 = vmatpush2.bf16.msra.mxu0 0
        %813 = vmatprep.subr.bf16.mxu0 0
        %814 = vmatpush2.bf16.msra.mxu0 0
        %815 = vmatprep.subr.bf16.mxu0 0
        %816 = vmatpush2.bf16.msra.mxu0 0
        %817 = vmatprep.subr.bf16.mxu0 0
        %818 = vmatpush2.bf16.msra.mxu0 0
        %819 = vmatprep.mubr.bf16.mxu0 0
        %820 = vmatmul.mubr.bf16.gmra.mxu0 %v731
        %v821 = vpop.f32.mrf.mxu0
        %v822 = vadd.f32 %v670, %v821
        %v823 = vpop.f32.mrf.mxu0
        %v824 = vadd.f32 %v674, %v823
        %v825 = vpop.f32.mrf.mxu0
        %v826 = vpop.f32.mrf.mxu0
        %827 = vdwg.mxu0
        %v828 = vmul.f32 %v781, 0.01
        %v829 = vmul.f32 %v783, 0.01
        %v830 = vmul.f32 %v822, 0.01
        %v831 = vmul.f32 %v824, 0.01
        %v832 = vmax.f32 %v781, %v828
        %v833 = vmax.f32 %v783, %v829
        %v834 = vmax.f32 %v822, %v830
        %v835 = vmax.f32 %v824, %v831
        %v836 = vpack.c.bf16 %v832, %v832
        %v837 = vpack.c.bf16 %v833, %v833
        %v838 = vpack.c.bf16 %v834, %v834
        %v839 = vpack.c.bf16 %v835, %v835
        %v840 = vld [vmem:[#allocation2] sm:$0xff]
        %v841 = vld [vmem:[#allocation2 + $0x8] sm:$0xff]
        %v842 = vld [vmem:[#allocation2 + $0x10] sm:$0xff]
        %v843 = vld [vmem:[#allocation2 + $0x18] sm:$0xff]
        %v844 = vld [vmem:[%s523] sm:$0xff]
        %v845 = vld [vmem:[%s523 + $0x8] sm:$0xff]
        %v846 = vld [vmem:[%s523 + $0x10] sm:$0xff]
        %v847 = vld [vmem:[%s523 + $0x18] sm:$0xff]
        %v848 = vld [vmem:[%s523 + $0x20] sm:$0xff]
        %v849 = vld [vmem:[%s523 + $0x28] sm:$0xff]
        %v850 = vld [vmem:[%s523 + $0x30] sm:$0xff]
        %v851 = vld [vmem:[%s523 + $0x38] sm:$0xff]
        %v852 = vld [vmem:[%s523 + $0x40] sm:$0xff]
        %v853 = vld [vmem:[%s523 + $0x48] sm:$0xff]
        %v854 = vld [vmem:[%s523 + $0x50] sm:$0xff]
        %v855 = vld [vmem:[%s523 + $0x58] sm:$0xff]
        %v856 = vld [vmem:[%s523 + $0x60] sm:$0xff]
        %v857 = vld [vmem:[%s523 + $0x68] sm:$0xff]
        %v858 = vld [vmem:[%s523 + $0x70] sm:$0xff]
        %v859 = vld [vmem:[%s523 + $0x78] sm:$0xff]
        %v860 = vld [vmem:[%s523 + $0x80] sm:$0xff]
        %v861 = vld [vmem:[%s523 + $0x88] sm:$0xff]
        %v862 = vld [vmem:[%s523 + $0x90] sm:$0xff]
        %v863 = vld [vmem:[%s523 + $0x98] sm:$0xff]
        %v864 = vld [vmem:[%s523 + $0xa0] sm:$0xff]
        %v865 = vld [vmem:[%s523 + $0xa8] sm:$0xff]
        %v866 = vld [vmem:[%s523 + $0xb0] sm:$0xff]
        %v867 = vld [vmem:[%s523 + $0xb8] sm:$0xff]
        %v868 = vld [vmem:[%s523 + $0xc0] sm:$0xff]
        %v869 = vld [vmem:[%s523 + $0xc8] sm:$0xff]
        %v870 = vld [vmem:[%s523 + $0xd0] sm:$0xff]
        %v871 = vld [vmem:[%s523 + $0xd8] sm:$0xff]
        %v872 = vld [vmem:[%s523 + $0xe0] sm:$0xff]
        %v873 = vld [vmem:[%s523 + $0xe8] sm:$0xff]
        %v874 = vld [vmem:[%s523 + $0xf0] sm:$0xff]
        %v875 = vld [vmem:[%s523 + $0xf8] sm:$0xff]
        %v876 = vld [vmem:[%s523 + $0x100] sm:$0xff]
        %v877 = vld [vmem:[%s523 + $0x108] sm:$0xff]
        %v878 = vld [vmem:[%s523 + $0x110] sm:$0xff]
        %v879 = vld [vmem:[%s523 + $0x118] sm:$0xff]
        %v880 = vld [vmem:[%s523 + $0x120] sm:$0xff]
        %v881 = vld [vmem:[%s523 + $0x128] sm:$0xff]
        %v882 = vld [vmem:[%s523 + $0x130] sm:$0xff]
        %v883 = vld [vmem:[%s523 + $0x138] sm:$0xff]
        %v884 = vld [vmem:[%s523 + $0x140] sm:$0xff]
        %v885 = vld [vmem:[%s523 + $0x148] sm:$0xff]
        %v886 = vld [vmem:[%s523 + $0x150] sm:$0xff]
        %v887 = vld [vmem:[%s523 + $0x158] sm:$0xff]
        %v888 = vld [vmem:[%s523 + $0x160] sm:$0xff]
        %v889 = vld [vmem:[%s523 + $0x168] sm:$0xff]
        %v890 = vld [vmem:[%s523 + $0x170] sm:$0xff]
        %v891 = vld [vmem:[%s523 + $0x178] sm:$0xff]
        %v892 = vld [vmem:[%s523 + $0x180] sm:$0xff]
        %v893 = vld [vmem:[%s523 + $0x188] sm:$0xff]
        %v894 = vld [vmem:[%s523 + $0x190] sm:$0xff]
        %v895 = vld [vmem:[%s523 + $0x198] sm:$0xff]
        %v896 = vld [vmem:[%s523 + $0x1a0] sm:$0xff]
        %v897 = vld [vmem:[%s523 + $0x1a8] sm:$0xff]
        %v898 = vld [vmem:[%s523 + $0x1b0] sm:$0xff]
        %v899 = vld [vmem:[%s523 + $0x1b8] sm:$0xff]
        %v900 = vld [vmem:[%s523 + $0x1c0] sm:$0xff]
        %v901 = vld [vmem:[%s523 + $0x1c8] sm:$0xff]
        %v902 = vld [vmem:[%s523 + $0x1d0] sm:$0xff]
        %v903 = vld [vmem:[%s523 + $0x1d8] sm:$0xff]
        %v904 = vld [vmem:[%s523 + $0x1e0] sm:$0xff]
        %v905 = vld [vmem:[%s523 + $0x1e8] sm:$0xff]
        %v906 = vld [vmem:[%s523 + $0x1f0] sm:$0xff]
        %v907 = vld [vmem:[%s523 + $0x1f8] sm:$0xff]
        %v972 = vunpack.c.l.b16 %v844
        %v973 = vunpack.c.h.b16 %v844
        %v974 = vunpack.c.l.b16 %v845
        %v975 = vunpack.c.h.b16 %v845
        %v976 = vunpack.c.l.b16 %v846
        %v977 = vunpack.c.h.b16 %v846
        %v978 = vunpack.c.l.b16 %v847
        %v979 = vunpack.c.h.b16 %v847
        %v980 = vunpack.c.l.b16 %v848
        %v981 = vunpack.c.h.b16 %v848
        %v982 = vunpack.c.l.b16 %v849
        %v983 = vunpack.c.h.b16 %v849
        %v984 = vunpack.c.l.b16 %v850
        %v985 = vunpack.c.h.b16 %v850
        %v986 = vunpack.c.l.b16 %v851
        %v987 = vunpack.c.h.b16 %v851
        %v988 = vunpack.c.l.b16 %v852
        %v989 = vunpack.c.h.b16 %v852
        %v990 = vunpack.c.l.b16 %v853
        %v991 = vunpack.c.h.b16 %v853
        %v992 = vunpack.c.l.b16 %v854
        %v993 = vunpack.c.h.b16 %v854
        %v994 = vunpack.c.l.b16 %v855
        %v995 = vunpack.c.h.b16 %v855
        %v996 = vunpack.c.l.b16 %v856
        %v997 = vunpack.c.h.b16 %v856
        %v998 = vunpack.c.l.b16 %v857
        %v999 = vunpack.c.h.b16 %v857
        %v1000 = vunpack.c.l.b16 %v858
        %v1001 = vunpack.c.h.b16 %v858
        %v1002 = vunpack.c.l.b16 %v859
        %v1003 = vunpack.c.h.b16 %v859
        %v1004 = vunpack.c.l.b16 %v860
        %v1005 = vunpack.c.h.b16 %v860
        %v1006 = vunpack.c.l.b16 %v861
        %v1007 = vunpack.c.h.b16 %v861
        %v1008 = vunpack.c.l.b16 %v862
        %v1009 = vunpack.c.h.b16 %v862
        %v1010 = vunpack.c.l.b16 %v863
        %v1011 = vunpack.c.h.b16 %v863
        %v1012 = vunpack.c.l.b16 %v864
        %v1013 = vunpack.c.h.b16 %v864
        %v1014 = vunpack.c.l.b16 %v865
        %v1015 = vunpack.c.h.b16 %v865
        %v1016 = vunpack.c.l.b16 %v866
        %v1017 = vunpack.c.h.b16 %v866
        %v1018 = vunpack.c.l.b16 %v867
        %v1019 = vunpack.c.h.b16 %v867
        %v1020 = vunpack.c.l.b16 %v868
        %v1021 = vunpack.c.h.b16 %v868
        %v1022 = vunpack.c.l.b16 %v869
        %v1023 = vunpack.c.h.b16 %v869
        %v1024 = vunpack.c.l.b16 %v870
        %v1025 = vunpack.c.h.b16 %v870
        %v1026 = vunpack.c.l.b16 %v871
        %v1027 = vunpack.c.h.b16 %v871
        %v1028 = vunpack.c.l.b16 %v872
        %v1029 = vunpack.c.h.b16 %v872
        %v1030 = vunpack.c.l.b16 %v873
        %v1031 = vunpack.c.h.b16 %v873
        %v1032 = vunpack.c.l.b16 %v874
        %v1033 = vunpack.c.h.b16 %v874
        %v1034 = vunpack.c.l.b16 %v875
        %v1035 = vunpack.c.h.b16 %v875
        %v1036 = vunpack.c.l.b16 %v876
        %v1037 = vunpack.c.h.b16 %v876
        %v1038 = vunpack.c.l.b16 %v877
        %v1039 = vunpack.c.h.b16 %v877
        %v1040 = vunpack.c.l.b16 %v878
        %v1041 = vunpack.c.h.b16 %v878
        %v1042 = vunpack.c.l.b16 %v879
        %v1043 = vunpack.c.h.b16 %v879
        %v1044 = vunpack.c.l.b16 %v880
        %v1045 = vunpack.c.h.b16 %v880
        %v1046 = vunpack.c.l.b16 %v881
        %v1047 = vunpack.c.h.b16 %v881
        %v1048 = vunpack.c.l.b16 %v882
        %v1049 = vunpack.c.h.b16 %v882
        %v1050 = vunpack.c.l.b16 %v883
        %v1051 = vunpack.c.h.b16 %v883
        %v1052 = vunpack.c.l.b16 %v884
        %v1053 = vunpack.c.h.b16 %v884
        %v1054 = vunpack.c.l.b16 %v885
        %v1055 = vunpack.c.h.b16 %v885
        %v1056 = vunpack.c.l.b16 %v886
        %v1057 = vunpack.c.h.b16 %v886
        %v1058 = vunpack.c.l.b16 %v887
        %v1059 = vunpack.c.h.b16 %v887
        %v1060 = vunpack.c.l.b16 %v888
        %v1061 = vunpack.c.h.b16 %v888
        %v1062 = vunpack.c.l.b16 %v889
        %v1063 = vunpack.c.h.b16 %v889
        %v1064 = vunpack.c.l.b16 %v890
        %v1065 = vunpack.c.h.b16 %v890
        %v1066 = vunpack.c.l.b16 %v891
        %v1067 = vunpack.c.h.b16 %v891
        %v1068 = vunpack.c.l.b16 %v892
        %v1069 = vunpack.c.h.b16 %v892
        %v1070 = vunpack.c.l.b16 %v893
        %v1071 = vunpack.c.h.b16 %v893
        %v1072 = vunpack.c.l.b16 %v894
        %v1073 = vunpack.c.h.b16 %v894
        %v1074 = vunpack.c.l.b16 %v895
        %v1075 = vunpack.c.h.b16 %v895
        %v1076 = vunpack.c.l.b16 %v896
        %v1077 = vunpack.c.h.b16 %v896
        %v1078 = vunpack.c.l.b16 %v897
        %v1079 = vunpack.c.h.b16 %v897
        %v1080 = vunpack.c.l.b16 %v898
        %v1081 = vunpack.c.h.b16 %v898
        %v1082 = vunpack.c.l.b16 %v899
        %v1083 = vunpack.c.h.b16 %v899
        %v1084 = vunpack.c.l.b16 %v900
        %v1085 = vunpack.c.h.b16 %v900
        %v1086 = vunpack.c.l.b16 %v901
        %v1087 = vunpack.c.h.b16 %v901
        %v1088 = vunpack.c.l.b16 %v902
        %v1089 = vunpack.c.h.b16 %v902
        %v1090 = vunpack.c.l.b16 %v903
        %v1091 = vunpack.c.h.b16 %v903
        %v1092 = vunpack.c.l.b16 %v904
        %v1093 = vunpack.c.h.b16 %v904
        %v1094 = vunpack.c.l.b16 %v905
        %v1095 = vunpack.c.h.b16 %v905
        %v1096 = vunpack.c.l.b16 %v906
        %v1097 = vunpack.c.h.b16 %v906
        %v1098 = vunpack.c.l.b16 %v907
        %v1099 = vunpack.c.h.b16 %v907
        %v1100 = vpack.c.b16 %v976, %v972
        %v1101 = vpack.c.b16 %v977, %v973
        %v1102 = vpack.c.b16 %v978, %v974
        %v1103 = vpack.c.b16 %v979, %v975
        %v1104 = vpack.c.b16 %v984, %v980
        %v1105 = vpack.c.b16 %v985, %v981
        %v1106 = vpack.c.b16 %v986, %v982
        %v1107 = vpack.c.b16 %v987, %v983
        %v1108 = vpack.c.b16 %v992, %v988
        %v1109 = vpack.c.b16 %v993, %v989
        %v1110 = vpack.c.b16 %v994, %v990
        %v1111 = vpack.c.b16 %v995, %v991
        %v1112 = vpack.c.b16 %v1000, %v996
        %v1113 = vpack.c.b16 %v1001, %v997
        %v1114 = vpack.c.b16 %v1002, %v998
        %v1115 = vpack.c.b16 %v1003, %v999
        %v1116 = vpack.c.b16 %v1008, %v1004
        %v1117 = vpack.c.b16 %v1009, %v1005
        %v1118 = vpack.c.b16 %v1010, %v1006
        %v1119 = vpack.c.b16 %v1011, %v1007
        %v1120 = vpack.c.b16 %v1016, %v1012
        %v1121 = vpack.c.b16 %v1017, %v1013
        %v1122 = vpack.c.b16 %v1018, %v1014
        %v1123 = vpack.c.b16 %v1019, %v1015
        %v1124 = vpack.c.b16 %v1024, %v1020
        %v1125 = vpack.c.b16 %v1025, %v1021
        %v1126 = vpack.c.b16 %v1026, %v1022
        %v1127 = vpack.c.b16 %v1027, %v1023
        %v1128 = vpack.c.b16 %v1032, %v1028
        %v1129 = vpack.c.b16 %v1033, %v1029
        %v1130 = vpack.c.b16 %v1034, %v1030
        %v1131 = vpack.c.b16 %v1035, %v1031
        %v1132 = vpack.c.b16 %v1040, %v1036
        %v1133 = vpack.c.b16 %v1041, %v1037
        %v1134 = vpack.c.b16 %v1042, %v1038
        %v1135 = vpack.c.b16 %v1043, %v1039
        %v1136 = vpack.c.b16 %v1048, %v1044
        %v1137 = vpack.c.b16 %v1049, %v1045
        %v1138 = vpack.c.b16 %v1050, %v1046
        %v1139 = vpack.c.b16 %v1051, %v1047
        %v1140 = vpack.c.b16 %v1056, %v1052
        %v1141 = vpack.c.b16 %v1057, %v1053
        %v1142 = vpack.c.b16 %v1058, %v1054
        %v1143 = vpack.c.b16 %v1059, %v1055
        %v1144 = vpack.c.b16 %v1064, %v1060
        %v1145 = vpack.c.b16 %v1065, %v1061
        %v1146 = vpack.c.b16 %v1066, %v1062
        %v1147 = vpack.c.b16 %v1067, %v1063
        %v1148 = vpack.c.b16 %v1072, %v1068
        %v1149 = vpack.c.b16 %v1073, %v1069
        %v1150 = vpack.c.b16 %v1074, %v1070
        %v1151 = vpack.c.b16 %v1075, %v1071
        %v1152 = vpack.c.b16 %v1080, %v1076
        %v1153 = vpack.c.b16 %v1081, %v1077
        %v1154 = vpack.c.b16 %v1082, %v1078
        %v1155 = vpack.c.b16 %v1083, %v1079
        %v1156 = vpack.c.b16 %v1088, %v1084
        %v1157 = vpack.c.b16 %v1089, %v1085
        %v1158 = vpack.c.b16 %v1090, %v1086
        %v1159 = vpack.c.b16 %v1091, %v1087
        %v1160 = vpack.c.b16 %v1096, %v1092
        %v1161 = vpack.c.b16 %v1097, %v1093
        %v1162 = vpack.c.b16 %v1098, %v1094
        %v1163 = vpack.c.b16 %v1099, %v1095
        %1228 = vmatprep.subr.bf16.mxu0 %v1129
        %1229 = vmatpush1.bf16.msra.mxu0 %v1128
        %1230 = vmatprep.subr.bf16.mxu0 %v1125
        %1231 = vmatpush1.bf16.msra.mxu0 %v1124
        %1232 = vmatprep.subr.bf16.mxu0 %v1121
        %1233 = vmatpush1.bf16.msra.mxu0 %v1120
        %1234 = vmatprep.subr.bf16.mxu0 %v1117
        %1235 = vmatpush1.bf16.msra.mxu0 %v1116
        %1236 = vmatprep.subr.bf16.mxu0 %v1113
        %1237 = vmatpush1.bf16.msra.mxu0 %v1112
        %1238 = vmatprep.subr.bf16.mxu0 %v1109
        %1239 = vmatpush1.bf16.msra.mxu0 %v1108
        %1240 = vmatprep.subr.bf16.mxu0 %v1105
        %1241 = vmatpush1.bf16.msra.mxu0 %v1104
        %1242 = vmatprep.subr.bf16.mxu0 %v1101
        %1243 = vmatpush1.bf16.msra.mxu0 %v1100
        %1244 = vmatprep.subr.bf16.mxu0 %v1161
        %1245 = vmatpush2.bf16.msra.mxu0 %v1160
        %1246 = vmatprep.subr.bf16.mxu0 %v1157
        %1247 = vmatpush2.bf16.msra.mxu0 %v1156
        %1248 = vmatprep.subr.bf16.mxu0 %v1153
        %1249 = vmatpush2.bf16.msra.mxu0 %v1152
        %1250 = vmatprep.subr.bf16.mxu0 %v1149
        %1251 = vmatpush2.bf16.msra.mxu0 %v1148
        %1252 = vmatprep.subr.bf16.mxu0 %v1145
        %1253 = vmatpush2.bf16.msra.mxu0 %v1144
        %1254 = vmatprep.subr.bf16.mxu0 %v1141
        %1255 = vmatpush2.bf16.msra.mxu0 %v1140
        %1256 = vmatprep.subr.bf16.mxu0 %v1137
        %1257 = vmatpush2.bf16.msra.mxu0 %v1136
        %1258 = vmatprep.subr.bf16.mxu0 %v1133
        %1259 = vmatpush2.bf16.msra.mxu0 %v1132
        %1260 = vmatprep.mubr.bf16.mxu0 %v837
        %1261 = vmatmul.mubr.bf16.gmra.mxu0 %v836
        %v1262 = vpop.f32.mrf.mxu0
        %v1263 = vadd.f32 0.0, %v1262
        %v1264 = vpop.f32.mrf.mxu0
        %v1265 = vadd.f32 0.0, %v1264
        %v1266 = vpop.f32.mrf.mxu0
        %v1267 = vpop.f32.mrf.mxu0
        %1268 = vdwg.mxu0
        %1269 = vmatprep.subr.bf16.mxu0 %v1131
        %1270 = vmatpush1.bf16.msra.mxu0 %v1130
        %1271 = vmatprep.subr.bf16.mxu0 %v1127
        %1272 = vmatpush1.bf16.msra.mxu0 %v1126
        %1273 = vmatprep.subr.bf16.mxu0 %v1123
        %1274 = vmatpush1.bf16.msra.mxu0 %v1122
        %1275 = vmatprep.subr.bf16.mxu0 %v1119
        %1276 = vmatpush1.bf16.msra.mxu0 %v1118
        %1277 = vmatprep.subr.bf16.mxu0 %v1115
        %1278 = vmatpush1.bf16.msra.mxu0 %v1114
        %1279 = vmatprep.subr.bf16.mxu0 %v1111
        %1280 = vmatpush1.bf16.msra.mxu0 %v1110
        %1281 = vmatprep.subr.bf16.mxu0 %v1107
        %1282 = vmatpush1.bf16.msra.mxu0 %v1106
        %1283 = vmatprep.subr.bf16.mxu0 %v1103
        %1284 = vmatpush1.bf16.msra.mxu0 %v1102
        %1285 = vmatprep.subr.bf16.mxu0 %v1163
        %1286 = vmatpush2.bf16.msra.mxu0 %v1162
        %1287 = vmatprep.subr.bf16.mxu0 %v1159
        %1288 = vmatpush2.bf16.msra.mxu0 %v1158
        %1289 = vmatprep.subr.bf16.mxu0 %v1155
        %1290 = vmatpush2.bf16.msra.mxu0 %v1154
        %1291 = vmatprep.subr.bf16.mxu0 %v1151
        %1292 = vmatpush2.bf16.msra.mxu0 %v1150
        %1293 = vmatprep.subr.bf16.mxu0 %v1147
        %1294 = vmatpush2.bf16.msra.mxu0 %v1146
        %1295 = vmatprep.subr.bf16.mxu0 %v1143
        %1296 = vmatpush2.bf16.msra.mxu0 %v1142
        %1297 = vmatprep.subr.bf16.mxu0 %v1139
        %1298 = vmatpush2.bf16.msra.mxu0 %v1138
        %1299 = vmatprep.subr.bf16.mxu0 %v1135
        %1300 = vmatpush2.bf16.msra.mxu0 %v1134
        %1301 = vmatprep.mubr.bf16.mxu0 %v837
        %1302 = vmatmul.mubr.bf16.gmra.mxu0 %v836
        %v1303 = vpop.f32.mrf.mxu0
        %v1304 = vadd.f32 0.0, %v1303
        %v1305 = vpop.f32.mrf.mxu0
        %v1306 = vadd.f32 0.0, %v1305
        %v1307 = vpop.f32.mrf.mxu0
        %v1308 = vpop.f32.mrf.mxu0
        %1309 = vdwg.mxu0
        %v1310 = vadd.f32 %v840, %v1263
        %v1311 = vadd.f32 %v841, %v1265
        %v1312 = vadd.f32 %v842, %v1304
        %v1313 = vadd.f32 %v843, %v1306
        %1314 = vst [vmem:[#allocation2] sm:$0xff] %v1310
        %1315 = vst [vmem:[#allocation2 + $0x8] sm:$0xff] %v1311
        %1316 = vst [vmem:[#allocation2 + $0x10] sm:$0xff] %v1312
        %1317 = vst [vmem:[#allocation2 + $0x18] sm:$0xff] %v1313
        %v1318 = vld [vmem:[#allocation3] sm:$0xff]
        %v1319 = vld [vmem:[#allocation3 + $0x8] sm:$0xff]
        %v1320 = vld [vmem:[#allocation3 + $0x10] sm:$0xff]
        %v1321 = vld [vmem:[#allocation3 + $0x18] sm:$0xff]
        %v1322 = vld [vmem:[%s552] sm:$0xff]
        %v1323 = vld [vmem:[%s552 + $0x8] sm:$0xff]
        %v1324 = vld [vmem:[%s552 + $0x10] sm:$0xff]
        %v1325 = vld [vmem:[%s552 + $0x18] sm:$0xff]
        %v1326 = vld [vmem:[%s552 + $0x20] sm:$0xff]
        %v1327 = vld [vmem:[%s552 + $0x28] sm:$0xff]
        %v1328 = vld [vmem:[%s552 + $0x30] sm:$0xff]
        %v1329 = vld [vmem:[%s552 + $0x38] sm:$0xff]
        %v1330 = vld [vmem:[%s552 + $0x40] sm:$0xff]
        %v1331 = vld [vmem:[%s552 + $0x48] sm:$0xff]
        %v1332 = vld [vmem:[%s552 + $0x50] sm:$0xff]
        %v1333 = vld [vmem:[%s552 + $0x58] sm:$0xff]
        %v1334 = vld [vmem:[%s552 + $0x60] sm:$0xff]
        %v1335 = vld [vmem:[%s552 + $0x68] sm:$0xff]
        %v1336 = vld [vmem:[%s552 + $0x70] sm:$0xff]
        %v1337 = vld [vmem:[%s552 + $0x78] sm:$0xff]
        %v1338 = vld [vmem:[%s552 + $0x80] sm:$0xff]
        %v1339 = vld [vmem:[%s552 + $0x88] sm:$0xff]
        %v1340 = vld [vmem:[%s552 + $0x90] sm:$0xff]
        %v1341 = vld [vmem:[%s552 + $0x98] sm:$0xff]
        %v1342 = vld [vmem:[%s552 + $0xa0] sm:$0xff]
        %v1343 = vld [vmem:[%s552 + $0xa8] sm:$0xff]
        %v1344 = vld [vmem:[%s552 + $0xb0] sm:$0xff]
        %v1345 = vld [vmem:[%s552 + $0xb8] sm:$0xff]
        %v1346 = vld [vmem:[%s552 + $0xc0] sm:$0xff]
        %v1347 = vld [vmem:[%s552 + $0xc8] sm:$0xff]
        %v1348 = vld [vmem:[%s552 + $0xd0] sm:$0xff]
        %v1349 = vld [vmem:[%s552 + $0xd8] sm:$0xff]
        %v1350 = vld [vmem:[%s552 + $0xe0] sm:$0xff]
        %v1351 = vld [vmem:[%s552 + $0xe8] sm:$0xff]
        %v1352 = vld [vmem:[%s552 + $0xf0] sm:$0xff]
        %v1353 = vld [vmem:[%s552 + $0xf8] sm:$0xff]
        %v1354 = vld [vmem:[%s552 + $0x100] sm:$0xff]
        %v1355 = vld [vmem:[%s552 + $0x108] sm:$0xff]
        %v1356 = vld [vmem:[%s552 + $0x110] sm:$0xff]
        %v1357 = vld [vmem:[%s552 + $0x118] sm:$0xff]
        %v1358 = vld [vmem:[%s552 + $0x120] sm:$0xff]
        %v1359 = vld [vmem:[%s552 + $0x128] sm:$0xff]
        %v1360 = vld [vmem:[%s552 + $0x130] sm:$0xff]
        %v1361 = vld [vmem:[%s552 + $0x138] sm:$0xff]
        %v1362 = vld [vmem:[%s552 + $0x140] sm:$0xff]
        %v1363 = vld [vmem:[%s552 + $0x148] sm:$0xff]
        %v1364 = vld [vmem:[%s552 + $0x150] sm:$0xff]
        %v1365 = vld [vmem:[%s552 + $0x158] sm:$0xff]
        %v1366 = vld [vmem:[%s552 + $0x160] sm:$0xff]
        %v1367 = vld [vmem:[%s552 + $0x168] sm:$0xff]
        %v1368 = vld [vmem:[%s552 + $0x170] sm:$0xff]
        %v1369 = vld [vmem:[%s552 + $0x178] sm:$0xff]
        %v1370 = vld [vmem:[%s552 + $0x180] sm:$0xff]
        %v1371 = vld [vmem:[%s552 + $0x188] sm:$0xff]
        %v1372 = vld [vmem:[%s552 + $0x190] sm:$0xff]
        %v1373 = vld [vmem:[%s552 + $0x198] sm:$0xff]
        %v1374 = vld [vmem:[%s552 + $0x1a0] sm:$0xff]
        %v1375 = vld [vmem:[%s552 + $0x1a8] sm:$0xff]
        %v1376 = vld [vmem:[%s552 + $0x1b0] sm:$0xff]
        %v1377 = vld [vmem:[%s552 + $0x1b8] sm:$0xff]
        %v1378 = vld [vmem:[%s552 + $0x1c0] sm:$0xff]
        %v1379 = vld [vmem:[%s552 + $0x1c8] sm:$0xff]
        %v1380 = vld [vmem:[%s552 + $0x1d0] sm:$0xff]
        %v1381 = vld [vmem:[%s552 + $0x1d8] sm:$0xff]
        %v1382 = vld [vmem:[%s552 + $0x1e0] sm:$0xff]
        %v1383 = vld [vmem:[%s552 + $0x1e8] sm:$0xff]
        %v1384 = vld [vmem:[%s552 + $0x1f0] sm:$0xff]
        %v1385 = vld [vmem:[%s552 + $0x1f8] sm:$0xff]
        %v1450 = vunpack.c.l.b16 %v1322
        %v1451 = vunpack.c.h.b16 %v1322
        %v1452 = vunpack.c.l.b16 %v1323
        %v1453 = vunpack.c.h.b16 %v1323
        %v1454 = vunpack.c.l.b16 %v1324
        %v1455 = vunpack.c.h.b16 %v1324
        %v1456 = vunpack.c.l.b16 %v1325
        %v1457 = vunpack.c.h.b16 %v1325
        %v1458 = vunpack.c.l.b16 %v1326
        %v1459 = vunpack.c.h.b16 %v1326
        %v1460 = vunpack.c.l.b16 %v1327
        %v1461 = vunpack.c.h.b16 %v1327
        %v1462 = vunpack.c.l.b16 %v1328
        %v1463 = vunpack.c.h.b16 %v1328
        %v1464 = vunpack.c.l.b16 %v1329
        %v1465 = vunpack.c.h.b16 %v1329
        %v1466 = vunpack.c.l.b16 %v1330
        %v1467 = vunpack.c.h.b16 %v1330
        %v1468 = vunpack.c.l.b16 %v1331
        %v1469 = vunpack.c.h.b16 %v1331
        %v1470 = vunpack.c.l.b16 %v1332
        %v1471 = vunpack.c.h.b16 %v1332
        %v1472 = vunpack.c.l.b16 %v1333
        %v1473 = vunpack.c.h.b16 %v1333
        %v1474 = vunpack.c.l.b16 %v1334
        %v1475 = vunpack.c.h.b16 %v1334
        %v1476 = vunpack.c.l.b16 %v1335
        %v1477 = vunpack.c.h.b16 %v1335
        %v1478 = vunpack.c.l.b16 %v1336
        %v1479 = vunpack.c.h.b16 %v1336
        %v1480 = vunpack.c.l.b16 %v1337
        %v1481 = vunpack.c.h.b16 %v1337
        %v1482 = vunpack.c.l.b16 %v1338
        %v1483 = vunpack.c.h.b16 %v1338
        %v1484 = vunpack.c.l.b16 %v1339
        %v1485 = vunpack.c.h.b16 %v1339
        %v1486 = vunpack.c.l.b16 %v1340
        %v1487 = vunpack.c.h.b16 %v1340
        %v1488 = vunpack.c.l.b16 %v1341
        %v1489 = vunpack.c.h.b16 %v1341
        %v1490 = vunpack.c.l.b16 %v1342
        %v1491 = vunpack.c.h.b16 %v1342
        %v1492 = vunpack.c.l.b16 %v1343
        %v1493 = vunpack.c.h.b16 %v1343
        %v1494 = vunpack.c.l.b16 %v1344
        %v1495 = vunpack.c.h.b16 %v1344
        %v1496 = vunpack.c.l.b16 %v1345
        %v1497 = vunpack.c.h.b16 %v1345
        %v1498 = vunpack.c.l.b16 %v1346
        %v1499 = vunpack.c.h.b16 %v1346
        %v1500 = vunpack.c.l.b16 %v1347
        %v1501 = vunpack.c.h.b16 %v1347
        %v1502 = vunpack.c.l.b16 %v1348
        %v1503 = vunpack.c.h.b16 %v1348
        %v1504 = vunpack.c.l.b16 %v1349
        %v1505 = vunpack.c.h.b16 %v1349
        %v1506 = vunpack.c.l.b16 %v1350
        %v1507 = vunpack.c.h.b16 %v1350
        %v1508 = vunpack.c.l.b16 %v1351
        %v1509 = vunpack.c.h.b16 %v1351
        %v1510 = vunpack.c.l.b16 %v1352
        %v1511 = vunpack.c.h.b16 %v1352
        %v1512 = vunpack.c.l.b16 %v1353
        %v1513 = vunpack.c.h.b16 %v1353
        %v1514 = vunpack.c.l.b16 %v1354
        %v1515 = vunpack.c.h.b16 %v1354
        %v1516 = vunpack.c.l.b16 %v1355
        %v1517 = vunpack.c.h.b16 %v1355
        %v1518 = vunpack.c.l.b16 %v1356
        %v1519 = vunpack.c.h.b16 %v1356
        %v1520 = vunpack.c.l.b16 %v1357
        %v1521 = vunpack.c.h.b16 %v1357
        %v1522 = vunpack.c.l.b16 %v1358
        %v1523 = vunpack.c.h.b16 %v1358
        %v1524 = vunpack.c.l.b16 %v1359
        %v1525 = vunpack.c.h.b16 %v1359
        %v1526 = vunpack.c.l.b16 %v1360
        %v1527 = vunpack.c.h.b16 %v1360
        %v1528 = vunpack.c.l.b16 %v1361
        %v1529 = vunpack.c.h.b16 %v1361
        %v1530 = vunpack.c.l.b16 %v1362
        %v1531 = vunpack.c.h.b16 %v1362
        %v1532 = vunpack.c.l.b16 %v1363
        %v1533 = vunpack.c.h.b16 %v1363
        %v1534 = vunpack.c.l.b16 %v1364
        %v1535 = vunpack.c.h.b16 %v1364
        %v1536 = vunpack.c.l.b16 %v1365
        %v1537 = vunpack.c.h.b16 %v1365
        %v1538 = vunpack.c.l.b16 %v1366
        %v1539 = vunpack.c.h.b16 %v1366
        %v1540 = vunpack.c.l.b16 %v1367
        %v1541 = vunpack.c.h.b16 %v1367
        %v1542 = vunpack.c.l.b16 %v1368
        %v1543 = vunpack.c.h.b16 %v1368
        %v1544 = vunpack.c.l.b16 %v1369
        %v1545 = vunpack.c.h.b16 %v1369
        %v1546 = vunpack.c.l.b16 %v1370
        %v1547 = vunpack.c.h.b16 %v1370
        %v1548 = vunpack.c.l.b16 %v1371
        %v1549 = vunpack.c.h.b16 %v1371
        %v1550 = vunpack.c.l.b16 %v1372
        %v1551 = vunpack.c.h.b16 %v1372
        %v1552 = vunpack.c.l.b16 %v1373
        %v1553 = vunpack.c.h.b16 %v1373
        %v1554 = vunpack.c.l.b16 %v1374
        %v1555 = vunpack.c.h.b16 %v1374
        %v1556 = vunpack.c.l.b16 %v1375
        %v1557 = vunpack.c.h.b16 %v1375
        %v1558 = vunpack.c.l.b16 %v1376
        %v1559 = vunpack.c.h.b16 %v1376
        %v1560 = vunpack.c.l.b16 %v1377
        %v1561 = vunpack.c.h.b16 %v1377
        %v1562 = vunpack.c.l.b16 %v1378
        %v1563 = vunpack.c.h.b16 %v1378
        %v1564 = vunpack.c.l.b16 %v1379
        %v1565 = vunpack.c.h.b16 %v1379
        %v1566 = vunpack.c.l.b16 %v1380
        %v1567 = vunpack.c.h.b16 %v1380
        %v1568 = vunpack.c.l.b16 %v1381
        %v1569 = vunpack.c.h.b16 %v1381
        %v1570 = vunpack.c.l.b16 %v1382
        %v1571 = vunpack.c.h.b16 %v1382
        %v1572 = vunpack.c.l.b16 %v1383
        %v1573 = vunpack.c.h.b16 %v1383
        %v1574 = vunpack.c.l.b16 %v1384
        %v1575 = vunpack.c.h.b16 %v1384
        %v1576 = vunpack.c.l.b16 %v1385
        %v1577 = vunpack.c.h.b16 %v1385
        %v1578 = vpack.c.b16 %v1454, %v1450
        %v1579 = vpack.c.b16 %v1455, %v1451
        %v1580 = vpack.c.b16 %v1456, %v1452
        %v1581 = vpack.c.b16 %v1457, %v1453
        %v1582 = vpack.c.b16 %v1462, %v1458
        %v1583 = vpack.c.b16 %v1463, %v1459
        %v1584 = vpack.c.b16 %v1464, %v1460
        %v1585 = vpack.c.b16 %v1465, %v1461
        %v1586 = vpack.c.b16 %v1470, %v1466
        %v1587 = vpack.c.b16 %v1471, %v1467
        %v1588 = vpack.c.b16 %v1472, %v1468
        %v1589 = vpack.c.b16 %v1473, %v1469
        %v1590 = vpack.c.b16 %v1478, %v1474
        %v1591 = vpack.c.b16 %v1479, %v1475
        %v1592 = vpack.c.b16 %v1480, %v1476
        %v1593 = vpack.c.b16 %v1481, %v1477
        %v1594 = vpack.c.b16 %v1486, %v1482
        %v1595 = vpack.c.b16 %v1487, %v1483
        %v1596 = vpack.c.b16 %v1488, %v1484
        %v1597 = vpack.c.b16 %v1489, %v1485
        %v1598 = vpack.c.b16 %v1494, %v1490
        %v1599 = vpack.c.b16 %v1495, %v1491
        %v1600 = vpack.c.b16 %v1496, %v1492
        %v1601 = vpack.c.b16 %v1497, %v1493
        %v1602 = vpack.c.b16 %v1502, %v1498
        %v1603 = vpack.c.b16 %v1503, %v1499
        %v1604 = vpack.c.b16 %v1504, %v1500
        %v1605 = vpack.c.b16 %v1505, %v1501
        %v1606 = vpack.c.b16 %v1510, %v1506
        %v1607 = vpack.c.b16 %v1511, %v1507
        %v1608 = vpack.c.b16 %v1512, %v1508
        %v1609 = vpack.c.b16 %v1513, %v1509
        %v1610 = vpack.c.b16 %v1518, %v1514
        %v1611 = vpack.c.b16 %v1519, %v1515
        %v1612 = vpack.c.b16 %v1520, %v1516
        %v1613 = vpack.c.b16 %v1521, %v1517
        %v1614 = vpack.c.b16 %v1526, %v1522
        %v1615 = vpack.c.b16 %v1527, %v1523
        %v1616 = vpack.c.b16 %v1528, %v1524
        %v1617 = vpack.c.b16 %v1529, %v1525
        %v1618 = vpack.c.b16 %v1534, %v1530
        %v1619 = vpack.c.b16 %v1535, %v1531
        %v1620 = vpack.c.b16 %v1536, %v1532
        %v1621 = vpack.c.b16 %v1537, %v1533
        %v1622 = vpack.c.b16 %v1542, %v1538
        %v1623 = vpack.c.b16 %v1543, %v1539
        %v1624 = vpack.c.b16 %v1544, %v1540
        %v1625 = vpack.c.b16 %v1545, %v1541
        %v1626 = vpack.c.b16 %v1550, %v1546
        %v1627 = vpack.c.b16 %v1551, %v1547
        %v1628 = vpack.c.b16 %v1552, %v1548
        %v1629 = vpack.c.b16 %v1553, %v1549
        %v1630 = vpack.c.b16 %v1558, %v1554
        %v1631 = vpack.c.b16 %v1559, %v1555
        %v1632 = vpack.c.b16 %v1560, %v1556
        %v1633 = vpack.c.b16 %v1561, %v1557
        %v1634 = vpack.c.b16 %v1566, %v1562
        %v1635 = vpack.c.b16 %v1567, %v1563
        %v1636 = vpack.c.b16 %v1568, %v1564
        %v1637 = vpack.c.b16 %v1569, %v1565
        %v1638 = vpack.c.b16 %v1574, %v1570
        %v1639 = vpack.c.b16 %v1575, %v1571
        %v1640 = vpack.c.b16 %v1576, %v1572
        %v1641 = vpack.c.b16 %v1577, %v1573
        %1706 = vmatprep.subr.bf16.mxu0 %v1607
        %1707 = vmatpush1.bf16.msra.mxu0 %v1606
        %1708 = vmatprep.subr.bf16.mxu0 %v1603
        %1709 = vmatpush1.bf16.msra.mxu0 %v1602
        %1710 = vmatprep.subr.bf16.mxu0 %v1599
        %1711 = vmatpush1.bf16.msra.mxu0 %v1598
        %1712 = vmatprep.subr.bf16.mxu0 %v1595
        %1713 = vmatpush1.bf16.msra.mxu0 %v1594
        %1714 = vmatprep.subr.bf16.mxu0 %v1591
        %1715 = vmatpush1.bf16.msra.mxu0 %v1590
        %1716 = vmatprep.subr.bf16.mxu0 %v1587
        %1717 = vmatpush1.bf16.msra.mxu0 %v1586
        %1718 = vmatprep.subr.bf16.mxu0 %v1583
        %1719 = vmatpush1.bf16.msra.mxu0 %v1582
        %1720 = vmatprep.subr.bf16.mxu0 %v1579
        %1721 = vmatpush1.bf16.msra.mxu0 %v1578
        %1722 = vmatprep.subr.bf16.mxu0 %v1639
        %1723 = vmatpush2.bf16.msra.mxu0 %v1638
        %1724 = vmatprep.subr.bf16.mxu0 %v1635
        %1725 = vmatpush2.bf16.msra.mxu0 %v1634
        %1726 = vmatprep.subr.bf16.mxu0 %v1631
        %1727 = vmatpush2.bf16.msra.mxu0 %v1630
        %1728 = vmatprep.subr.bf16.mxu0 %v1627
        %1729 = vmatpush2.bf16.msra.mxu0 %v1626
        %1730 = vmatprep.subr.bf16.mxu0 %v1623
        %1731 = vmatpush2.bf16.msra.mxu0 %v1622
        %1732 = vmatprep.subr.bf16.mxu0 %v1619
        %1733 = vmatpush2.bf16.msra.mxu0 %v1618
        %1734 = vmatprep.subr.bf16.mxu0 %v1615
        %1735 = vmatpush2.bf16.msra.mxu0 %v1614
        %1736 = vmatprep.subr.bf16.mxu0 %v1611
        %1737 = vmatpush2.bf16.msra.mxu0 %v1610
        %1738 = vmatprep.mubr.bf16.mxu0 %v839
        %1739 = vmatmul.mubr.bf16.gmra.mxu0 %v838
        %v1740 = vpop.f32.mrf.mxu0
        %v1741 = vadd.f32 0.0, %v1740
        %v1742 = vpop.f32.mrf.mxu0
        %v1743 = vadd.f32 0.0, %v1742
        %v1744 = vpop.f32.mrf.mxu0
        %v1745 = vpop.f32.mrf.mxu0
        %1746 = vdwg.mxu0
        %1747 = vmatprep.subr.bf16.mxu0 %v1609
        %1748 = vmatpush1.bf16.msra.mxu0 %v1608
        %1749 = vmatprep.subr.bf16.mxu0 %v1605
        %1750 = vmatpush1.bf16.msra.mxu0 %v1604
        %1751 = vmatprep.subr.bf16.mxu0 %v1601
        %1752 = vmatpush1.bf16.msra.mxu0 %v1600
        %1753 = vmatprep.subr.bf16.mxu0 %v1597
        %1754 = vmatpush1.bf16.msra.mxu0 %v1596
        %1755 = vmatprep.subr.bf16.mxu0 %v1593
        %1756 = vmatpush1.bf16.msra.mxu0 %v1592
        %1757 = vmatprep.subr.bf16.mxu0 %v1589
        %1758 = vmatpush1.bf16.msra.mxu0 %v1588
        %1759 = vmatprep.subr.bf16.mxu0 %v1585
        %1760 = vmatpush1.bf16.msra.mxu0 %v1584
        %1761 = vmatprep.subr.bf16.mxu0 %v1581
        %1762 = vmatpush1.bf16.msra.mxu0 %v1580
        %1763 = vmatprep.subr.bf16.mxu0 %v1641
        %1764 = vmatpush2.bf16.msra.mxu0 %v1640
        %1765 = vmatprep.subr.bf16.mxu0 %v1637
        %1766 = vmatpush2.bf16.msra.mxu0 %v1636
        %1767 = vmatprep.subr.bf16.mxu0 %v1633
        %1768 = vmatpush2.bf16.msra.mxu0 %v1632
        %1769 = vmatprep.subr.bf16.mxu0 %v1629
        %1770 = vmatpush2.bf16.msra.mxu0 %v1628
        %1771 = vmatprep.subr.bf16.mxu0 %v1625
        %1772 = vmatpush2.bf16.msra.mxu0 %v1624
        %1773 = vmatprep.subr.bf16.mxu0 %v1621
        %1774 = vmatpush2.bf16.msra.mxu0 %v1620
        %1775 = vmatprep.subr.bf16.mxu0 %v1617
        %1776 = vmatpush2.bf16.msra.mxu0 %v1616
        %1777 = vmatprep.subr.bf16.mxu0 %v1613
        %1778 = vmatpush2.bf16.msra.mxu0 %v1612
        %1779 = vmatprep.mubr.bf16.mxu0 %v839
        %1780 = vmatmul.mubr.bf16.gmra.mxu0 %v838
        %v1781 = vpop.f32.mrf.mxu0
        %v1782 = vadd.f32 0.0, %v1781
        %v1783 = vpop.f32.mrf.mxu0
        %v1784 = vadd.f32 0.0, %v1783
        %v1785 = vpop.f32.mrf.mxu0
        %v1786 = vpop.f32.mrf.mxu0
        %1787 = vdwg.mxu0
        %v1788 = vadd.f32 %v1318, %v1741
        %v1789 = vadd.f32 %v1319, %v1743
        %v1790 = vadd.f32 %v1320, %v1782
        %v1791 = vadd.f32 %v1321, %v1784
        %1792 = vst [vmem:[#allocation3] sm:$0xff] %v1788
        %1793 = vst [vmem:[#allocation3 + $0x8] sm:$0xff] %v1789
        %1794 = vst [vmem:[#allocation3 + $0x10] sm:$0xff] %v1790
        %1795 = vst [vmem:[#allocation3 + $0x18] sm:$0xff] %v1791
        %p1796 = scmp.eq.s32.totalorder %s36, 6
        // Predicated region
        $region109: #{rnd_forward.1} parent=63 // pred_check
          %p1797 = pneg %p1796
        $region110: #{rnd_forward.1} parent=63 // pred_check_branch
          %1799 = sbr.rel (%p1797) target = $region112
        $region111: #{rnd_forward.1} parent=63 // pred_region
          %v1800 = vld [vmem:[#allocation2] sm:$0xff]
          %v1801 = vld [vmem:[#allocation2 + $0x8] sm:$0xff]
          %v1802 = vld [vmem:[#allocation2 + $0x10] sm:$0xff]
          %v1803 = vld [vmem:[#allocation2 + $0x18] sm:$0xff]
          %v1804 = vld [vmem:[#allocation9] sm:$0xf]
          %v1806 = vlaneseq
          %v1807 = vshrl.u32 %v1806, 7
          %v1808 = vsub.s32 0, %v1807
          %v1809 = vrot.slane %v1804, %v1808
          %v1810 = vlaneseq
          %v1811 = vshrl.u32 %v1810, 7
          %v1812 = vsub.s32 1, %v1811
          %v1813 = vrot.slane %v1804, %v1812
          %v1814 = vlaneseq
          %v1815 = vshrl.u32 %v1814, 7
          %v1816 = vsub.s32 2, %v1815
          %v1817 = vrot.slane %v1804, %v1816
          %v1818 = vlaneseq
          %v1819 = vshrl.u32 %v1818, 7
          %v1820 = vsub.s32 3, %v1819
          %v1821 = vrot.slane %v1804, %v1820
          %v1826 = vadd.f32 %v1800, %v1809
          %v1827 = vadd.f32 %v1801, %v1813
          %v1828 = vadd.f32 %v1802, %v1817
          %v1829 = vadd.f32 %v1803, %v1821
          %v1830 = vmax.f32 %v1826, 0.0
          %v1831 = vmax.f32 %v1827, 0.0
          %v1832 = vmax.f32 %v1828, 0.0
          %v1833 = vmax.f32 %v1829, 0.0
          %v1834 = vpack.c.bf16 %v1830, %v1830
          %v1835 = vpack.c.bf16 %v1831, %v1831
          %v1836 = vpack.c.bf16 %v1832, %v1832
          %v1837 = vpack.c.bf16 %v1833, %v1833
          %v1838 = vld [vmem:[#allocation10] sm:$0xff]
          %v1839 = vld [vmem:[#allocation10 + $0x8] sm:$0xff]
          %v1840 = vld [vmem:[#allocation10 + $0x10] sm:$0xff]
          %v1841 = vld [vmem:[#allocation10 + $0x18] sm:$0xff]
          %v1842 = vld [vmem:[#allocation10 + $0x20] sm:$0xff]
          %v1843 = vld [vmem:[#allocation10 + $0x28] sm:$0xff]
          %v1844 = vld [vmem:[#allocation10 + $0x30] sm:$0xff]
          %v1845 = vld [vmem:[#allocation10 + $0x38] sm:$0xff]
          %v1846 = vld [vmem:[#allocation10 + $0x40] sm:$0xff]
          %v1847 = vld [vmem:[#allocation10 + $0x48] sm:$0xff]
          %v1848 = vld [vmem:[#allocation10 + $0x50] sm:$0xff]
          %v1849 = vld [vmem:[#allocation10 + $0x58] sm:$0xff]
          %v1850 = vld [vmem:[#allocation10 + $0x60] sm:$0xff]
          %v1851 = vld [vmem:[#allocation10 + $0x68] sm:$0xff]
          %v1852 = vld [vmem:[#allocation10 + $0x70] sm:$0xff]
          %v1853 = vld [vmem:[#allocation10 + $0x78] sm:$0xff]
          %v1854 = vld [vmem:[#allocation10 + $0x80] sm:$0xff]
          %v1855 = vld [vmem:[#allocation10 + $0x88] sm:$0xff]
          %v1856 = vld [vmem:[#allocation10 + $0x90] sm:$0xff]
          %v1857 = vld [vmem:[#allocation10 + $0x98] sm:$0xff]
          %v1858 = vld [vmem:[#allocation10 + $0xa0] sm:$0xff]
          %v1859 = vld [vmem:[#allocation10 + $0xa8] sm:$0xff]
          %v1860 = vld [vmem:[#allocation10 + $0xb0] sm:$0xff]
          %v1861 = vld [vmem:[#allocation10 + $0xb8] sm:$0xff]
          %v1862 = vld [vmem:[#allocation10 + $0xc0] sm:$0xff]
          %v1863 = vld [vmem:[#allocation10 + $0xc8] sm:$0xff]
          %v1864 = vld [vmem:[#allocation10 + $0xd0] sm:$0xff]
          %v1865 = vld [vmem:[#allocation10 + $0xd8] sm:$0xff]
          %v1866 = vld [vmem:[#allocation10 + $0xe0] sm:$0xff]
          %v1867 = vld [vmem:[#allocation10 + $0xe8] sm:$0xff]
          %v1868 = vld [vmem:[#allocation10 + $0xf0] sm:$0xff]
          %v1869 = vld [vmem:[#allocation10 + $0xf8] sm:$0xff]
          %v1870 = vld [vmem:[#allocation10 + $0x100] sm:$0xff]
          %v1871 = vld [vmem:[#allocation10 + $0x108] sm:$0xff]
          %v1872 = vld [vmem:[#allocation10 + $0x110] sm:$0xff]
          %v1873 = vld [vmem:[#allocation10 + $0x118] sm:$0xff]
          %v1874 = vld [vmem:[#allocation10 + $0x120] sm:$0xff]
          %v1875 = vld [vmem:[#allocation10 + $0x128] sm:$0xff]
          %v1876 = vld [vmem:[#allocation10 + $0x130] sm:$0xff]
          %v1877 = vld [vmem:[#allocation10 + $0x138] sm:$0xff]
          %v1878 = vld [vmem:[#allocation10 + $0x140] sm:$0xff]
          %v1879 = vld [vmem:[#allocation10 + $0x148] sm:$0xff]
          %v1880 = vld [vmem:[#allocation10 + $0x150] sm:$0xff]
          %v1881 = vld [vmem:[#allocation10 + $0x158] sm:$0xff]
          %v1882 = vld [vmem:[#allocation10 + $0x160] sm:$0xff]
          %v1883 = vld [vmem:[#allocation10 + $0x168] sm:$0xff]
          %v1884 = vld [vmem:[#allocation10 + $0x170] sm:$0xff]
          %v1885 = vld [vmem:[#allocation10 + $0x178] sm:$0xff]
          %v1886 = vld [vmem:[#allocation10 + $0x180] sm:$0xff]
          %v1887 = vld [vmem:[#allocation10 + $0x188] sm:$0xff]
          %v1888 = vld [vmem:[#allocation10 + $0x190] sm:$0xff]
          %v1889 = vld [vmem:[#allocation10 + $0x198] sm:$0xff]
          %v1890 = vld [vmem:[#allocation10 + $0x1a0] sm:$0xff]
          %v1891 = vld [vmem:[#allocation10 + $0x1a8] sm:$0xff]
          %v1892 = vld [vmem:[#allocation10 + $0x1b0] sm:$0xff]
          %v1893 = vld [vmem:[#allocation10 + $0x1b8] sm:$0xff]
          %v1894 = vld [vmem:[#allocation10 + $0x1c0] sm:$0xff]
          %v1895 = vld [vmem:[#allocation10 + $0x1c8] sm:$0xff]
          %v1896 = vld [vmem:[#allocation10 + $0x1d0] sm:$0xff]
          %v1897 = vld [vmem:[#allocation10 + $0x1d8] sm:$0xff]
          %v1898 = vld [vmem:[#allocation10 + $0x1e0] sm:$0xff]
          %v1899 = vld [vmem:[#allocation10 + $0x1e8] sm:$0xff]
          %v1900 = vld [vmem:[#allocation10 + $0x1f0] sm:$0xff]
          %v1901 = vld [vmem:[#allocation10 + $0x1f8] sm:$0xff]
          %v1902 = vld [vmem:[#allocation10 + $0x200] sm:$0xff]
          %v1903 = vld [vmem:[#allocation10 + $0x208] sm:$0xff]
          %v1904 = vld [vmem:[#allocation10 + $0x210] sm:$0xff]
          %v1905 = vld [vmem:[#allocation10 + $0x218] sm:$0xff]
          %v1906 = vld [vmem:[#allocation10 + $0x220] sm:$0xff]
          %v1907 = vld [vmem:[#allocation10 + $0x228] sm:$0xff]
          %v1908 = vld [vmem:[#allocation10 + $0x230] sm:$0xff]
          %v1909 = vld [vmem:[#allocation10 + $0x238] sm:$0xff]
          %v1910 = vld [vmem:[#allocation10 + $0x240] sm:$0xff]
          %v1911 = vld [vmem:[#allocation10 + $0x248] sm:$0xff]
          %v1912 = vld [vmem:[#allocation10 + $0x250] sm:$0xff]
          %v1913 = vld [vmem:[#allocation10 + $0x258] sm:$0xff]
          %v1914 = vld [vmem:[#allocation10 + $0x260] sm:$0xff]
          %v1915 = vld [vmem:[#allocation10 + $0x268] sm:$0xff]
          %v1916 = vld [vmem:[#allocation10 + $0x270] sm:$0xff]
          %v1917 = vld [vmem:[#allocation10 + $0x278] sm:$0xff]
          %v1918 = vld [vmem:[#allocation10 + $0x280] sm:$0xff]
          %v1919 = vld [vmem:[#allocation10 + $0x288] sm:$0xff]
          %v1920 = vld [vmem:[#allocation10 + $0x290] sm:$0xff]
          %v1921 = vld [vmem:[#allocation10 + $0x298] sm:$0xff]
          %v1922 = vld [vmem:[#allocation10 + $0x2a0] sm:$0xff]
          %v1923 = vld [vmem:[#allocation10 + $0x2a8] sm:$0xff]
          %v1924 = vld [vmem:[#allocation10 + $0x2b0] sm:$0xff]
          %v1925 = vld [vmem:[#allocation10 + $0x2b8] sm:$0xff]
          %v1926 = vld [vmem:[#allocation10 + $0x2c0] sm:$0xff]
          %v1927 = vld [vmem:[#allocation10 + $0x2c8] sm:$0xff]
          %v1928 = vld [vmem:[#allocation10 + $0x2d0] sm:$0xff]
          %v1929 = vld [vmem:[#allocation10 + $0x2d8] sm:$0xff]
          %v1930 = vld [vmem:[#allocation10 + $0x2e0] sm:$0xff]
          %v1931 = vld [vmem:[#allocation10 + $0x2e8] sm:$0xff]
          %v1932 = vld [vmem:[#allocation10 + $0x2f0] sm:$0xff]
          %v1933 = vld [vmem:[#allocation10 + $0x2f8] sm:$0xff]
          %v1934 = vld [vmem:[#allocation10 + $0x300] sm:$0xff]
          %v1935 = vld [vmem:[#allocation10 + $0x308] sm:$0xff]
          %v1936 = vld [vmem:[#allocation10 + $0x310] sm:$0xff]
          %v1937 = vld [vmem:[#allocation10 + $0x318] sm:$0xff]
          %v1938 = vld [vmem:[#allocation10 + $0x320] sm:$0xff]
          %v1939 = vld [vmem:[#allocation10 + $0x328] sm:$0xff]
          %v1940 = vld [vmem:[#allocation10 + $0x330] sm:$0xff]
          %v1941 = vld [vmem:[#allocation10 + $0x338] sm:$0xff]
          %v1942 = vld [vmem:[#allocation10 + $0x340] sm:$0xff]
          %v1943 = vld [vmem:[#allocation10 + $0x348] sm:$0xff]
          %v1944 = vld [vmem:[#allocation10 + $0x350] sm:$0xff]
          %v1945 = vld [vmem:[#allocation10 + $0x358] sm:$0xff]
          %v1946 = vld [vmem:[#allocation10 + $0x360] sm:$0xff]
          %v1947 = vld [vmem:[#allocation10 + $0x368] sm:$0xff]
          %v1948 = vld [vmem:[#allocation10 + $0x370] sm:$0xff]
          %v1949 = vld [vmem:[#allocation10 + $0x378] sm:$0xff]
          %v1950 = vld [vmem:[#allocation10 + $0x380] sm:$0xff]
          %v1951 = vld [vmem:[#allocation10 + $0x388] sm:$0xff]
          %v1952 = vld [vmem:[#allocation10 + $0x390] sm:$0xff]
          %v1953 = vld [vmem:[#allocation10 + $0x398] sm:$0xff]
          %v1954 = vld [vmem:[#allocation10 + $0x3a0] sm:$0xff]
          %v1955 = vld [vmem:[#allocation10 + $0x3a8] sm:$0xff]
          %v1956 = vld [vmem:[#allocation10 + $0x3b0] sm:$0xff]
          %v1957 = vld [vmem:[#allocation10 + $0x3b8] sm:$0xff]
          %v1958 = vld [vmem:[#allocation10 + $0x3c0] sm:$0xff]
          %v1959 = vld [vmem:[#allocation10 + $0x3c8] sm:$0xff]
          %v1960 = vld [vmem:[#allocation10 + $0x3d0] sm:$0xff]
          %v1961 = vld [vmem:[#allocation10 + $0x3d8] sm:$0xff]
          %v1962 = vld [vmem:[#allocation10 + $0x3e0] sm:$0xff]
          %v1963 = vld [vmem:[#allocation10 + $0x3e8] sm:$0xff]
          %v1964 = vld [vmem:[#allocation10 + $0x3f0] sm:$0xff]
          %v1965 = vld [vmem:[#allocation10 + $0x3f8] sm:$0xff]
          %v1966 = vld [vmem:[#allocation12] sm:$0xf]
          %v1968 = vlaneseq
          %v1969 = vshrl.u32 %v1968, 7
          %v1970 = vsub.s32 0, %v1969
          %v1971 = vrot.slane %v1966, %v1970
          %v1972 = vlaneseq
          %v1973 = vshrl.u32 %v1972, 7
          %v1974 = vsub.s32 1, %v1973
          %v1975 = vrot.slane %v1966, %v1974
          %v1976 = vlaneseq
          %v1977 = vshrl.u32 %v1976, 7
          %v1978 = vsub.s32 2, %v1977
          %v1979 = vrot.slane %v1966, %v1978
          %v1980 = vlaneseq
          %v1981 = vshrl.u32 %v1980, 7
          %v1982 = vsub.s32 3, %v1981
          %v1983 = vrot.slane %v1966, %v1982
          %v2116 = vunpack.c.l.b16 %v1838
          %v2117 = vunpack.c.h.b16 %v1838
          %v2118 = vunpack.c.l.b16 %v1839
          %v2119 = vunpack.c.h.b16 %v1839
          %v2120 = vunpack.c.l.b16 %v1840
          %v2121 = vunpack.c.h.b16 %v1840
          %v2122 = vunpack.c.l.b16 %v1841
          %v2123 = vunpack.c.h.b16 %v1841
          %v2124 = vunpack.c.l.b16 %v1842
          %v2125 = vunpack.c.h.b16 %v1842
          %v2126 = vunpack.c.l.b16 %v1843
          %v2127 = vunpack.c.h.b16 %v1843
          %v2128 = vunpack.c.l.b16 %v1844
          %v2129 = vunpack.c.h.b16 %v1844
          %v2130 = vunpack.c.l.b16 %v1845
          %v2131 = vunpack.c.h.b16 %v1845
          %v2132 = vunpack.c.l.b16 %v1846
          %v2133 = vunpack.c.h.b16 %v1846
          %v2134 = vunpack.c.l.b16 %v1847
          %v2135 = vunpack.c.h.b16 %v1847
          %v2136 = vunpack.c.l.b16 %v1848
          %v2137 = vunpack.c.h.b16 %v1848
          %v2138 = vunpack.c.l.b16 %v1849
          %v2139 = vunpack.c.h.b16 %v1849
          %v2140 = vunpack.c.l.b16 %v1850
          %v2141 = vunpack.c.h.b16 %v1850
          %v2142 = vunpack.c.l.b16 %v1851
          %v2143 = vunpack.c.h.b16 %v1851
          %v2144 = vunpack.c.l.b16 %v1852
          %v2145 = vunpack.c.h.b16 %v1852
          %v2146 = vunpack.c.l.b16 %v1853
          %v2147 = vunpack.c.h.b16 %v1853
          %v2148 = vunpack.c.l.b16 %v1854
          %v2149 = vunpack.c.h.b16 %v1854
          %v2150 = vunpack.c.l.b16 %v1855
          %v2151 = vunpack.c.h.b16 %v1855
          %v2152 = vunpack.c.l.b16 %v1856
          %v2153 = vunpack.c.h.b16 %v1856
          %v2154 = vunpack.c.l.b16 %v1857
          %v2155 = vunpack.c.h.b16 %v1857
          %v2156 = vunpack.c.l.b16 %v1858
          %v2157 = vunpack.c.h.b16 %v1858
          %v2158 = vunpack.c.l.b16 %v1859
          %v2159 = vunpack.c.h.b16 %v1859
          %v2160 = vunpack.c.l.b16 %v1860
          %v2161 = vunpack.c.h.b16 %v1860
          %v2162 = vunpack.c.l.b16 %v1861
          %v2163 = vunpack.c.h.b16 %v1861
          %v2164 = vunpack.c.l.b16 %v1862
          %v2165 = vunpack.c.h.b16 %v1862
          %v2166 = vunpack.c.l.b16 %v1863
          %v2167 = vunpack.c.h.b16 %v1863
          %v2168 = vunpack.c.l.b16 %v1864
          %v2169 = vunpack.c.h.b16 %v1864
          %v2170 = vunpack.c.l.b16 %v1865
          %v2171 = vunpack.c.h.b16 %v1865
          %v2172 = vunpack.c.l.b16 %v1866
          %v2173 = vunpack.c.h.b16 %v1866
          %v2174 = vunpack.c.l.b16 %v1867
          %v2175 = vunpack.c.h.b16 %v1867
          %v2176 = vunpack.c.l.b16 %v1868
          %v2177 = vunpack.c.h.b16 %v1868
          %v2178 = vunpack.c.l.b16 %v1869
          %v2179 = vunpack.c.h.b16 %v1869
          %v2180 = vunpack.c.l.b16 %v1870
          %v2181 = vunpack.c.h.b16 %v1870
          %v2182 = vunpack.c.l.b16 %v1871
          %v2183 = vunpack.c.h.b16 %v1871
          %v2184 = vunpack.c.l.b16 %v1872
          %v2185 = vunpack.c.h.b16 %v1872
          %v2186 = vunpack.c.l.b16 %v1873
          %v2187 = vunpack.c.h.b16 %v1873
          %v2188 = vunpack.c.l.b16 %v1874
          %v2189 = vunpack.c.h.b16 %v1874
          %v2190 = vunpack.c.l.b16 %v1875
          %v2191 = vunpack.c.h.b16 %v1875
          %v2192 = vunpack.c.l.b16 %v1876
          %v2193 = vunpack.c.h.b16 %v1876
          %v2194 = vunpack.c.l.b16 %v1877
          %v2195 = vunpack.c.h.b16 %v1877
          %v2196 = vunpack.c.l.b16 %v1878
          %v2197 = vunpack.c.h.b16 %v1878
          %v2198 = vunpack.c.l.b16 %v1879
          %v2199 = vunpack.c.h.b16 %v1879
          %v2200 = vunpack.c.l.b16 %v1880
          %v2201 = vunpack.c.h.b16 %v1880
          %v2202 = vunpack.c.l.b16 %v1881
          %v2203 = vunpack.c.h.b16 %v1881
          %v2204 = vunpack.c.l.b16 %v1882
          %v2205 = vunpack.c.h.b16 %v1882
          %v2206 = vunpack.c.l.b16 %v1883
          %v2207 = vunpack.c.h.b16 %v1883
          %v2208 = vunpack.c.l.b16 %v1884
          %v2209 = vunpack.c.h.b16 %v1884
          %v2210 = vunpack.c.l.b16 %v1885
          %v2211 = vunpack.c.h.b16 %v1885
          %v2212 = vunpack.c.l.b16 %v1886
          %v2213 = vunpack.c.h.b16 %v1886
          %v2214 = vunpack.c.l.b16 %v1887
          %v2215 = vunpack.c.h.b16 %v1887
          %v2216 = vunpack.c.l.b16 %v1888
          %v2217 = vunpack.c.h.b16 %v1888
          %v2218 = vunpack.c.l.b16 %v1889
          %v2219 = vunpack.c.h.b16 %v1889
          %v2220 = vunpack.c.l.b16 %v1890
          %v2221 = vunpack.c.h.b16 %v1890
          %v2222 = vunpack.c.l.b16 %v1891
          %v2223 = vunpack.c.h.b16 %v1891
          %v2224 = vunpack.c.l.b16 %v1892
          %v2225 = vunpack.c.h.b16 %v1892
          %v2226 = vunpack.c.l.b16 %v1893
          %v2227 = vunpack.c.h.b16 %v1893
          %v2228 = vunpack.c.l.b16 %v1894
          %v2229 = vunpack.c.h.b16 %v1894
          %v2230 = vunpack.c.l.b16 %v1895
          %v2231 = vunpack.c.h.b16 %v1895
          %v2232 = vunpack.c.l.b16 %v1896
          %v2233 = vunpack.c.h.b16 %v1896
          %v2234 = vunpack.c.l.b16 %v1897
          %v2235 = vunpack.c.h.b16 %v1897
          %v2236 = vunpack.c.l.b16 %v1898
          %v2237 = vunpack.c.h.b16 %v1898
          %v2238 = vunpack.c.l.b16 %v1899
          %v2239 = vunpack.c.h.b16 %v1899
          %v2240 = vunpack.c.l.b16 %v1900
          %v2241 = vunpack.c.h.b16 %v1900
          %v2242 = vunpack.c.l.b16 %v1901
          %v2243 = vunpack.c.h.b16 %v1901
          %v2244 = vunpack.c.l.b16 %v1902
          %v2245 = vunpack.c.h.b16 %v1902
          %v2246 = vunpack.c.l.b16 %v1903
          %v2247 = vunpack.c.h.b16 %v1903
          %v2248 = vunpack.c.l.b16 %v1904
          %v2249 = vunpack.c.h.b16 %v1904
          %v2250 = vunpack.c.l.b16 %v1905
          %v2251 = vunpack.c.h.b16 %v1905
          %v2252 = vunpack.c.l.b16 %v1906
          %v2253 = vunpack.c.h.b16 %v1906
          %v2254 = vunpack.c.l.b16 %v1907
          %v2255 = vunpack.c.h.b16 %v1907
          %v2256 = vunpack.c.l.b16 %v1908
          %v2257 = vunpack.c.h.b16 %v1908
          %v2258 = vunpack.c.l.b16 %v1909
          %v2259 = vunpack.c.h.b16 %v1909
          %v2260 = vunpack.c.l.b16 %v1910
          %v2261 = vunpack.c.h.b16 %v1910
          %v2262 = vunpack.c.l.b16 %v1911
          %v2263 = vunpack.c.h.b16 %v1911
          %v2264 = vunpack.c.l.b16 %v1912
          %v2265 = vunpack.c.h.b16 %v1912
          %v2266 = vunpack.c.l.b16 %v1913
          %v2267 = vunpack.c.h.b16 %v1913
          %v2268 = vunpack.c.l.b16 %v1914
          %v2269 = vunpack.c.h.b16 %v1914
          %v2270 = vunpack.c.l.b16 %v1915
          %v2271 = vunpack.c.h.b16 %v1915
          %v2272 = vunpack.c.l.b16 %v1916
          %v2273 = vunpack.c.h.b16 %v1916
          %v2274 = vunpack.c.l.b16 %v1917
          %v2275 = vunpack.c.h.b16 %v1917
          %v2276 = vunpack.c.l.b16 %v1918
          %v2277 = vunpack.c.h.b16 %v1918
          %v2278 = vunpack.c.l.b16 %v1919
          %v2279 = vunpack.c.h.b16 %v1919
          %v2280 = vunpack.c.l.b16 %v1920
          %v2281 = vunpack.c.h.b16 %v1920
          %v2282 = vunpack.c.l.b16 %v1921
          %v2283 = vunpack.c.h.b16 %v1921
          %v2284 = vunpack.c.l.b16 %v1922
          %v2285 = vunpack.c.h.b16 %v1922
          %v2286 = vunpack.c.l.b16 %v1923
          %v2287 = vunpack.c.h.b16 %v1923
          %v2288 = vunpack.c.l.b16 %v1924
          %v2289 = vunpack.c.h.b16 %v1924
          %v2290 = vunpack.c.l.b16 %v1925
          %v2291 = vunpack.c.h.b16 %v1925
          %v2292 = vunpack.c.l.b16 %v1926
          %v2293 = vunpack.c.h.b16 %v1926
          %v2294 = vunpack.c.l.b16 %v1927
          %v2295 = vunpack.c.h.b16 %v1927
          %v2296 = vunpack.c.l.b16 %v1928
          %v2297 = vunpack.c.h.b16 %v1928
          %v2298 = vunpack.c.l.b16 %v1929
          %v2299 = vunpack.c.h.b16 %v1929
          %v2300 = vunpack.c.l.b16 %v1930
          %v2301 = vunpack.c.h.b16 %v1930
          %v2302 = vunpack.c.l.b16 %v1931
          %v2303 = vunpack.c.h.b16 %v1931
          %v2304 = vunpack.c.l.b16 %v1932
          %v2305 = vunpack.c.h.b16 %v1932
          %v2306 = vunpack.c.l.b16 %v1933
          %v2307 = vunpack.c.h.b16 %v1933
          %v2308 = vunpack.c.l.b16 %v1934
          %v2309 = vunpack.c.h.b16 %v1934
          %v2310 = vunpack.c.l.b16 %v1935
          %v2311 = vunpack.c.h.b16 %v1935
          %v2312 = vunpack.c.l.b16 %v1936
          %v2313 = vunpack.c.h.b16 %v1936
          %v2314 = vunpack.c.l.b16 %v1937
          %v2315 = vunpack.c.h.b16 %v1937
          %v2316 = vunpack.c.l.b16 %v1938
          %v2317 = vunpack.c.h.b16 %v1938
          %v2318 = vunpack.c.l.b16 %v1939
          %v2319 = vunpack.c.h.b16 %v1939
          %v2320 = vunpack.c.l.b16 %v1940
          %v2321 = vunpack.c.h.b16 %v1940
          %v2322 = vunpack.c.l.b16 %v1941
          %v2323 = vunpack.c.h.b16 %v1941
          %v2324 = vunpack.c.l.b16 %v1942
          %v2325 = vunpack.c.h.b16 %v1942
          %v2326 = vunpack.c.l.b16 %v1943
          %v2327 = vunpack.c.h.b16 %v1943
          %v2328 = vunpack.c.l.b16 %v1944
          %v2329 = vunpack.c.h.b16 %v1944
          %v2330 = vunpack.c.l.b16 %v1945
          %v2331 = vunpack.c.h.b16 %v1945
          %v2332 = vunpack.c.l.b16 %v1946
          %v2333 = vunpack.c.h.b16 %v1946
          %v2334 = vunpack.c.l.b16 %v1947
          %v2335 = vunpack.c.h.b16 %v1947
          %v2336 = vunpack.c.l.b16 %v1948
          %v2337 = vunpack.c.h.b16 %v1948
          %v2338 = vunpack.c.l.b16 %v1949
          %v2339 = vunpack.c.h.b16 %v1949
          %v2340 = vunpack.c.l.b16 %v1950
          %v2341 = vunpack.c.h.b16 %v1950
          %v2342 = vunpack.c.l.b16 %v1951
          %v2343 = vunpack.c.h.b16 %v1951
          %v2344 = vunpack.c.l.b16 %v1952
          %v2345 = vunpack.c.h.b16 %v1952
          %v2346 = vunpack.c.l.b16 %v1953
          %v2347 = vunpack.c.h.b16 %v1953
          %v2348 = vunpack.c.l.b16 %v1954
          %v2349 = vunpack.c.h.b16 %v1954
          %v2350 = vunpack.c.l.b16 %v1955
          %v2351 = vunpack.c.h.b16 %v1955
          %v2352 = vunpack.c.l.b16 %v1956
          %v2353 = vunpack.c.h.b16 %v1956
          %v2354 = vunpack.c.l.b16 %v1957
          %v2355 = vunpack.c.h.b16 %v1957
          %v2356 = vunpack.c.l.b16 %v1958
          %v2357 = vunpack.c.h.b16 %v1958
          %v2358 = vunpack.c.l.b16 %v1959
          %v2359 = vunpack.c.h.b16 %v1959
          %v2360 = vunpack.c.l.b16 %v1960
          %v2361 = vunpack.c.h.b16 %v1960
          %v2362 = vunpack.c.l.b16 %v1961
          %v2363 = vunpack.c.h.b16 %v1961
          %v2364 = vunpack.c.l.b16 %v1962
          %v2365 = vunpack.c.h.b16 %v1962
          %v2366 = vunpack.c.l.b16 %v1963
          %v2367 = vunpack.c.h.b16 %v1963
          %v2368 = vunpack.c.l.b16 %v1964
          %v2369 = vunpack.c.h.b16 %v1964
          %v2370 = vunpack.c.l.b16 %v1965
          %v2371 = vunpack.c.h.b16 %v1965
          %v2372 = vpack.c.b16 %v2120, %v2116
          %v2373 = vpack.c.b16 %v2121, %v2117
          %v2374 = vpack.c.b16 %v2122, %v2118
          %v2375 = vpack.c.b16 %v2123, %v2119
          %v2376 = vpack.c.b16 %v2128, %v2124
          %v2377 = vpack.c.b16 %v2129, %v2125
          %v2378 = vpack.c.b16 %v2130, %v2126
          %v2379 = vpack.c.b16 %v2131, %v2127
          %v2380 = vpack.c.b16 %v2136, %v2132
          %v2381 = vpack.c.b16 %v2137, %v2133
          %v2382 = vpack.c.b16 %v2138, %v2134
          %v2383 = vpack.c.b16 %v2139, %v2135
          %v2384 = vpack.c.b16 %v2144, %v2140
          %v2385 = vpack.c.b16 %v2145, %v2141
          %v2386 = vpack.c.b16 %v2146, %v2142
          %v2387 = vpack.c.b16 %v2147, %v2143
          %v2388 = vpack.c.b16 %v2152, %v2148
          %v2389 = vpack.c.b16 %v2153, %v2149
          %v2390 = vpack.c.b16 %v2154, %v2150
          %v2391 = vpack.c.b16 %v2155, %v2151
          %v2392 = vpack.c.b16 %v2160, %v2156
          %v2393 = vpack.c.b16 %v2161, %v2157
          %v2394 = vpack.c.b16 %v2162, %v2158
          %v2395 = vpack.c.b16 %v2163, %v2159
          %v2396 = vpack.c.b16 %v2168, %v2164
          %v2397 = vpack.c.b16 %v2169, %v2165
          %v2398 = vpack.c.b16 %v2170, %v2166
          %v2399 = vpack.c.b16 %v2171, %v2167
          %v2400 = vpack.c.b16 %v2176, %v2172
          %v2401 = vpack.c.b16 %v2177, %v2173
          %v2402 = vpack.c.b16 %v2178, %v2174
          %v2403 = vpack.c.b16 %v2179, %v2175
          %v2404 = vpack.c.b16 %v2184, %v2180
          %v2405 = vpack.c.b16 %v2185, %v2181
          %v2406 = vpack.c.b16 %v2186, %v2182
          %v2407 = vpack.c.b16 %v2187, %v2183
          %v2408 = vpack.c.b16 %v2192, %v2188
          %v2409 = vpack.c.b16 %v2193, %v2189
          %v2410 = vpack.c.b16 %v2194, %v2190
          %v2411 = vpack.c.b16 %v2195, %v2191
          %v2412 = vpack.c.b16 %v2200, %v2196
          %v2413 = vpack.c.b16 %v2201, %v2197
          %v2414 = vpack.c.b16 %v2202, %v2198
          %v2415 = vpack.c.b16 %v2203, %v2199
          %v2416 = vpack.c.b16 %v2208, %v2204
          %v2417 = vpack.c.b16 %v2209, %v2205
          %v2418 = vpack.c.b16 %v2210, %v2206
          %v2419 = vpack.c.b16 %v2211, %v2207
          %v2420 = vpack.c.b16 %v2216, %v2212
          %v2421 = vpack.c.b16 %v2217, %v2213
          %v2422 = vpack.c.b16 %v2218, %v2214
          %v2423 = vpack.c.b16 %v2219, %v2215
          %v2424 = vpack.c.b16 %v2224, %v2220
          %v2425 = vpack.c.b16 %v2225, %v2221
          %v2426 = vpack.c.b16 %v2226, %v2222
          %v2427 = vpack.c.b16 %v2227, %v2223
          %v2428 = vpack.c.b16 %v2232, %v2228
          %v2429 = vpack.c.b16 %v2233, %v2229
          %v2430 = vpack.c.b16 %v2234, %v2230
          %v2431 = vpack.c.b16 %v2235, %v2231
          %v2432 = vpack.c.b16 %v2240, %v2236
          %v2433 = vpack.c.b16 %v2241, %v2237
          %v2434 = vpack.c.b16 %v2242, %v2238
          %v2435 = vpack.c.b16 %v2243, %v2239
          %v2436 = vpack.c.b16 %v2248, %v2244
          %v2437 = vpack.c.b16 %v2249, %v2245
          %v2438 = vpack.c.b16 %v2250, %v2246
          %v2439 = vpack.c.b16 %v2251, %v2247
          %v2440 = vpack.c.b16 %v2256, %v2252
          %v2441 = vpack.c.b16 %v2257, %v2253
          %v2442 = vpack.c.b16 %v2258, %v2254
          %v2443 = vpack.c.b16 %v2259, %v2255
          %v2444 = vpack.c.b16 %v2264, %v2260
          %v2445 = vpack.c.b16 %v2265, %v2261
          %v2446 = vpack.c.b16 %v2266, %v2262
          %v2447 = vpack.c.b16 %v2267, %v2263
          %v2448 = vpack.c.b16 %v2272, %v2268
          %v2449 = vpack.c.b16 %v2273, %v2269
          %v2450 = vpack.c.b16 %v2274, %v2270
          %v2451 = vpack.c.b16 %v2275, %v2271
          %v2452 = vpack.c.b16 %v2280, %v2276
          %v2453 = vpack.c.b16 %v2281, %v2277
          %v2454 = vpack.c.b16 %v2282, %v2278
          %v2455 = vpack.c.b16 %v2283, %v2279
          %v2456 = vpack.c.b16 %v2288, %v2284
          %v2457 = vpack.c.b16 %v2289, %v2285
          %v2458 = vpack.c.b16 %v2290, %v2286
          %v2459 = vpack.c.b16 %v2291, %v2287
          %v2460 = vpack.c.b16 %v2296, %v2292
          %v2461 = vpack.c.b16 %v2297, %v2293
          %v2462 = vpack.c.b16 %v2298, %v2294
          %v2463 = vpack.c.b16 %v2299, %v2295
          %v2464 = vpack.c.b16 %v2304, %v2300
          %v2465 = vpack.c.b16 %v2305, %v2301
          %v2466 = vpack.c.b16 %v2306, %v2302
          %v2467 = vpack.c.b16 %v2307, %v2303
          %v2468 = vpack.c.b16 %v2312, %v2308
          %v2469 = vpack.c.b16 %v2313, %v2309
          %v2470 = vpack.c.b16 %v2314, %v2310
          %v2471 = vpack.c.b16 %v2315, %v2311
          %v2472 = vpack.c.b16 %v2320, %v2316
          %v2473 = vpack.c.b16 %v2321, %v2317
          %v2474 = vpack.c.b16 %v2322, %v2318
          %v2475 = vpack.c.b16 %v2323, %v2319
          %v2476 = vpack.c.b16 %v2328, %v2324
          %v2477 = vpack.c.b16 %v2329, %v2325
          %v2478 = vpack.c.b16 %v2330, %v2326
          %v2479 = vpack.c.b16 %v2331, %v2327
          %v2480 = vpack.c.b16 %v2336, %v2332
          %v2481 = vpack.c.b16 %v2337, %v2333
          %v2482 = vpack.c.b16 %v2338, %v2334
          %v2483 = vpack.c.b16 %v2339, %v2335
          %v2484 = vpack.c.b16 %v2344, %v2340
          %v2485 = vpack.c.b16 %v2345, %v2341
          %v2486 = vpack.c.b16 %v2346, %v2342
          %v2487 = vpack.c.b16 %v2347, %v2343
          %v2488 = vpack.c.b16 %v2352, %v2348
          %v2489 = vpack.c.b16 %v2353, %v2349
          %v2490 = vpack.c.b16 %v2354, %v2350
          %v2491 = vpack.c.b16 %v2355, %v2351
          %v2492 = vpack.c.b16 %v2360, %v2356
          %v2493 = vpack.c.b16 %v2361, %v2357
          %v2494 = vpack.c.b16 %v2362, %v2358
          %v2495 = vpack.c.b16 %v2363, %v2359
          %v2496 = vpack.c.b16 %v2368, %v2364
          %v2497 = vpack.c.b16 %v2369, %v2365
          %v2498 = vpack.c.b16 %v2370, %v2366
          %v2499 = vpack.c.b16 %v2371, %v2367
          %2628 = vmatprep.subr.bf16.mxu0 %v2401
          %2629 = vmatpush1.bf16.msra.mxu0 %v2400
          %2630 = vmatprep.subr.bf16.mxu0 %v2397
          %2631 = vmatpush1.bf16.msra.mxu0 %v2396
          %2632 = vmatprep.subr.bf16.mxu0 %v2393
          %2633 = vmatpush1.bf16.msra.mxu0 %v2392
          %2634 = vmatprep.subr.bf16.mxu0 %v2389
          %2635 = vmatpush1.bf16.msra.mxu0 %v2388
          %2636 = vmatprep.subr.bf16.mxu0 %v2385
          %2637 = vmatpush1.bf16.msra.mxu0 %v2384
          %2638 = vmatprep.subr.bf16.mxu0 %v2381
          %2639 = vmatpush1.bf16.msra.mxu0 %v2380
          %2640 = vmatprep.subr.bf16.mxu0 %v2377
          %2641 = vmatpush1.bf16.msra.mxu0 %v2376
          %2642 = vmatprep.subr.bf16.mxu0 %v2373
          %2643 = vmatpush1.bf16.msra.mxu0 %v2372
          %2644 = vmatprep.subr.bf16.mxu0 %v2433
          %2645 = vmatpush2.bf16.msra.mxu0 %v2432
          %2646 = vmatprep.subr.bf16.mxu0 %v2429
          %2647 = vmatpush2.bf16.msra.mxu0 %v2428
          %2648 = vmatprep.subr.bf16.mxu0 %v2425
          %2649 = vmatpush2.bf16.msra.mxu0 %v2424
          %2650 = vmatprep.subr.bf16.mxu0 %v2421
          %2651 = vmatpush2.bf16.msra.mxu0 %v2420
          %2652 = vmatprep.subr.bf16.mxu0 %v2417
          %2653 = vmatpush2.bf16.msra.mxu0 %v2416
          %2654 = vmatprep.subr.bf16.mxu0 %v2413
          %2655 = vmatpush2.bf16.msra.mxu0 %v2412
          %2656 = vmatprep.subr.bf16.mxu0 %v2409
          %2657 = vmatpush2.bf16.msra.mxu0 %v2408
          %2658 = vmatprep.subr.bf16.mxu0 %v2405
          %2659 = vmatpush2.bf16.msra.mxu0 %v2404
          %2660 = vmatprep.mubr.bf16.mxu0 %v1835
          %2661 = vmatmul.mubr.bf16.gmra.mxu0 %v1834
          %v2662 = vpop.f32.mrf.mxu0
          %v2663 = vadd.f32 %v1971, %v2662
          %v2664 = vpop.f32.mrf.mxu0
          %v2665 = vadd.f32 %v1975, %v2664
          %v2666 = vpop.f32.mrf.mxu0
          %v2667 = vpop.f32.mrf.mxu0
          %2668 = vdwg.mxu0
          %2669 = vmatprep.subr.bf16.mxu0 %v2465
          %2670 = vmatpush1.bf16.msra.mxu0 %v2464
          %2671 = vmatprep.subr.bf16.mxu0 %v2461
          %2672 = vmatpush1.bf16.msra.mxu0 %v2460
          %2673 = vmatprep.subr.bf16.mxu0 %v2457
          %2674 = vmatpush1.bf16.msra.mxu0 %v2456
          %2675 = vmatprep.subr.bf16.mxu0 %v2453
          %2676 = vmatpush1.bf16.msra.mxu0 %v2452
          %2677 = vmatprep.subr.bf16.mxu0 %v2449
          %2678 = vmatpush1.bf16.msra.mxu0 %v2448
          %2679 = vmatprep.subr.bf16.mxu0 %v2445
          %2680 = vmatpush1.bf16.msra.mxu0 %v2444
          %2681 = vmatprep.subr.bf16.mxu0 %v2441
          %2682 = vmatpush1.bf16.msra.mxu0 %v2440
          %2683 = vmatprep.subr.bf16.mxu0 %v2437
          %2684 = vmatpush1.bf16.msra.mxu0 %v2436
          %2685 = vmatprep.subr.bf16.mxu0 %v2497
          %2686 = vmatpush2.bf16.msra.mxu0 %v2496
          %2687 = vmatprep.subr.bf16.mxu0 %v2493
          %2688 = vmatpush2.bf16.msra.mxu0 %v2492
          %2689 = vmatprep.subr.bf16.mxu0 %v2489
          %2690 = vmatpush2.bf16.msra.mxu0 %v2488
          %2691 = vmatprep.subr.bf16.mxu0 %v2485
          %2692 = vmatpush2.bf16.msra.mxu0 %v2484
          %2693 = vmatprep.subr.bf16.mxu0 %v2481
          %2694 = vmatpush2.bf16.msra.mxu0 %v2480
          %2695 = vmatprep.subr.bf16.mxu0 %v2477
          %2696 = vmatpush2.bf16.msra.mxu0 %v2476
          %2697 = vmatprep.subr.bf16.mxu0 %v2473
          %2698 = vmatpush2.bf16.msra.mxu0 %v2472
          %2699 = vmatprep.subr.bf16.mxu0 %v2469
          %2700 = vmatpush2.bf16.msra.mxu0 %v2468
          %2701 = vmatprep.mubr.bf16.mxu0 %v1837
          %2702 = vmatmul.mubr.bf16.gmra.mxu0 %v1836
          %v2703 = vpop.f32.mrf.mxu0
          %v2704 = vadd.f32 %v2663, %v2703
          %v2705 = vpop.f32.mrf.mxu0
          %v2706 = vadd.f32 %v2665, %v2705
          %v2707 = vpop.f32.mrf.mxu0
          %v2708 = vpop.f32.mrf.mxu0
          %2709 = vdwg.mxu0
          %2710 = vmatprep.subr.bf16.mxu0 %v2403
          %2711 = vmatpush1.bf16.msra.mxu0 %v2402
          %2712 = vmatprep.subr.bf16.mxu0 %v2399
          %2713 = vmatpush1.bf16.msra.mxu0 %v2398
          %2714 = vmatprep.subr.bf16.mxu0 %v2395
          %2715 = vmatpush1.bf16.msra.mxu0 %v2394
          %2716 = vmatprep.subr.bf16.mxu0 %v2391
          %2717 = vmatpush1.bf16.msra.mxu0 %v2390
          %2718 = vmatprep.subr.bf16.mxu0 %v2387
          %2719 = vmatpush1.bf16.msra.mxu0 %v2386
          %2720 = vmatprep.subr.bf16.mxu0 %v2383
          %2721 = vmatpush1.bf16.msra.mxu0 %v2382
          %2722 = vmatprep.subr.bf16.mxu0 %v2379
          %2723 = vmatpush1.bf16.msra.mxu0 %v2378
          %2724 = vmatprep.subr.bf16.mxu0 %v2375
          %2725 = vmatpush1.bf16.msra.mxu0 %v2374
          %2726 = vmatprep.subr.bf16.mxu0 %v2435
          %2727 = vmatpush2.bf16.msra.mxu0 %v2434
          %2728 = vmatprep.subr.bf16.mxu0 %v2431
          %2729 = vmatpush2.bf16.msra.mxu0 %v2430
          %2730 = vmatprep.subr.bf16.mxu0 %v2427
          %2731 = vmatpush2.bf16.msra.mxu0 %v2426
          %2732 = vmatprep.subr.bf16.mxu0 %v2423
          %2733 = vmatpush2.bf16.msra.mxu0 %v2422
          %2734 = vmatprep.subr.bf16.mxu0 %v2419
          %2735 = vmatpush2.bf16.msra.mxu0 %v2418
          %2736 = vmatprep.subr.bf16.mxu0 %v2415
          %2737 = vmatpush2.bf16.msra.mxu0 %v2414
          %2738 = vmatprep.subr.bf16.mxu0 %v2411
          %2739 = vmatpush2.bf16.msra.mxu0 %v2410
          %2740 = vmatprep.subr.bf16.mxu0 %v2407
          %2741 = vmatpush2.bf16.msra.mxu0 %v2406
          %2742 = vmatprep.mubr.bf16.mxu0 %v1835
          %2743 = vmatmul.mubr.bf16.gmra.mxu0 %v1834
          %v2744 = vpop.f32.mrf.mxu0
          %v2745 = vadd.f32 %v1979, %v2744
          %v2746 = vpop.f32.mrf.mxu0
          %v2747 = vadd.f32 %v1983, %v2746
          %v2748 = vpop.f32.mrf.mxu0
          %v2749 = vpop.f32.mrf.mxu0
          %2750 = vdwg.mxu0
          %2751 = vmatprep.subr.bf16.mxu0 %v2467
          %2752 = vmatpush1.bf16.msra.mxu0 %v2466
          %2753 = vmatprep.subr.bf16.mxu0 %v2463
          %2754 = vmatpush1.bf16.msra.mxu0 %v2462
          %2755 = vmatprep.subr.bf16.mxu0 %v2459
          %2756 = vmatpush1.bf16.msra.mxu0 %v2458
          %2757 = vmatprep.subr.bf16.mxu0 %v2455
          %2758 = vmatpush1.bf16.msra.mxu0 %v2454
          %2759 = vmatprep.subr.bf16.mxu0 %v2451
          %2760 = vmatpush1.bf16.msra.mxu0 %v2450
          %2761 = vmatprep.subr.bf16.mxu0 %v2447
          %2762 = vmatpush1.bf16.msra.mxu0 %v2446
          %2763 = vmatprep.subr.bf16.mxu0 %v2443
          %2764 = vmatpush1.bf16.msra.mxu0 %v2442
          %2765 = vmatprep.subr.bf16.mxu0 %v2439
          %2766 = vmatpush1.bf16.msra.mxu0 %v2438
          %2767 = vmatprep.subr.bf16.mxu0 %v2499
          %2768 = vmatpush2.bf16.msra.mxu0 %v2498
          %2769 = vmatprep.subr.bf16.mxu0 %v2495
          %2770 = vmatpush2.bf16.msra.mxu0 %v2494
          %2771 = vmatprep.subr.bf16.mxu0 %v2491
          %2772 = vmatpush2.bf16.msra.mxu0 %v2490
          %2773 = vmatprep.subr.bf16.mxu0 %v2487
          %2774 = vmatpush2.bf16.msra.mxu0 %v2486
          %2775 = vmatprep.subr.bf16.mxu0 %v2483
          %2776 = vmatpush2.bf16.msra.mxu0 %v2482
          %2777 = vmatprep.subr.bf16.mxu0 %v2479
          %2778 = vmatpush2.bf16.msra.mxu0 %v2478
          %2779 = vmatprep.subr.bf16.mxu0 %v2475
          %2780 = vmatpush2.bf16.msra.mxu0 %v2474
          %2781 = vmatprep.subr.bf16.mxu0 %v2471
          %2782 = vmatpush2.bf16.msra.mxu0 %v2470
          %2783 = vmatprep.mubr.bf16.mxu0 %v1837
          %2784 = vmatmul.mubr.bf16.gmra.mxu0 %v1836
          %v2785 = vpop.f32.mrf.mxu0
          %v2786 = vadd.f32 %v2745, %v2785
          %v2787 = vpop.f32.mrf.mxu0
          %v2788 = vadd.f32 %v2747, %v2787
          %v2789 = vpop.f32.mrf.mxu0
          %v2790 = vpop.f32.mrf.mxu0
          %2791 = vdwg.mxu0
          %v2792 = vmax.f32 %v2704, 0.0
          %v2793 = vmax.f32 %v2706, 0.0
          %v2794 = vmax.f32 %v2786, 0.0
          %v2795 = vmax.f32 %v2788, 0.0
          %v2796 = vpack.c.bf16 %v2792, %v2792
          %v2797 = vpack.c.bf16 %v2793, %v2793
          %v2798 = vpack.c.bf16 %v2794, %v2794
          %v2799 = vpack.c.bf16 %v2795, %v2795
          %v2800 = vld [vmem:[#allocation13] sm:$0xff]
          %v2801 = vld [vmem:[#allocation13 + $0x8] sm:$0xff]
          %v2802 = vld [vmem:[#allocation13 + $0x10] sm:$0xff]
          %v2803 = vld [vmem:[#allocation13 + $0x18] sm:$0xff]
          %v2804 = vld [vmem:[#allocation13 + $0x20] sm:$0xff]
          %v2805 = vld [vmem:[#allocation13 + $0x28] sm:$0xff]
          %v2806 = vld [vmem:[#allocation13 + $0x30] sm:$0xff]
          %v2807 = vld [vmem:[#allocation13 + $0x38] sm:$0xff]
          %v2808 = vld [vmem:[#allocation13 + $0x40] sm:$0xff]
          %v2809 = vld [vmem:[#allocation13 + $0x48] sm:$0xff]
          %v2810 = vld [vmem:[#allocation13 + $0x50] sm:$0xff]
          %v2811 = vld [vmem:[#allocation13 + $0x58] sm:$0xff]
          %v2812 = vld [vmem:[#allocation13 + $0x60] sm:$0xff]
          %v2813 = vld [vmem:[#allocation13 + $0x68] sm:$0xff]
          %v2814 = vld [vmem:[#allocation13 + $0x70] sm:$0xff]
          %v2815 = vld [vmem:[#allocation13 + $0x78] sm:$0xff]
          %v2816 = vld [vmem:[#allocation13 + $0x80] sm:$0xff]
          %v2817 = vld [vmem:[#allocation13 + $0x88] sm:$0xff]
          %v2818 = vld [vmem:[#allocation13 + $0x90] sm:$0xff]
          %v2819 = vld [vmem:[#allocation13 + $0x98] sm:$0xff]
          %v2820 = vld [vmem:[#allocation13 + $0xa0] sm:$0xff]
          %v2821 = vld [vmem:[#allocation13 + $0xa8] sm:$0xff]
          %v2822 = vld [vmem:[#allocation13 + $0xb0] sm:$0xff]
          %v2823 = vld [vmem:[#allocation13 + $0xb8] sm:$0xff]
          %v2824 = vld [vmem:[#allocation13 + $0xc0] sm:$0xff]
          %v2825 = vld [vmem:[#allocation13 + $0xc8] sm:$0xff]
          %v2826 = vld [vmem:[#allocation13 + $0xd0] sm:$0xff]
          %v2827 = vld [vmem:[#allocation13 + $0xd8] sm:$0xff]
          %v2828 = vld [vmem:[#allocation13 + $0xe0] sm:$0xff]
          %v2829 = vld [vmem:[#allocation13 + $0xe8] sm:$0xff]
          %v2830 = vld [vmem:[#allocation13 + $0xf0] sm:$0xff]
          %v2831 = vld [vmem:[#allocation13 + $0xf8] sm:$0xff]
          %v2832 = vld [vmem:[#allocation13 + $0x100] sm:$0xff]
          %v2833 = vld [vmem:[#allocation13 + $0x108] sm:$0xff]
          %v2834 = vld [vmem:[#allocation13 + $0x110] sm:$0xff]
          %v2835 = vld [vmem:[#allocation13 + $0x118] sm:$0xff]
          %v2836 = vld [vmem:[#allocation13 + $0x120] sm:$0xff]
          %v2837 = vld [vmem:[#allocation13 + $0x128] sm:$0xff]
          %v2838 = vld [vmem:[#allocation13 + $0x130] sm:$0xff]
          %v2839 = vld [vmem:[#allocation13 + $0x138] sm:$0xff]
          %v2840 = vld [vmem:[#allocation13 + $0x140] sm:$0xff]
          %v2841 = vld [vmem:[#allocation13 + $0x148] sm:$0xff]
          %v2842 = vld [vmem:[#allocation13 + $0x150] sm:$0xff]
          %v2843 = vld [vmem:[#allocation13 + $0x158] sm:$0xff]
          %v2844 = vld [vmem:[#allocation13 + $0x160] sm:$0xff]
          %v2845 = vld [vmem:[#allocation13 + $0x168] sm:$0xff]
          %v2846 = vld [vmem:[#allocation13 + $0x170] sm:$0xff]
          %v2847 = vld [vmem:[#allocation13 + $0x178] sm:$0xff]
          %v2848 = vld [vmem:[#allocation13 + $0x180] sm:$0xff]
          %v2849 = vld [vmem:[#allocation13 + $0x188] sm:$0xff]
          %v2850 = vld [vmem:[#allocation13 + $0x190] sm:$0xff]
          %v2851 = vld [vmem:[#allocation13 + $0x198] sm:$0xff]
          %v2852 = vld [vmem:[#allocation13 + $0x1a0] sm:$0xff]
          %v2853 = vld [vmem:[#allocation13 + $0x1a8] sm:$0xff]
          %v2854 = vld [vmem:[#allocation13 + $0x1b0] sm:$0xff]
          %v2855 = vld [vmem:[#allocation13 + $0x1b8] sm:$0xff]
          %v2856 = vld [vmem:[#allocation13 + $0x1c0] sm:$0xff]
          %v2857 = vld [vmem:[#allocation13 + $0x1c8] sm:$0xff]
          %v2858 = vld [vmem:[#allocation13 + $0x1d0] sm:$0xff]
          %v2859 = vld [vmem:[#allocation13 + $0x1d8] sm:$0xff]
          %v2860 = vld [vmem:[#allocation13 + $0x1e0] sm:$0xff]
          %v2861 = vld [vmem:[#allocation13 + $0x1e8] sm:$0xff]
          %v2862 = vld [vmem:[#allocation13 + $0x1f0] sm:$0xff]
          %v2863 = vld [vmem:[#allocation13 + $0x1f8] sm:$0xff]
          %v2864 = vld [vmem:[#allocation13 + $0x200] sm:$0xff]
          %v2865 = vld [vmem:[#allocation13 + $0x208] sm:$0xff]
          %v2866 = vld [vmem:[#allocation13 + $0x210] sm:$0xff]
          %v2867 = vld [vmem:[#allocation13 + $0x218] sm:$0xff]
          %v2868 = vld [vmem:[#allocation13 + $0x220] sm:$0xff]
          %v2869 = vld [vmem:[#allocation13 + $0x228] sm:$0xff]
          %v2870 = vld [vmem:[#allocation13 + $0x230] sm:$0xff]
          %v2871 = vld [vmem:[#allocation13 + $0x238] sm:$0xff]
          %v2872 = vld [vmem:[#allocation13 + $0x240] sm:$0xff]
          %v2873 = vld [vmem:[#allocation13 + $0x248] sm:$0xff]
          %v2874 = vld [vmem:[#allocation13 + $0x250] sm:$0xff]
          %v2875 = vld [vmem:[#allocation13 + $0x258] sm:$0xff]
          %v2876 = vld [vmem:[#allocation13 + $0x260] sm:$0xff]
          %v2877 = vld [vmem:[#allocation13 + $0x268] sm:$0xff]
          %v2878 = vld [vmem:[#allocation13 + $0x270] sm:$0xff]
          %v2879 = vld [vmem:[#allocation13 + $0x278] sm:$0xff]
          %v2880 = vld [vmem:[#allocation13 + $0x280] sm:$0xff]
          %v2881 = vld [vmem:[#allocation13 + $0x288] sm:$0xff]
          %v2882 = vld [vmem:[#allocation13 + $0x290] sm:$0xff]
          %v2883 = vld [vmem:[#allocation13 + $0x298] sm:$0xff]
          %v2884 = vld [vmem:[#allocation13 + $0x2a0] sm:$0xff]
          %v2885 = vld [vmem:[#allocation13 + $0x2a8] sm:$0xff]
          %v2886 = vld [vmem:[#allocation13 + $0x2b0] sm:$0xff]
          %v2887 = vld [vmem:[#allocation13 + $0x2b8] sm:$0xff]
          %v2888 = vld [vmem:[#allocation13 + $0x2c0] sm:$0xff]
          %v2889 = vld [vmem:[#allocation13 + $0x2c8] sm:$0xff]
          %v2890 = vld [vmem:[#allocation13 + $0x2d0] sm:$0xff]
          %v2891 = vld [vmem:[#allocation13 + $0x2d8] sm:$0xff]
          %v2892 = vld [vmem:[#allocation13 + $0x2e0] sm:$0xff]
          %v2893 = vld [vmem:[#allocation13 + $0x2e8] sm:$0xff]
          %v2894 = vld [vmem:[#allocation13 + $0x2f0] sm:$0xff]
          %v2895 = vld [vmem:[#allocation13 + $0x2f8] sm:$0xff]
          %v2896 = vld [vmem:[#allocation13 + $0x300] sm:$0xff]
          %v2897 = vld [vmem:[#allocation13 + $0x308] sm:$0xff]
          %v2898 = vld [vmem:[#allocation13 + $0x310] sm:$0xff]
          %v2899 = vld [vmem:[#allocation13 + $0x318] sm:$0xff]
          %v2900 = vld [vmem:[#allocation13 + $0x320] sm:$0xff]
          %v2901 = vld [vmem:[#allocation13 + $0x328] sm:$0xff]
          %v2902 = vld [vmem:[#allocation13 + $0x330] sm:$0xff]
          %v2903 = vld [vmem:[#allocation13 + $0x338] sm:$0xff]
          %v2904 = vld [vmem:[#allocation13 + $0x340] sm:$0xff]
          %v2905 = vld [vmem:[#allocation13 + $0x348] sm:$0xff]
          %v2906 = vld [vmem:[#allocation13 + $0x350] sm:$0xff]
          %v2907 = vld [vmem:[#allocation13 + $0x358] sm:$0xff]
          %v2908 = vld [vmem:[#allocation13 + $0x360] sm:$0xff]
          %v2909 = vld [vmem:[#allocation13 + $0x368] sm:$0xff]
          %v2910 = vld [vmem:[#allocation13 + $0x370] sm:$0xff]
          %v2911 = vld [vmem:[#allocation13 + $0x378] sm:$0xff]
          %v2912 = vld [vmem:[#allocation13 + $0x380] sm:$0xff]
          %v2913 = vld [vmem:[#allocation13 + $0x388] sm:$0xff]
          %v2914 = vld [vmem:[#allocation13 + $0x390] sm:$0xff]
          %v2915 = vld [vmem:[#allocation13 + $0x398] sm:$0xff]
          %v2916 = vld [vmem:[#allocation13 + $0x3a0] sm:$0xff]
          %v2917 = vld [vmem:[#allocation13 + $0x3a8] sm:$0xff]
          %v2918 = vld [vmem:[#allocation13 + $0x3b0] sm:$0xff]
          %v2919 = vld [vmem:[#allocation13 + $0x3b8] sm:$0xff]
          %v2920 = vld [vmem:[#allocation13 + $0x3c0] sm:$0xff]
          %v2921 = vld [vmem:[#allocation13 + $0x3c8] sm:$0xff]
          %v2922 = vld [vmem:[#allocation13 + $0x3d0] sm:$0xff]
          %v2923 = vld [vmem:[#allocation13 + $0x3d8] sm:$0xff]
          %v2924 = vld [vmem:[#allocation13 + $0x3e0] sm:$0xff]
          %v2925 = vld [vmem:[#allocation13 + $0x3e8] sm:$0xff]
          %v2926 = vld [vmem:[#allocation13 + $0x3f0] sm:$0xff]
          %v2927 = vld [vmem:[#allocation13 + $0x3f8] sm:$0xff]
          %v2928 = vld [vmem:[#allocation15] sm:$0xf]
          %v2930 = vlaneseq
          %v2931 = vshrl.u32 %v2930, 7
          %v2932 = vsub.s32 0, %v2931
          %v2933 = vrot.slane %v2928, %v2932
          %v2934 = vlaneseq
          %v2935 = vshrl.u32 %v2934, 7
          %v2936 = vsub.s32 1, %v2935
          %v2937 = vrot.slane %v2928, %v2936
          %v2938 = vlaneseq
          %v2939 = vshrl.u32 %v2938, 7
          %v2940 = vsub.s32 2, %v2939
          %v2941 = vrot.slane %v2928, %v2940
          %v2942 = vlaneseq
          %v2943 = vshrl.u32 %v2942, 7
          %v2944 = vsub.s32 3, %v2943
          %v2945 = vrot.slane %v2928, %v2944
          %v3078 = vunpack.c.l.b16 %v2800
          %v3079 = vunpack.c.h.b16 %v2800
          %v3080 = vunpack.c.l.b16 %v2801
          %v3081 = vunpack.c.h.b16 %v2801
          %v3082 = vunpack.c.l.b16 %v2802
          %v3083 = vunpack.c.h.b16 %v2802
          %v3084 = vunpack.c.l.b16 %v2803
          %v3085 = vunpack.c.h.b16 %v2803
          %v3086 = vunpack.c.l.b16 %v2804
          %v3087 = vunpack.c.h.b16 %v2804
          %v3088 = vunpack.c.l.b16 %v2805
          %v3089 = vunpack.c.h.b16 %v2805
          %v3090 = vunpack.c.l.b16 %v2806
          %v3091 = vunpack.c.h.b16 %v2806
          %v3092 = vunpack.c.l.b16 %v2807
          %v3093 = vunpack.c.h.b16 %v2807
          %v3094 = vunpack.c.l.b16 %v2808
          %v3095 = vunpack.c.h.b16 %v2808
          %v3096 = vunpack.c.l.b16 %v2809
          %v3097 = vunpack.c.h.b16 %v2809
          %v3098 = vunpack.c.l.b16 %v2810
          %v3099 = vunpack.c.h.b16 %v2810
          %v3100 = vunpack.c.l.b16 %v2811
          %v3101 = vunpack.c.h.b16 %v2811
          %v3102 = vunpack.c.l.b16 %v2812
          %v3103 = vunpack.c.h.b16 %v2812
          %v3104 = vunpack.c.l.b16 %v2813
          %v3105 = vunpack.c.h.b16 %v2813
          %v3106 = vunpack.c.l.b16 %v2814
          %v3107 = vunpack.c.h.b16 %v2814
          %v3108 = vunpack.c.l.b16 %v2815
          %v3109 = vunpack.c.h.b16 %v2815
          %v3110 = vunpack.c.l.b16 %v2816
          %v3111 = vunpack.c.h.b16 %v2816
          %v3112 = vunpack.c.l.b16 %v2817
          %v3113 = vunpack.c.h.b16 %v2817
          %v3114 = vunpack.c.l.b16 %v2818
          %v3115 = vunpack.c.h.b16 %v2818
          %v3116 = vunpack.c.l.b16 %v2819
          %v3117 = vunpack.c.h.b16 %v2819
          %v3118 = vunpack.c.l.b16 %v2820
          %v3119 = vunpack.c.h.b16 %v2820
          %v3120 = vunpack.c.l.b16 %v2821
          %v3121 = vunpack.c.h.b16 %v2821
          %v3122 = vunpack.c.l.b16 %v2822
          %v3123 = vunpack.c.h.b16 %v2822
          %v3124 = vunpack.c.l.b16 %v2823
          %v3125 = vunpack.c.h.b16 %v2823
          %v3126 = vunpack.c.l.b16 %v2824
          %v3127 = vunpack.c.h.b16 %v2824
          %v3128 = vunpack.c.l.b16 %v2825
          %v3129 = vunpack.c.h.b16 %v2825
          %v3130 = vunpack.c.l.b16 %v2826
          %v3131 = vunpack.c.h.b16 %v2826
          %v3132 = vunpack.c.l.b16 %v2827
          %v3133 = vunpack.c.h.b16 %v2827
          %v3134 = vunpack.c.l.b16 %v2828
          %v3135 = vunpack.c.h.b16 %v2828
          %v3136 = vunpack.c.l.b16 %v2829
          %v3137 = vunpack.c.h.b16 %v2829
          %v3138 = vunpack.c.l.b16 %v2830
          %v3139 = vunpack.c.h.b16 %v2830
          %v3140 = vunpack.c.l.b16 %v2831
          %v3141 = vunpack.c.h.b16 %v2831
          %v3142 = vunpack.c.l.b16 %v2832
          %v3143 = vunpack.c.h.b16 %v2832
          %v3144 = vunpack.c.l.b16 %v2833
          %v3145 = vunpack.c.h.b16 %v2833
          %v3146 = vunpack.c.l.b16 %v2834
          %v3147 = vunpack.c.h.b16 %v2834
          %v3148 = vunpack.c.l.b16 %v2835
          %v3149 = vunpack.c.h.b16 %v2835
          %v3150 = vunpack.c.l.b16 %v2836
          %v3151 = vunpack.c.h.b16 %v2836
          %v3152 = vunpack.c.l.b16 %v2837
          %v3153 = vunpack.c.h.b16 %v2837
          %v3154 = vunpack.c.l.b16 %v2838
          %v3155 = vunpack.c.h.b16 %v2838
          %v3156 = vunpack.c.l.b16 %v2839
          %v3157 = vunpack.c.h.b16 %v2839
          %v3158 = vunpack.c.l.b16 %v2840
          %v3159 = vunpack.c.h.b16 %v2840
          %v3160 = vunpack.c.l.b16 %v2841
          %v3161 = vunpack.c.h.b16 %v2841
          %v3162 = vunpack.c.l.b16 %v2842
          %v3163 = vunpack.c.h.b16 %v2842
          %v3164 = vunpack.c.l.b16 %v2843
          %v3165 = vunpack.c.h.b16 %v2843
          %v3166 = vunpack.c.l.b16 %v2844
          %v3167 = vunpack.c.h.b16 %v2844
          %v3168 = vunpack.c.l.b16 %v2845
          %v3169 = vunpack.c.h.b16 %v2845
          %v3170 = vunpack.c.l.b16 %v2846
          %v3171 = vunpack.c.h.b16 %v2846
          %v3172 = vunpack.c.l.b16 %v2847
          %v3173 = vunpack.c.h.b16 %v2847
          %v3174 = vunpack.c.l.b16 %v2848
          %v3175 = vunpack.c.h.b16 %v2848
          %v3176 = vunpack.c.l.b16 %v2849
          %v3177 = vunpack.c.h.b16 %v2849
          %v3178 = vunpack.c.l.b16 %v2850
          %v3179 = vunpack.c.h.b16 %v2850
          %v3180 = vunpack.c.l.b16 %v2851
          %v3181 = vunpack.c.h.b16 %v2851
          %v3182 = vunpack.c.l.b16 %v2852
          %v3183 = vunpack.c.h.b16 %v2852
          %v3184 = vunpack.c.l.b16 %v2853
          %v3185 = vunpack.c.h.b16 %v2853
          %v3186 = vunpack.c.l.b16 %v2854
          %v3187 = vunpack.c.h.b16 %v2854
          %v3188 = vunpack.c.l.b16 %v2855
          %v3189 = vunpack.c.h.b16 %v2855
          %v3190 = vunpack.c.l.b16 %v2856
          %v3191 = vunpack.c.h.b16 %v2856
          %v3192 = vunpack.c.l.b16 %v2857
          %v3193 = vunpack.c.h.b16 %v2857
          %v3194 = vunpack.c.l.b16 %v2858
          %v3195 = vunpack.c.h.b16 %v2858
          %v3196 = vunpack.c.l.b16 %v2859
          %v3197 = vunpack.c.h.b16 %v2859
          %v3198 = vunpack.c.l.b16 %v2860
          %v3199 = vunpack.c.h.b16 %v2860
          %v3200 = vunpack.c.l.b16 %v2861
          %v3201 = vunpack.c.h.b16 %v2861
          %v3202 = vunpack.c.l.b16 %v2862
          %v3203 = vunpack.c.h.b16 %v2862
          %v3204 = vunpack.c.l.b16 %v2863
          %v3205 = vunpack.c.h.b16 %v2863
          %v3206 = vunpack.c.l.b16 %v2864
          %v3207 = vunpack.c.h.b16 %v2864
          %v3208 = vunpack.c.l.b16 %v2865
          %v3209 = vunpack.c.h.b16 %v2865
          %v3210 = vunpack.c.l.b16 %v2866
          %v3211 = vunpack.c.h.b16 %v2866
          %v3212 = vunpack.c.l.b16 %v2867
          %v3213 = vunpack.c.h.b16 %v2867
          %v3214 = vunpack.c.l.b16 %v2868
          %v3215 = vunpack.c.h.b16 %v2868
          %v3216 = vunpack.c.l.b16 %v2869
          %v3217 = vunpack.c.h.b16 %v2869
          %v3218 = vunpack.c.l.b16 %v2870
          %v3219 = vunpack.c.h.b16 %v2870
          %v3220 = vunpack.c.l.b16 %v2871
          %v3221 = vunpack.c.h.b16 %v2871
          %v3222 = vunpack.c.l.b16 %v2872
          %v3223 = vunpack.c.h.b16 %v2872
          %v3224 = vunpack.c.l.b16 %v2873
          %v3225 = vunpack.c.h.b16 %v2873
          %v3226 = vunpack.c.l.b16 %v2874
          %v3227 = vunpack.c.h.b16 %v2874
          %v3228 = vunpack.c.l.b16 %v2875
          %v3229 = vunpack.c.h.b16 %v2875
          %v3230 = vunpack.c.l.b16 %v2876
          %v3231 = vunpack.c.h.b16 %v2876
          %v3232 = vunpack.c.l.b16 %v2877
          %v3233 = vunpack.c.h.b16 %v2877
          %v3234 = vunpack.c.l.b16 %v2878
          %v3235 = vunpack.c.h.b16 %v2878
          %v3236 = vunpack.c.l.b16 %v2879
          %v3237 = vunpack.c.h.b16 %v2879
          %v3238 = vunpack.c.l.b16 %v2880
          %v3239 = vunpack.c.h.b16 %v2880
          %v3240 = vunpack.c.l.b16 %v2881
          %v3241 = vunpack.c.h.b16 %v2881
          %v3242 = vunpack.c.l.b16 %v2882
          %v3243 = vunpack.c.h.b16 %v2882
          %v3244 = vunpack.c.l.b16 %v2883
          %v3245 = vunpack.c.h.b16 %v2883
          %v3246 = vunpack.c.l.b16 %v2884
          %v3247 = vunpack.c.h.b16 %v2884
          %v3248 = vunpack.c.l.b16 %v2885
          %v3249 = vunpack.c.h.b16 %v2885
          %v3250 = vunpack.c.l.b16 %v2886
          %v3251 = vunpack.c.h.b16 %v2886
          %v3252 = vunpack.c.l.b16 %v2887
          %v3253 = vunpack.c.h.b16 %v2887
          %v3254 = vunpack.c.l.b16 %v2888
          %v3255 = vunpack.c.h.b16 %v2888
          %v3256 = vunpack.c.l.b16 %v2889
          %v3257 = vunpack.c.h.b16 %v2889
          %v3258 = vunpack.c.l.b16 %v2890
          %v3259 = vunpack.c.h.b16 %v2890
          %v3260 = vunpack.c.l.b16 %v2891
          %v3261 = vunpack.c.h.b16 %v2891
          %v3262 = vunpack.c.l.b16 %v2892
          %v3263 = vunpack.c.h.b16 %v2892
          %v3264 = vunpack.c.l.b16 %v2893
          %v3265 = vunpack.c.h.b16 %v2893
          %v3266 = vunpack.c.l.b16 %v2894
          %v3267 = vunpack.c.h.b16 %v2894
          %v3268 = vunpack.c.l.b16 %v2895
          %v3269 = vunpack.c.h.b16 %v2895
          %v3270 = vunpack.c.l.b16 %v2896
          %v3271 = vunpack.c.h.b16 %v2896
          %v3272 = vunpack.c.l.b16 %v2897
          %v3273 = vunpack.c.h.b16 %v2897
          %v3274 = vunpack.c.l.b16 %v2898
          %v3275 = vunpack.c.h.b16 %v2898
          %v3276 = vunpack.c.l.b16 %v2899
          %v3277 = vunpack.c.h.b16 %v2899
          %v3278 = vunpack.c.l.b16 %v2900
          %v3279 = vunpack.c.h.b16 %v2900
          %v3280 = vunpack.c.l.b16 %v2901
          %v3281 = vunpack.c.h.b16 %v2901
          %v3282 = vunpack.c.l.b16 %v2902
          %v3283 = vunpack.c.h.b16 %v2902
          %v3284 = vunpack.c.l.b16 %v2903
          %v3285 = vunpack.c.h.b16 %v2903
          %v3286 = vunpack.c.l.b16 %v2904
          %v3287 = vunpack.c.h.b16 %v2904
          %v3288 = vunpack.c.l.b16 %v2905
          %v3289 = vunpack.c.h.b16 %v2905
          %v3290 = vunpack.c.l.b16 %v2906
          %v3291 = vunpack.c.h.b16 %v2906
          %v3292 = vunpack.c.l.b16 %v2907
          %v3293 = vunpack.c.h.b16 %v2907
          %v3294 = vunpack.c.l.b16 %v2908
          %v3295 = vunpack.c.h.b16 %v2908
          %v3296 = vunpack.c.l.b16 %v2909
          %v3297 = vunpack.c.h.b16 %v2909
          %v3298 = vunpack.c.l.b16 %v2910
          %v3299 = vunpack.c.h.b16 %v2910
          %v3300 = vunpack.c.l.b16 %v2911
          %v3301 = vunpack.c.h.b16 %v2911
          %v3302 = vunpack.c.l.b16 %v2912
          %v3303 = vunpack.c.h.b16 %v2912
          %v3304 = vunpack.c.l.b16 %v2913
          %v3305 = vunpack.c.h.b16 %v2913
          %v3306 = vunpack.c.l.b16 %v2914
          %v3307 = vunpack.c.h.b16 %v2914
          %v3308 = vunpack.c.l.b16 %v2915
          %v3309 = vunpack.c.h.b16 %v2915
          %v3310 = vunpack.c.l.b16 %v2916
          %v3311 = vunpack.c.h.b16 %v2916
          %v3312 = vunpack.c.l.b16 %v2917
          %v3313 = vunpack.c.h.b16 %v2917
          %v3314 = vunpack.c.l.b16 %v2918
          %v3315 = vunpack.c.h.b16 %v2918
          %v3316 = vunpack.c.l.b16 %v2919
          %v3317 = vunpack.c.h.b16 %v2919
          %v3318 = vunpack.c.l.b16 %v2920
          %v3319 = vunpack.c.h.b16 %v2920
          %v3320 = vunpack.c.l.b16 %v2921
          %v3321 = vunpack.c.h.b16 %v2921
          %v3322 = vunpack.c.l.b16 %v2922
          %v3323 = vunpack.c.h.b16 %v2922
          %v3324 = vunpack.c.l.b16 %v2923
          %v3325 = vunpack.c.h.b16 %v2923
          %v3326 = vunpack.c.l.b16 %v2924
          %v3327 = vunpack.c.h.b16 %v2924
          %v3328 = vunpack.c.l.b16 %v2925
          %v3329 = vunpack.c.h.b16 %v2925
          %v3330 = vunpack.c.l.b16 %v2926
          %v3331 = vunpack.c.h.b16 %v2926
          %v3332 = vunpack.c.l.b16 %v2927
          %v3333 = vunpack.c.h.b16 %v2927
          %v3334 = vpack.c.b16 %v3082, %v3078
          %v3335 = vpack.c.b16 %v3083, %v3079
          %v3336 = vpack.c.b16 %v3084, %v3080
          %v3337 = vpack.c.b16 %v3085, %v3081
          %v3338 = vpack.c.b16 %v3090, %v3086
          %v3339 = vpack.c.b16 %v3091, %v3087
          %v3340 = vpack.c.b16 %v3092, %v3088
          %v3341 = vpack.c.b16 %v3093, %v3089
          %v3342 = vpack.c.b16 %v3098, %v3094
          %v3343 = vpack.c.b16 %v3099, %v3095
          %v3344 = vpack.c.b16 %v3100, %v3096
          %v3345 = vpack.c.b16 %v3101, %v3097
          %v3346 = vpack.c.b16 %v3106, %v3102
          %v3347 = vpack.c.b16 %v3107, %v3103
          %v3348 = vpack.c.b16 %v3108, %v3104
          %v3349 = vpack.c.b16 %v3109, %v3105
          %v3350 = vpack.c.b16 %v3114, %v3110
          %v3351 = vpack.c.b16 %v3115, %v3111
          %v3352 = vpack.c.b16 %v3116, %v3112
          %v3353 = vpack.c.b16 %v3117, %v3113
          %v3354 = vpack.c.b16 %v3122, %v3118
          %v3355 = vpack.c.b16 %v3123, %v3119
          %v3356 = vpack.c.b16 %v3124, %v3120
          %v3357 = vpack.c.b16 %v3125, %v3121
          %v3358 = vpack.c.b16 %v3130, %v3126
          %v3359 = vpack.c.b16 %v3131, %v3127
          %v3360 = vpack.c.b16 %v3132, %v3128
          %v3361 = vpack.c.b16 %v3133, %v3129
          %v3362 = vpack.c.b16 %v3138, %v3134
          %v3363 = vpack.c.b16 %v3139, %v3135
          %v3364 = vpack.c.b16 %v3140, %v3136
          %v3365 = vpack.c.b16 %v3141, %v3137
          %v3366 = vpack.c.b16 %v3146, %v3142
          %v3367 = vpack.c.b16 %v3147, %v3143
          %v3368 = vpack.c.b16 %v3148, %v3144
          %v3369 = vpack.c.b16 %v3149, %v3145
          %v3370 = vpack.c.b16 %v3154, %v3150
          %v3371 = vpack.c.b16 %v3155, %v3151
          %v3372 = vpack.c.b16 %v3156, %v3152
          %v3373 = vpack.c.b16 %v3157, %v3153
          %v3374 = vpack.c.b16 %v3162, %v3158
          %v3375 = vpack.c.b16 %v3163, %v3159
          %v3376 = vpack.c.b16 %v3164, %v3160
          %v3377 = vpack.c.b16 %v3165, %v3161
          %v3378 = vpack.c.b16 %v3170, %v3166
          %v3379 = vpack.c.b16 %v3171, %v3167
          %v3380 = vpack.c.b16 %v3172, %v3168
          %v3381 = vpack.c.b16 %v3173, %v3169
          %v3382 = vpack.c.b16 %v3178, %v3174
          %v3383 = vpack.c.b16 %v3179, %v3175
          %v3384 = vpack.c.b16 %v3180, %v3176
          %v3385 = vpack.c.b16 %v3181, %v3177
          %v3386 = vpack.c.b16 %v3186, %v3182
          %v3387 = vpack.c.b16 %v3187, %v3183
          %v3388 = vpack.c.b16 %v3188, %v3184
          %v3389 = vpack.c.b16 %v3189, %v3185
          %v3390 = vpack.c.b16 %v3194, %v3190
          %v3391 = vpack.c.b16 %v3195, %v3191
          %v3392 = vpack.c.b16 %v3196, %v3192
          %v3393 = vpack.c.b16 %v3197, %v3193
          %v3394 = vpack.c.b16 %v3202, %v3198
          %v3395 = vpack.c.b16 %v3203, %v3199
          %v3396 = vpack.c.b16 %v3204, %v3200
          %v3397 = vpack.c.b16 %v3205, %v3201
          %v3398 = vpack.c.b16 %v3210, %v3206
          %v3399 = vpack.c.b16 %v3211, %v3207
          %v3400 = vpack.c.b16 %v3212, %v3208
          %v3401 = vpack.c.b16 %v3213, %v3209
          %v3402 = vpack.c.b16 %v3218, %v3214
          %v3403 = vpack.c.b16 %v3219, %v3215
          %v3404 = vpack.c.b16 %v3220, %v3216
          %v3405 = vpack.c.b16 %v3221, %v3217
          %v3406 = vpack.c.b16 %v3226, %v3222
          %v3407 = vpack.c.b16 %v3227, %v3223
          %v3408 = vpack.c.b16 %v3228, %v3224
          %v3409 = vpack.c.b16 %v3229, %v3225
          %v3410 = vpack.c.b16 %v3234, %v3230
          %v3411 = vpack.c.b16 %v3235, %v3231
          %v3412 = vpack.c.b16 %v3236, %v3232
          %v3413 = vpack.c.b16 %v3237, %v3233
          %v3414 = vpack.c.b16 %v3242, %v3238
          %v3415 = vpack.c.b16 %v3243, %v3239
          %v3416 = vpack.c.b16 %v3244, %v3240
          %v3417 = vpack.c.b16 %v3245, %v3241
          %v3418 = vpack.c.b16 %v3250, %v3246
          %v3419 = vpack.c.b16 %v3251, %v3247
          %v3420 = vpack.c.b16 %v3252, %v3248
          %v3421 = vpack.c.b16 %v3253, %v3249
          %v3422 = vpack.c.b16 %v3258, %v3254
          %v3423 = vpack.c.b16 %v3259, %v3255
          %v3424 = vpack.c.b16 %v3260, %v3256
          %v3425 = vpack.c.b16 %v3261, %v3257
          %v3426 = vpack.c.b16 %v3266, %v3262
          %v3427 = vpack.c.b16 %v3267, %v3263
          %v3428 = vpack.c.b16 %v3268, %v3264
          %v3429 = vpack.c.b16 %v3269, %v3265
          %v3430 = vpack.c.b16 %v3274, %v3270
          %v3431 = vpack.c.b16 %v3275, %v3271
          %v3432 = vpack.c.b16 %v3276, %v3272
          %v3433 = vpack.c.b16 %v3277, %v3273
          %v3434 = vpack.c.b16 %v3282, %v3278
          %v3435 = vpack.c.b16 %v3283, %v3279
          %v3436 = vpack.c.b16 %v3284, %v3280
          %v3437 = vpack.c.b16 %v3285, %v3281
          %v3438 = vpack.c.b16 %v3290, %v3286
          %v3439 = vpack.c.b16 %v3291, %v3287
          %v3440 = vpack.c.b16 %v3292, %v3288
          %v3441 = vpack.c.b16 %v3293, %v3289
          %v3442 = vpack.c.b16 %v3298, %v3294
          %v3443 = vpack.c.b16 %v3299, %v3295
          %v3444 = vpack.c.b16 %v3300, %v3296
          %v3445 = vpack.c.b16 %v3301, %v3297
          %v3446 = vpack.c.b16 %v3306, %v3302
          %v3447 = vpack.c.b16 %v3307, %v3303
          %v3448 = vpack.c.b16 %v3308, %v3304
          %v3449 = vpack.c.b16 %v3309, %v3305
          %v3450 = vpack.c.b16 %v3314, %v3310
          %v3451 = vpack.c.b16 %v3315, %v3311
          %v3452 = vpack.c.b16 %v3316, %v3312
          %v3453 = vpack.c.b16 %v3317, %v3313
          %v3454 = vpack.c.b16 %v3322, %v3318
          %v3455 = vpack.c.b16 %v3323, %v3319
          %v3456 = vpack.c.b16 %v3324, %v3320
          %v3457 = vpack.c.b16 %v3325, %v3321
          %v3458 = vpack.c.b16 %v3330, %v3326
          %v3459 = vpack.c.b16 %v3331, %v3327
          %v3460 = vpack.c.b16 %v3332, %v3328
          %v3461 = vpack.c.b16 %v3333, %v3329
          %3590 = vmatprep.subr.bf16.mxu0 %v3363
          %3591 = vmatpush1.bf16.msra.mxu0 %v3362
          %3592 = vmatprep.subr.bf16.mxu0 %v3359
          %3593 = vmatpush1.bf16.msra.mxu0 %v3358
          %3594 = vmatprep.subr.bf16.mxu0 %v3355
          %3595 = vmatpush1.bf16.msra.mxu0 %v3354
          %3596 = vmatprep.subr.bf16.mxu0 %v3351
          %3597 = vmatpush1.bf16.msra.mxu0 %v3350
          %3598 = vmatprep.subr.bf16.mxu0 %v3347
          %3599 = vmatpush1.bf16.msra.mxu0 %v3346
          %3600 = vmatprep.subr.bf16.mxu0 %v3343
          %3601 = vmatpush1.bf16.msra.mxu0 %v3342
          %3602 = vmatprep.subr.bf16.mxu0 %v3339
          %3603 = vmatpush1.bf16.msra.mxu0 %v3338
          %3604 = vmatprep.subr.bf16.mxu0 %v3335
          %3605 = vmatpush1.bf16.msra.mxu0 %v3334
          %3606 = vmatprep.subr.bf16.mxu0 %v3395
          %3607 = vmatpush2.bf16.msra.mxu0 %v3394
          %3608 = vmatprep.subr.bf16.mxu0 %v3391
          %3609 = vmatpush2.bf16.msra.mxu0 %v3390
          %3610 = vmatprep.subr.bf16.mxu0 %v3387
          %3611 = vmatpush2.bf16.msra.mxu0 %v3386
          %3612 = vmatprep.subr.bf16.mxu0 %v3383
          %3613 = vmatpush2.bf16.msra.mxu0 %v3382
          %3614 = vmatprep.subr.bf16.mxu0 %v3379
          %3615 = vmatpush2.bf16.msra.mxu0 %v3378
          %3616 = vmatprep.subr.bf16.mxu0 %v3375
          %3617 = vmatpush2.bf16.msra.mxu0 %v3374
          %3618 = vmatprep.subr.bf16.mxu0 %v3371
          %3619 = vmatpush2.bf16.msra.mxu0 %v3370
          %3620 = vmatprep.subr.bf16.mxu0 %v3367
          %3621 = vmatpush2.bf16.msra.mxu0 %v3366
          %3622 = vmatprep.mubr.bf16.mxu0 %v2797
          %3623 = vmatmul.mubr.bf16.gmra.mxu0 %v2796
          %v3624 = vpop.f32.mrf.mxu0
          %v3625 = vadd.f32 %v2933, %v3624
          %v3626 = vpop.f32.mrf.mxu0
          %v3627 = vadd.f32 %v2937, %v3626
          %v3628 = vpop.f32.mrf.mxu0
          %v3629 = vpop.f32.mrf.mxu0
          %3630 = vdwg.mxu0
          %3631 = vmatprep.subr.bf16.mxu0 %v3427
          %3632 = vmatpush1.bf16.msra.mxu0 %v3426
          %3633 = vmatprep.subr.bf16.mxu0 %v3423
          %3634 = vmatpush1.bf16.msra.mxu0 %v3422
          %3635 = vmatprep.subr.bf16.mxu0 %v3419
          %3636 = vmatpush1.bf16.msra.mxu0 %v3418
          %3637 = vmatprep.subr.bf16.mxu0 %v3415
          %3638 = vmatpush1.bf16.msra.mxu0 %v3414
          %3639 = vmatprep.subr.bf16.mxu0 %v3411
          %3640 = vmatpush1.bf16.msra.mxu0 %v3410
          %3641 = vmatprep.subr.bf16.mxu0 %v3407
          %3642 = vmatpush1.bf16.msra.mxu0 %v3406
          %3643 = vmatprep.subr.bf16.mxu0 %v3403
          %3644 = vmatpush1.bf16.msra.mxu0 %v3402
          %3645 = vmatprep.subr.bf16.mxu0 %v3399
          %3646 = vmatpush1.bf16.msra.mxu0 %v3398
          %3647 = vmatprep.subr.bf16.mxu0 %v3459
          %3648 = vmatpush2.bf16.msra.mxu0 %v3458
          %3649 = vmatprep.subr.bf16.mxu0 %v3455
          %3650 = vmatpush2.bf16.msra.mxu0 %v3454
          %3651 = vmatprep.subr.bf16.mxu0 %v3451
          %3652 = vmatpush2.bf16.msra.mxu0 %v3450
          %3653 = vmatprep.subr.bf16.mxu0 %v3447
          %3654 = vmatpush2.bf16.msra.mxu0 %v3446
          %3655 = vmatprep.subr.bf16.mxu0 %v3443
          %3656 = vmatpush2.bf16.msra.mxu0 %v3442
          %3657 = vmatprep.subr.bf16.mxu0 %v3439
          %3658 = vmatpush2.bf16.msra.mxu0 %v3438
          %3659 = vmatprep.subr.bf16.mxu0 %v3435
          %3660 = vmatpush2.bf16.msra.mxu0 %v3434
          %3661 = vmatprep.subr.bf16.mxu0 %v3431
          %3662 = vmatpush2.bf16.msra.mxu0 %v3430
          %3663 = vmatprep.mubr.bf16.mxu0 %v2799
          %3664 = vmatmul.mubr.bf16.gmra.mxu0 %v2798
          %v3665 = vpop.f32.mrf.mxu0
          %v3666 = vadd.f32 %v3625, %v3665
          %v3667 = vpop.f32.mrf.mxu0
          %v3668 = vadd.f32 %v3627, %v3667
          %v3669 = vpop.f32.mrf.mxu0
          %v3670 = vpop.f32.mrf.mxu0
          %3671 = vdwg.mxu0
          %3672 = vmatprep.subr.bf16.mxu0 %v3365
          %3673 = vmatpush1.bf16.msra.mxu0 %v3364
          %3674 = vmatprep.subr.bf16.mxu0 %v3361
          %3675 = vmatpush1.bf16.msra.mxu0 %v3360
          %3676 = vmatprep.subr.bf16.mxu0 %v3357
          %3677 = vmatpush1.bf16.msra.mxu0 %v3356
          %3678 = vmatprep.subr.bf16.mxu0 %v3353
          %3679 = vmatpush1.bf16.msra.mxu0 %v3352
          %3680 = vmatprep.subr.bf16.mxu0 %v3349
          %3681 = vmatpush1.bf16.msra.mxu0 %v3348
          %3682 = vmatprep.subr.bf16.mxu0 %v3345
          %3683 = vmatpush1.bf16.msra.mxu0 %v3344
          %3684 = vmatprep.subr.bf16.mxu0 %v3341
          %3685 = vmatpush1.bf16.msra.mxu0 %v3340
          %3686 = vmatprep.subr.bf16.mxu0 %v3337
          %3687 = vmatpush1.bf16.msra.mxu0 %v3336
          %3688 = vmatprep.subr.bf16.mxu0 %v3397
          %3689 = vmatpush2.bf16.msra.mxu0 %v3396
          %3690 = vmatprep.subr.bf16.mxu0 %v3393
          %3691 = vmatpush2.bf16.msra.mxu0 %v3392
          %3692 = vmatprep.subr.bf16.mxu0 %v3389
          %3693 = vmatpush2.bf16.msra.mxu0 %v3388
          %3694 = vmatprep.subr.bf16.mxu0 %v3385
          %3695 = vmatpush2.bf16.msra.mxu0 %v3384
          %3696 = vmatprep.subr.bf16.mxu0 %v3381
          %3697 = vmatpush2.bf16.msra.mxu0 %v3380
          %3698 = vmatprep.subr.bf16.mxu0 %v3377
          %3699 = vmatpush2.bf16.msra.mxu0 %v3376
          %3700 = vmatprep.subr.bf16.mxu0 %v3373
          %3701 = vmatpush2.bf16.msra.mxu0 %v3372
          %3702 = vmatprep.subr.bf16.mxu0 %v3369
          %3703 = vmatpush2.bf16.msra.mxu0 %v3368
          %3704 = vmatprep.mubr.bf16.mxu0 %v2797
          %3705 = vmatmul.mubr.bf16.gmra.mxu0 %v2796
          %v3706 = vpop.f32.mrf.mxu0
          %v3707 = vadd.f32 %v2941, %v3706
          %v3708 = vpop.f32.mrf.mxu0
          %v3709 = vadd.f32 %v2945, %v3708
          %v3710 = vpop.f32.mrf.mxu0
          %v3711 = vpop.f32.mrf.mxu0
          %3712 = vdwg.mxu0
          %3713 = vmatprep.subr.bf16.mxu0 %v3429
          %3714 = vmatpush1.bf16.msra.mxu0 %v3428
          %3715 = vmatprep.subr.bf16.mxu0 %v3425
          %3716 = vmatpush1.bf16.msra.mxu0 %v3424
          %3717 = vmatprep.subr.bf16.mxu0 %v3421
          %3718 = vmatpush1.bf16.msra.mxu0 %v3420
          %3719 = vmatprep.subr.bf16.mxu0 %v3417
          %3720 = vmatpush1.bf16.msra.mxu0 %v3416
          %3721 = vmatprep.subr.bf16.mxu0 %v3413
          %3722 = vmatpush1.bf16.msra.mxu0 %v3412
          %3723 = vmatprep.subr.bf16.mxu0 %v3409
          %3724 = vmatpush1.bf16.msra.mxu0 %v3408
          %3725 = vmatprep.subr.bf16.mxu0 %v3405
          %3726 = vmatpush1.bf16.msra.mxu0 %v3404
          %3727 = vmatprep.subr.bf16.mxu0 %v3401
          %3728 = vmatpush1.bf16.msra.mxu0 %v3400
          %3729 = vmatprep.subr.bf16.mxu0 %v3461
          %3730 = vmatpush2.bf16.msra.mxu0 %v3460
          %3731 = vmatprep.subr.bf16.mxu0 %v3457
          %3732 = vmatpush2.bf16.msra.mxu0 %v3456
          %3733 = vmatprep.subr.bf16.mxu0 %v3453
          %3734 = vmatpush2.bf16.msra.mxu0 %v3452
          %3735 = vmatprep.subr.bf16.mxu0 %v3449
          %3736 = vmatpush2.bf16.msra.mxu0 %v3448
          %3737 = vmatprep.subr.bf16.mxu0 %v3445
          %3738 = vmatpush2.bf16.msra.mxu0 %v3444
          %3739 = vmatprep.subr.bf16.mxu0 %v3441
          %3740 = vmatpush2.bf16.msra.mxu0 %v3440
          %3741 = vmatprep.subr.bf16.mxu0 %v3437
          %3742 = vmatpush2.bf16.msra.mxu0 %v3436
          %3743 = vmatprep.subr.bf16.mxu0 %v3433
          %3744 = vmatpush2.bf16.msra.mxu0 %v3432
          %3745 = vmatprep.mubr.bf16.mxu0 %v2799
          %3746 = vmatmul.mubr.bf16.gmra.mxu0 %v2798
          %v3747 = vpop.f32.mrf.mxu0
          %v3748 = vadd.f32 %v3707, %v3747
          %v3749 = vpop.f32.mrf.mxu0
          %v3750 = vadd.f32 %v3709, %v3749
          %v3751 = vpop.f32.mrf.mxu0
          %v3752 = vpop.f32.mrf.mxu0
          %3753 = vdwg.mxu0
          %3754 = vst [vmem:[%s627] sm:$0xff] %v3666
          %3755 = vst [vmem:[%s627 + $0x8] sm:$0xff] %v3668
          %3756 = vst [vmem:[%s627 + $0x10] sm:$0xff] %v3748
          %3757 = vst [vmem:[%s627 + $0x18] sm:$0xff] %v3750
          %v3758 = vld [vmem:[#allocation3] sm:$0xff]
          %v3759 = vld [vmem:[#allocation3 + $0x8] sm:$0xff]
          %v3760 = vld [vmem:[#allocation3 + $0x10] sm:$0xff]
          %v3761 = vld [vmem:[#allocation3 + $0x18] sm:$0xff]
          %v3762 = vld [vmem:[#allocation18] sm:$0xf]
          %v3764 = vlaneseq
          %v3765 = vshrl.u32 %v3764, 7
          %v3766 = vsub.s32 0, %v3765
          %v3767 = vrot.slane %v3762, %v3766
          %v3768 = vlaneseq
          %v3769 = vshrl.u32 %v3768, 7
          %v3770 = vsub.s32 1, %v3769
          %v3771 = vrot.slane %v3762, %v3770
          %v3772 = vlaneseq
          %v3773 = vshrl.u32 %v3772, 7
          %v3774 = vsub.s32 2, %v3773
          %v3775 = vrot.slane %v3762, %v3774
          %v3776 = vlaneseq
          %v3777 = vshrl.u32 %v3776, 7
          %v3778 = vsub.s32 3, %v3777
          %v3779 = vrot.slane %v3762, %v3778
          %v3784 = vadd.f32 %v3758, %v3767
          %v3785 = vadd.f32 %v3759, %v3771
          %v3786 = vadd.f32 %v3760, %v3775
          %v3787 = vadd.f32 %v3761, %v3779
          %3788 = vst [vmem:[%s632] sm:$0xff] %v3784
          %3789 = vst [vmem:[%s632 + $0x8] sm:$0xff] %v3785
          %3790 = vst [vmem:[%s632 + $0x10] sm:$0xff] %v3786
          %3791 = vst [vmem:[%s632 + $0x18] sm:$0xff] %v3787
        $region112: #{rnd_forward.1} parent=63 // pred_fallthru
          _
        %p3792 = scmp.lt.s32.totalorder %s35, 0
        %s3793 = scalar_select %p3792, %s35, 0
        %s3794 = smul.addr %s3793, 4
        %s3795 = smul.addr %s3794, 8
        %s3796 = scalar_lea.vmem %s11, %s3795
        %p3797 = scmp.lt.s32.totalorder %s35, 0
        %s3798 = scalar_select %p3797, %s35, 0
        %s3799 = smul.addr %s3798, 4
        %s3800 = smul.addr %s3799, 8
        %s3801 = scalar_lea.vmem %s12, %s3800
        // Predicated region
        $region113: #{rnd_forward.1} parent=63 // pred_check
          %p3802 = pneg %p309
        $region114: #{rnd_forward.1} parent=63 // pred_check_branch
          %3804 = sbr.rel (%p3802) target = $region116
        $region115: #{rnd_forward.1} parent=63 // pred_region
          _
        $region116: #{rnd_forward.1} parent=63 // pred_fallthru
          _
        // Predicated region
        $region117: #{rnd_forward.1} parent=63 // pred_check
          %p3805 = pneg %p335
        $region118: #{rnd_forward.1} parent=63 // pred_check_branch
          %3807 = sbr.rel (%p3805) target = $region120
        $region119: #{rnd_forward.1} parent=63 // pred_region
          _
        $region120: #{rnd_forward.1} parent=63 // pred_fallthru
          _
        // Predicated region
        $region121: #{rnd_forward.1} parent=63 // pred_check
          %p3808 = pneg %p309
        $region122: #{rnd_forward.1} parent=63 // pred_check_branch
          %3810 = sbr.rel (%p3808) target = $region124
        $region123: #{rnd_forward.1} parent=63 // pred_region
          %p3811 = scmp.lt.s32.totalorder %s35, 0
          %s3812 = scalar_select %p3811, %s35, 0
          %s3813 = smul.addr %s3812, 4
          %s3814 = smul.addr %s3813, 8
          %s3815 = scalar_lea.vmem %s11, %s3814
        $region124: #{rnd_forward.1} parent=63 // pred_fallthru
          _
        // Predicated region
        $region125: #{rnd_forward.1} parent=63 // pred_check
          %p3816 = pneg %p335
        $region126: #{rnd_forward.1} parent=63 // pred_check_branch
          %3818 = sbr.rel (%p3816) target = $region128
        $region127: #{rnd_forward.1} parent=63 // pred_region
          %p3819 = scmp.lt.s32.totalorder %s35, 0
          %s3820 = scalar_select %p3819, %s35, 0
          %s3821 = smul.addr %s3820, 4
          %s3822 = smul.addr %s3821, 8
          %s3823 = scalar_lea.vmem %s12, %s3822
        $region128: #{rnd_forward.1} parent=63 // pred_fallthru
          _
      $region64: #{rnd_forward.1} parent=5 // pred_fallthru
        _
      %p3824 = scmp.le.s32.totalorder 2, %s26
      // Predicated region
      $region129: #{rnd_forward.1} parent=5 // pred_check
        %p3825 = pneg %p3824
      $region130: #{rnd_forward.1} parent=5 // pred_check_branch
        %3827 = sbr.rel (%p3825) target = $region132
      $region131: #{rnd_forward.1} parent=5 // pred_region
        %s3828 = ssub.s32 %s26, 2
      $region132: #{rnd_forward.1} parent=5 // pred_fallthru
        _
    $region6: #{rnd_forward.1} parent=1 // loop_footer
      %s30 = sadd.s32 1, %s26
    $region7: #{rnd_forward.1} parent=1 // loop_footer_branch
      %25 = sbr.rel target = $region3
    $region8: #{rnd_forward.1} parent=1 // loop_exit
      _
    %3829 = vsyncpa [#allocation5], 1
    %s3830 = scalar_lea.sflag [#allocation5], 1
    %3831 = vsyncpa %s3830, 1
    %3832 = vsyncpa [#allocation7], 1
    %3833 = vsyncpa [#allocation11], 1
    %3834 = vsyncpa [#allocation14], 1
    %3835 = vsyncpa [#allocation17], 1
    %s3836 = scalar_lea.sflag [#allocation17], 1
    %3837 = vsyncpa %s3836, 1

</llo_original>
